<compile_context>
chip_gen: v5e
topology: v5e:2x2
jax: 0.10.0
libtpu: 0.0.40
codegen_flags: <defaults>
</compile_context>

<pallas_src>
import functools
import math

import jax
import jax.numpy as jnp
from jax.experimental import pallas as pl
from jax.experimental.pallas import tpu as pltpu


# ---------------------------------------------------------------------------
# In-kernel helpers
# ---------------------------------------------------------------------------

def _layernorm(x, alpha, beta, eps):
    """Matches the reference LayerNorm: unbiased std (torch .std), scalar affine."""
    d = x.shape[-1]
    mean = jnp.mean(x, axis=-1, keepdims=True)
    var = jnp.sum((x - mean) ** 2, axis=-1, keepdims=True) * (1.0 / (d - 1))
    std = jnp.sqrt(var)
    inv = pl.reciprocal(std + eps, approx=True)          # EUP, not VALU divide
    return alpha * ((x - mean) * inv) + beta


def _attn_heads(q, k, v, wo_ref, bo_ref, *, h, d_k):
    """Per-head softmax attention + single fused out-projection.

    q: (S_q, D) f32, k/v: (S_kv, D) f32.  Returns (S_q, D) f32.
    Masks are intentionally absent: the reference module's masked_fill is
    non-in-place and discarded, so they never affect the output.
    """
    f32 = jnp.float32
    bf16 = jnp.bfloat16
    scale = 1.0 / math.sqrt(d_k)
    heads = []
    for head in range(h):
        sl = slice(head * d_k, (head + 1) * d_k)
        qh = q[:, sl].astype(bf16)
        kh = k[:, sl].astype(bf16)
        # qh @ kh.T without materializing a transpose (bf16 in, f32 acc).
        s = jnp.einsum("qd,kd->qk", qh, kh, preferred_element_type=f32) * scale
        m = jnp.max(s, axis=-1, keepdims=True)
        p = jnp.exp(s - m)
        p = p * pl.reciprocal(jnp.sum(p, axis=-1, keepdims=True), approx=True)
        # TODO(synk): train-mode dropout on p (eval mode -> identity).
        heads.append(jnp.dot(p, v[:, sl], preferred_element_type=f32))  # (S_q, d_k)
    o = jnp.concatenate(heads, axis=-1)                  # (S_q, D): concat of heads
    return jnp.dot(o.astype(bf16), wo_ref[...], preferred_element_type=f32) + bo_ref[...]


# ---------------------------------------------------------------------------
# Fused decoder-block kernel (one grid step == one batch element)
# ---------------------------------------------------------------------------

def _decoder_block_kernel(x_ref, enc_ref,
                          wqkv_s_ref, bqkv_s_ref, wo_s_ref, bo_s_ref,
                          wq_c_ref, bq_c_ref, wkv_c_ref, bkv_c_ref,
                          wo_c_ref, bo_c_ref,
                          w1_ref, b1_ref, w2_ref, b2_ref,
                          ln_ref, o_ref, *, h, d_k, eps):
    f32 = jnp.float32
    bf16 = jnp.bfloat16
    x = x_ref[0].astype(f32)                             # (S, D)
    enc = enc_ref[0].astype(f32)                         # (S_kv, D) -- raw, not LN'd
    D = x.shape[-1]

    # ---- residual block 1: self-attention ----
    xn = _layernorm(x, ln_ref[0], ln_ref[1], eps)
    qkv = (jnp.dot(xn.astype(bf16), wqkv_s_ref[...], preferred_element_type=f32)
           + bqkv_s_ref[...])                            # (S, 3D)
    attn = _attn_heads(qkv[:, :D], qkv[:, D:2 * D], qkv[:, 2 * D:],
                       wo_s_ref, bo_s_ref, h=h, d_k=d_k)
    x = x + attn                                         # residual add

    # ---- residual block 2: cross-attention (K/V from raw encoder output) ----
    xn = _layernorm(x, ln_ref[2], ln_ref[3], eps)
    q = (jnp.dot(xn.astype(bf16), wq_c_ref[...], preferred_element_type=f32)
         + bq_c_ref[...])                                # (S, D)
    kv = (jnp.dot(enc.astype(bf16), wkv_c_ref[...], preferred_element_type=f32)
          + bkv_c_ref[...])                              # (S_kv, 2D)
    attn = _attn_heads(q, kv[:, :D], kv[:, D:], wo_c_ref, bo_c_ref, h=h, d_k=d_k)
    x = x + attn

    # ---- residual block 3: FFN ----
    xn = _layernorm(x, ln_ref[4], ln_ref[5], eps)
    h1 = (jnp.dot(xn.astype(bf16), w1_ref[...], preferred_element_type=f32)
          + b1_ref[...])
    h1 = jnp.maximum(h1, 0.0)                            # ReLU
    # TODO(synk): train-mode dropout on h1 (eval mode -> identity).
    y = (jnp.dot(h1.astype(bf16), w2_ref[...], preferred_element_type=f32)
         + b2_ref[...])
    o_ref[0] = (x + y).astype(o_ref.dtype)


# ---------------------------------------------------------------------------
# Wrapper (pallas_call plumbing)
# ---------------------------------------------------------------------------

def decoder_block_forward(x, encoder_op, src_mask, tgt_mask, params, *, h, eps):
    # NOTE: in the reference, `masked_fill` is not in-place and its result is
    # discarded, so the masks never change the output; we mirror that.
    del src_mask, tgt_mask
    B, S, D = x.shape
    S_kv = encoder_op.shape[1]
    assert D % h == 0
    d_k = D // h
    bf16 = jnp.bfloat16

    sa, ca, ffn = params["self_attn"], params["cross_attn"], params["ffn"]

    # Fused weights; bf16 MXU operands (biases stay f32 for the f32 adds).
    wqkv_s = jnp.concatenate([sa["wq"][0], sa["wk"][0], sa["wv"][0]], axis=1).astype(bf16)
    bqkv_s = jnp.concatenate([sa["wq"][1], sa["wk"][1], sa["wv"][1]], axis=1)
    wo_s, bo_s = sa["wo"][0].astype(bf16), sa["wo"][1]
    wq_c, bq_c = ca["wq"][0].astype(bf16), ca["wq"][1]
    wkv_c = jnp.concatenate([ca["wk"][0], ca["wv"][0]], axis=1).astype(bf16)
    bkv_c = jnp.concatenate([ca["wk"][1], ca["wv"][1]], axis=1)
    wo_c, bo_c = ca["wo"][0].astype(bf16), ca["wo"][1]
    w1, b1 = ffn["lin1"][0].astype(bf16), ffn["lin1"][1]
    w2, b2 = ffn["lin2"][0].astype(bf16), ffn["lin2"][1]
    dff = w1.shape[1]

    (a0, be0), (a1, be1), (a2, be2) = params["ln"]
    ln_scalars = jnp.concatenate([a0, be0, a1, be1, a2, be2]).astype(jnp.float32)  # (6,)

    def full2d(shape):
        return pl.BlockSpec(shape, lambda b: (0, 0))

    in_specs = [
        pl.BlockSpec((1, S, D), lambda b: (b, 0, 0)),        # x
        pl.BlockSpec((1, S_kv, D), lambda b: (b, 0, 0)),     # encoder output
        full2d((D, 3 * D)), full2d((1, 3 * D)),              # self-attn qkv
        full2d((D, D)), full2d((1, D)),                      # self-attn out
        full2d((D, D)), full2d((1, D)),                      # cross-attn q
        full2d((D, 2 * D)), full2d((1, 2 * D)),              # cross-attn kv
        full2d((D, D)), full2d((1, D)),                      # cross-attn out
        full2d((D, dff)), full2d((1, dff)),                  # ffn lin1
        full2d((dff, D)), full2d((1, D)),                    # ffn lin2
        pl.BlockSpec(memory_space=pltpu.MemorySpace.SMEM),   # LN scalars
    ]
    args = [x, encoder_op,
            wqkv_s, bqkv_s, wo_s, bo_s,
            wq_c, bq_c, wkv_c, bkv_c, wo_c, bo_c,
            w1, b1, w2, b2, ln_scalars]

    # Advisory cost estimate (helps XLA schedule around the custom call).
    flops = 2 * B * (
        S * D * 3 * D                         # self qkv proj
        + h * S * S * d_k * 2                 # self scores + p@v
        + S * D * D                           # self out proj
        + S * D * D + S_kv * D * 2 * D        # cross q / kv proj
        + h * S * S_kv * d_k * 2              # cross scores + p@v
        + S * D * D                           # cross out proj
        + 2 * S * D * dff)                    # ffn
    transcendentals = B * (h * S * (S + S_kv) + 5 * S + 2 * h * S)
    weight_bytes = 2 * (wqkv_s.size + wo_s.size + wq_c.size + wkv_c.size
                        + wo_c.size + w1.size + w2.size)
    bytes_accessed = 4 * (2 * x.size + encoder_op.size) + weight_bytes

    return pl.pallas_call(
        functools.partial(_decoder_block_kernel, h=h, d_k=d_k, eps=eps),
        out_shape=jax.ShapeDtypeStruct((B, S, D), x.dtype),
        grid_spec=pltpu.PrefetchScalarGridSpec(
            num_scalar_prefetch=0,
            grid=(B,),
            in_specs=in_specs,
            out_specs=pl.BlockSpec((1, S, D), lambda b: (b, 0, 0)),
        ),
        compiler_params=pltpu.CompilerParams(
            dimension_semantics=("parallel",)),
        cost_estimate=pl.CostEstimate(flops=int(flops),
                                      transcendentals=int(transcendentals),
                                      bytes_accessed=int(bytes_accessed)),
    )(*args)


# ---------------------------------------------------------------------------
# Parameter setup (plain-JAX glue) and pure-JAX reference
# ---------------------------------------------------------------------------

def init_params(key, d_model, dff, h, dtype=jnp.float32):
    state = {"key": key}

    def nxt():
        state["key"], sub = jax.random.split(state["key"])
        return sub

    scale = 0.05

    def linear(din, dout):
        w = jax.random.normal(nxt(), (din, dout), dtype) * scale
        b = jax.random.normal(nxt(), (1, dout), dtype) * scale
        return w, b

    def attn_params():
        return {"wq": linear(d_model, d_model),
                "wk": linear(d_model, d_model),
                "wv": linear(d_model, d_model),
                "wo": linear(d_model, d_model)}

    def ln_params():
        alpha = 1.0 + 0.1 * jax.random.normal(nxt(), (1,), dtype)
        beta = 0.1 * jax.random.normal(nxt(), (1,), dtype)
        return alpha, beta

    return {
        "self_attn": attn_params(),
        "cross_attn": attn_params(),
        "ffn": {"lin1": linear(d_model, dff), "lin2": linear(dff, d_model)},
        "ln": [ln_params(), ln_params(), ln_params()],
    }


def decoder_block_reference(x, enc, params, *, h, eps):
    HI = jax.lax.Precision.HIGHEST

    def ln(t, a, b):
        mean = t.mean(-1, keepdims=True)
        var = ((t - mean) ** 2).sum(-1, keepdims=True) / (t.shape[-1] - 1)
        return a * ((t - mean) / (jnp.sqrt(var) + eps)) + b

    def mha(q_in, kv_in, p):
        (wq, bq), (wk, bk), (wv, bv), (wo, bo) = p["wq"], p["wk"], p["wv"], p["wo"]
        B, Sq, D = q_in.shape
        Skv = kv_in.shape[1]
        d_k = D // h
        Q = jnp.einsum("bsd,de->bse", q_in, wq, precision=HI) + bq
        K = jnp.einsum("bsd,de->bse", kv_in, wk, precision=HI) + bk
        V = jnp.einsum("bsd,de->bse", kv_in, wv, precision=HI) + bv
        Q = Q.reshape(B, Sq, h, d_k).transpose(0, 2, 1, 3)
        K = K.reshape(B, Skv, h, d_k).transpose(0, 2, 1, 3)
        V = V.reshape(B, Skv, h, d_k).transpose(0, 2, 1, 3)
        s = jnp.einsum("bhqd,bhkd->bhqk", Q, K, precision=HI) / math.sqrt(d_k)
        p_attn = jax.nn.softmax(s, axis=-1)
        o = jnp.einsum("bhqk,bhkd->bhqd", p_attn, V, precision=HI)
        o = o.transpose(0, 2, 1, 3).reshape(B, Sq, D)
        return jnp.einsum("bsd,de->bse", o, wo, precision=HI) + bo

    def ffn(t, p):
        (w1, b1), (w2, b2) = p["lin1"], p["lin2"]
        hid = jnp.maximum(jnp.einsum("bsd,df->bsf", t, w1, precision=HI) + b1, 0.0)
        return jnp.einsum("bsf,fd->bsd", hid, w2, precision=HI) + b2

    (a0, b0), (a1, b1_), (a2, b2_) = params["ln"]
    x = x + mha(ln(x, a0, b0), ln(x, a0, b0), params["self_attn"])
    x = x + mha(ln(x, a1, b1_), enc, params["cross_attn"])
    x = x + ffn(ln(x, a2, b2_), params["ffn"])
    return x


# ---------------------------------------------------------------------------
# Main
# ---------------------------------------------------------------------------

if __name__ == "__main__":
    # Small but TPU-friendly shapes: lane-dense last dims (128 / 256 / 384).
    d_model, h, dff = 128, 4, 256
    B, S, S_enc = 2, 16, 32
    eps = 1e-6

    key = jax.random.PRNGKey(0)
    k_x, k_enc, k_p = jax.random.split(key, 3)
    x = jax.random.normal(k_x, (B, S, d_model), dtype=jnp.float32)
    encoder_op = jax.random.normal(k_enc, (B, S_enc, d_model), dtype=jnp.float32)
    params = init_params(k_p, d_model, dff, h)

    out = decoder_block_forward(x, encoder_op, None, None, params, h=h, eps=eps)
    out = jax.block_until_ready(out)

    ref = decoder_block_reference(x, encoder_op, params, h=h, eps=eps)
    ref = jax.block_until_ready(ref)

    assert out.shape == (B, S, d_model)
    # Tolerance absorbs bf16 MXU operands (f32 accumulation) and approx
    # reciprocals; a logic error (missing LN / residual / head mixing)
    # diverges by O(0.1+).
    assert jnp.allclose(out, ref, atol=3e-2, rtol=3e-2), "mismatch vs reference"

    print("KERNEL_OK")
</pallas_src>

<mosaic_0001>
module attributes {stable_mosaic.version = 11 : i64} {
  func.func @_decoder_block_kernel(%arg0: i32, %arg1: memref<1x16x128xf32, #tpu.memory_space<vmem>>, %arg2: memref<1x32x128xf32, #tpu.memory_space<vmem>>, %arg3: memref<128x384xbf16, #tpu.memory_space<vmem>>, %arg4: memref<1x384xf32, #tpu.memory_space<vmem>>, %arg5: memref<128x128xbf16, #tpu.memory_space<vmem>>, %arg6: memref<1x128xf32, #tpu.memory_space<vmem>>, %arg7: memref<128x128xbf16, #tpu.memory_space<vmem>>, %arg8: memref<1x128xf32, #tpu.memory_space<vmem>>, %arg9: memref<128x256xbf16, #tpu.memory_space<vmem>>, %arg10: memref<1x256xf32, #tpu.memory_space<vmem>>, %arg11: memref<128x128xbf16, #tpu.memory_space<vmem>>, %arg12: memref<1x128xf32, #tpu.memory_space<vmem>>, %arg13: memref<128x256xbf16, #tpu.memory_space<vmem>>, %arg14: memref<1x256xf32, #tpu.memory_space<vmem>>, %arg15: memref<256x128xbf16, #tpu.memory_space<vmem>>, %arg16: memref<1x128xf32, #tpu.memory_space<vmem>>, %arg17: memref<6xf32, #tpu.memory_space<smem>>, %arg18: memref<1x16x128xf32, #tpu.memory_space<vmem>>) attributes {dimension_semantics = [#tpu.dimension_semantics<parallel>], iteration_bounds = array<i64: 2>, scalar_prefetch = 0 : i64, scratch_operands = 0 : i64, tpu.core_type = #tpu.core_type<tc>, window_params = [{transform_indices = @transform_0, window_bounds = array<i64: 1, 16, 128>}, {transform_indices = @transform_1, window_bounds = array<i64: 1, 32, 128>}, {pipeline_mode = #tpu.pipeline_mode<synchronous>, transform_indices = @transform_2, window_bounds = array<i64: 128, 384>}, {pipeline_mode = #tpu.pipeline_mode<synchronous>, transform_indices = @transform_3, window_bounds = array<i64: 1, 384>}, {pipeline_mode = #tpu.pipeline_mode<synchronous>, transform_indices = @transform_4, window_bounds = array<i64: 128, 128>}, {pipeline_mode = #tpu.pipeline_mode<synchronous>, transform_indices = @transform_5, window_bounds = array<i64: 1, 128>}, {pipeline_mode = #tpu.pipeline_mode<synchronous>, transform_indices = @transform_6, window_bounds = array<i64: 128, 128>}, {pipeline_mode = #tpu.pipeline_mode<synchronous>, transform_indices = @transform_7, window_bounds = array<i64: 1, 128>}, {pipeline_mode = #tpu.pipeline_mode<synchronous>, transform_indices = @transform_8, window_bounds = array<i64: 128, 256>}, {pipeline_mode = #tpu.pipeline_mode<synchronous>, transform_indices = @transform_9, window_bounds = array<i64: 1, 256>}, {pipeline_mode = #tpu.pipeline_mode<synchronous>, transform_indices = @transform_10, window_bounds = array<i64: 128, 128>}, {pipeline_mode = #tpu.pipeline_mode<synchronous>, transform_indices = @transform_11, window_bounds = array<i64: 1, 128>}, {pipeline_mode = #tpu.pipeline_mode<synchronous>, transform_indices = @transform_12, window_bounds = array<i64: 128, 256>}, {pipeline_mode = #tpu.pipeline_mode<synchronous>, transform_indices = @transform_13, window_bounds = array<i64: 1, 256>}, {pipeline_mode = #tpu.pipeline_mode<synchronous>, transform_indices = @transform_14, window_bounds = array<i64: 256, 128>}, {pipeline_mode = #tpu.pipeline_mode<synchronous>, transform_indices = @transform_15, window_bounds = array<i64: 1, 128>}, {transform_indices = @transform_16, window_bounds = array<i64: 6>}, {transform_indices = @transform_17, window_bounds = array<i64: 1, 16, 128>}]} {
    %c0 = arith.constant 0 : index
    %c0_0 = arith.constant 0 : index
    %c0_1 = arith.constant 0 : index
    %0 = vector.load %arg1[%c0, %c0_0, %c0_1] : memref<1x16x128xf32, #tpu.memory_space<vmem>>, vector<1x16x128xf32>
    %1 = vector.shape_cast %0 : vector<1x16x128xf32> to vector<16x128xf32>
    %c0_2 = arith.constant 0 : index
    %c0_3 = arith.constant 0 : index
    %c0_4 = arith.constant 0 : index
    %2 = vector.load %arg2[%c0_2, %c0_3, %c0_4] : memref<1x32x128xf32, #tpu.memory_space<vmem>>, vector<1x32x128xf32>
    %3 = vector.shape_cast %2 : vector<1x32x128xf32> to vector<32x128xf32>
    %c0_5 = arith.constant 0 : index
    %4 = memref.load %arg17[%c0_5] : memref<6xf32, #tpu.memory_space<smem>>
    %c1 = arith.constant 1 : index
    %5 = memref.load %arg17[%c1] : memref<6xf32, #tpu.memory_space<smem>>
    %cst = arith.constant dense<0.000000e+00> : vector<16xf32>
    %6 = vector.multi_reduction <add>, %1, %cst [1] : vector<16x128xf32> to vector<16xf32>
    %7 = vector.shape_cast %6 : vector<16xf32> to vector<16x1xf32>
    %cst_6 = arith.constant 1.280000e+02 : f32
    %8 = vector.broadcast %cst_6 : f32 to vector<16x1xf32>
    %9 = arith.divf %7, %8 : vector<16x1xf32>
    %10 = vector.broadcast %9 : vector<16x1xf32> to vector<16x128xf32>
    %11 = arith.subf %1, %10 : vector<16x128xf32>
    %12 = arith.mulf %11, %11 : vector<16x128xf32>
    %cst_7 = arith.constant dense<0.000000e+00> : vector<16xf32>
    %13 = vector.multi_reduction <add>, %12, %cst_7 [1] : vector<16x128xf32> to vector<16xf32>
    %14 = vector.shape_cast %13 : vector<16xf32> to vector<16x1xf32>
    %cst_8 = arith.constant 0.00787401571 : f32
    %15 = vector.broadcast %cst_8 : f32 to vector<16x1xf32>
    %16 = arith.mulf %14, %15 : vector<16x1xf32>
    %17 = math.sqrt %16 : vector<16x1xf32>
    %cst_9 = arith.constant 9.99999997E-7 : f32
    %18 = vector.broadcast %cst_9 : f32 to vector<16x1xf32>
    %19 = arith.addf %17, %18 : vector<16x1xf32>
    %20 = tpu.reciprocal %19 {approx = true} : vector<16x1xf32> -> vector<16x1xf32>
    %21 = vector.broadcast %9 : vector<16x1xf32> to vector<16x128xf32>
    %22 = arith.subf %1, %21 : vector<16x128xf32>
    %23 = vector.broadcast %20 : vector<16x1xf32> to vector<16x128xf32>
    %24 = arith.mulf %22, %23 : vector<16x128xf32>
    %25 = vector.broadcast %4 : f32 to vector<16x128xf32>
    %26 = arith.mulf %25, %24 : vector<16x128xf32>
    %27 = vector.broadcast %5 : f32 to vector<16x128xf32>
    %28 = arith.addf %26, %27 : vector<16x128xf32>
    %29 = arith.truncf %28 : vector<16x128xf32> to vector<16x128xbf16>
    %c0_10 = arith.constant 0 : index
    %c0_11 = arith.constant 0 : index
    %30 = vector.load %arg3[%c0_10, %c0_11] : memref<128x384xbf16, #tpu.memory_space<vmem>>, vector<128x384xbf16>
    %cst_12 = arith.constant dense<0.000000e+00> : vector<16x384xf32>
    %31 = tpu.matmul %29, %30, %cst_12 {dimension_numbers = #tpu.dot_dimension_numbers<[1], [0], [0], [1], [0, 0, 1, 1], [], []>} : vector<16x128xbf16>, vector<128x384xbf16>, vector<16x384xf32> -> vector<16x384xf32>
    %c0_13 = arith.constant 0 : index
    %c0_14 = arith.constant 0 : index
    %32 = vector.load %arg4[%c0_13, %c0_14] : memref<1x384xf32, #tpu.memory_space<vmem>>, vector<1x384xf32>
    %33 = vector.broadcast %32 : vector<1x384xf32> to vector<16x384xf32>
    %34 = arith.addf %31, %33 : vector<16x384xf32>
    %35 = vector.extract_strided_slice %34 {offsets = [0, 0], sizes = [16, 128], strides = [1, 1]} : vector<16x384xf32> to vector<16x128xf32>
    %36 = vector.extract_strided_slice %34 {offsets = [0, 128], sizes = [16, 128], strides = [1, 1]} : vector<16x384xf32> to vector<16x128xf32>
    %37 = vector.extract_strided_slice %34 {offsets = [0, 256], sizes = [16, 128], strides = [1, 1]} : vector<16x384xf32> to vector<16x128xf32>
    %38 = vector.extract_strided_slice %35 {offsets = [0, 0], sizes = [16, 32], strides = [1, 1]} : vector<16x128xf32> to vector<16x32xf32>
    %39 = arith.truncf %38 : vector<16x32xf32> to vector<16x32xbf16>
    %40 = vector.extract_strided_slice %36 {offsets = [0, 0], sizes = [16, 32], strides = [1, 1]} : vector<16x128xf32> to vector<16x32xf32>
    %41 = arith.truncf %40 : vector<16x32xf32> to vector<16x32xbf16>
    "tpu.trace_start"() <{level = 10 : i32, message = "qd,kd->qk"}> : () -> ()
    %cst_15 = arith.constant dense<0.000000e+00> : vector<16x16xf32>
    %42 = tpu.matmul %39, %41, %cst_15 {dimension_numbers = #tpu.dot_dimension_numbers<[1], [1], [0], [0], [0, 0, 1, 0], [], []>} : vector<16x32xbf16>, vector<16x32xbf16>, vector<16x16xf32> -> vector<16x16xf32>
    "tpu.trace_stop"() : () -> ()
    %cst_16 = arith.constant 0.176776692 : f32
    %43 = vector.broadcast %cst_16 : f32 to vector<16x16xf32>
    %44 = arith.mulf %42, %43 : vector<16x16xf32>
    %cst_17 = arith.constant dense<0xFF800000> : vector<16xf32>
    %45 = vector.multi_reduction <maximumf>, %44, %cst_17 [1] : vector<16x16xf32> to vector<16xf32>
    %46 = vector.shape_cast %45 : vector<16xf32> to vector<16x1xf32>
    %47 = vector.broadcast %46 : vector<16x1xf32> to vector<16x16xf32>
    %48 = arith.subf %44, %47 : vector<16x16xf32>
    %49 = math.exp %48 : vector<16x16xf32>
    %cst_18 = arith.constant dense<0.000000e+00> : vector<16xf32>
    %50 = vector.multi_reduction <add>, %49, %cst_18 [1] : vector<16x16xf32> to vector<16xf32>
    %51 = vector.shape_cast %50 : vector<16xf32> to vector<16x1xf32>
    %52 = tpu.reciprocal %51 {approx = true} : vector<16x1xf32> -> vector<16x1xf32>
    %53 = vector.broadcast %52 : vector<16x1xf32> to vector<16x16xf32>
    %54 = arith.mulf %49, %53 : vector<16x16xf32>
    %55 = vector.extract_strided_slice %37 {offsets = [0, 0], sizes = [16, 32], strides = [1, 1]} : vector<16x128xf32> to vector<16x32xf32>
    %cst_19 = arith.constant dense<0.000000e+00> : vector<16x32xf32>
    %56 = tpu.matmul %54, %55, %cst_19 {dimension_numbers = #tpu.dot_dimension_numbers<[1], [0], [0], [1], [0, 0, 1, 1], [], []>} : vector<16x16xf32>, vector<16x32xf32>, vector<16x32xf32> -> vector<16x32xf32>
    %57 = vector.extract_strided_slice %35 {offsets = [0, 32], sizes = [16, 32], strides = [1, 1]} : vector<16x128xf32> to vector<16x32xf32>
    %58 = arith.truncf %57 : vector<16x32xf32> to vector<16x32xbf16>
    %59 = vector.extract_strided_slice %36 {offsets = [0, 32], sizes = [16, 32], strides = [1, 1]} : vector<16x128xf32> to vector<16x32xf32>
    %60 = arith.truncf %59 : vector<16x32xf32> to vector<16x32xbf16>
    "tpu.trace_start"() <{level = 10 : i32, message = "qd,kd->qk"}> : () -> ()
    %cst_20 = arith.constant dense<0.000000e+00> : vector<16x16xf32>
    %61 = tpu.matmul %58, %60, %cst_20 {dimension_numbers = #tpu.dot_dimension_numbers<[1], [1], [0], [0], [0, 0, 1, 0], [], []>} : vector<16x32xbf16>, vector<16x32xbf16>, vector<16x16xf32> -> vector<16x16xf32>
    "tpu.trace_stop"() : () -> ()
    %cst_21 = arith.constant 0.176776692 : f32
    %62 = vector.broadcast %cst_21 : f32 to vector<16x16xf32>
    %63 = arith.mulf %61, %62 : vector<16x16xf32>
    %cst_22 = arith.constant dense<0xFF800000> : vector<16xf32>
    %64 = vector.multi_reduction <maximumf>, %63, %cst_22 [1] : vector<16x16xf32> to vector<16xf32>
    %65 = vector.shape_cast %64 : vector<16xf32> to vector<16x1xf32>
    %66 = vector.broadcast %65 : vector<16x1xf32> to vector<16x16xf32>
    %67 = arith.subf %63, %66 : vector<16x16xf32>
    %68 = math.exp %67 : vector<16x16xf32>
    %cst_23 = arith.constant dense<0.000000e+00> : vector<16xf32>
    %69 = vector.multi_reduction <add>, %68, %cst_23 [1] : vector<16x16xf32> to vector<16xf32>
    %70 = vector.shape_cast %69 : vector<16xf32> to vector<16x1xf32>
    %71 = tpu.reciprocal %70 {approx = true} : vector<16x1xf32> -> vector<16x1xf32>
    %72 = vector.broadcast %71 : vector<16x1xf32> to vector<16x16xf32>
    %73 = arith.mulf %68, %72 : vector<16x16xf32>
    %74 = vector.extract_strided_slice %37 {offsets = [0, 32], sizes = [16, 32], strides = [1, 1]} : vector<16x128xf32> to vector<16x32xf32>
    %cst_24 = arith.constant dense<0.000000e+00> : vector<16x32xf32>
    %75 = tpu.matmul %73, %74, %cst_24 {dimension_numbers = #tpu.dot_dimension_numbers<[1], [0], [0], [1], [0, 0, 1, 1], [], []>} : vector<16x16xf32>, vector<16x32xf32>, vector<16x32xf32> -> vector<16x32xf32>
    %76 = vector.extract_strided_slice %35 {offsets = [0, 64], sizes = [16, 32], strides = [1, 1]} : vector<16x128xf32> to vector<16x32xf32>
    %77 = arith.truncf %76 : vector<16x32xf32> to vector<16x32xbf16>
    %78 = vector.extract_strided_slice %36 {offsets = [0, 64], sizes = [16, 32], strides = [1, 1]} : vector<16x128xf32> to vector<16x32xf32>
    %79 = arith.truncf %78 : vector<16x32xf32> to vector<16x32xbf16>
    "tpu.trace_start"() <{level = 10 : i32, message = "qd,kd->qk"}> : () -> ()
    %cst_25 = arith.constant dense<0.000000e+00> : vector<16x16xf32>
    %80 = tpu.matmul %77, %79, %cst_25 {dimension_numbers = #tpu.dot_dimension_numbers<[1], [1], [0], [0], [0, 0, 1, 0], [], []>} : vector<16x32xbf16>, vector<16x32xbf16>, vector<16x16xf32> -> vector<16x16xf32>
    "tpu.trace_stop"() : () -> ()
    %cst_26 = arith.constant 0.176776692 : f32
    %81 = vector.broadcast %cst_26 : f32 to vector<16x16xf32>
    %82 = arith.mulf %80, %81 : vector<16x16xf32>
    %cst_27 = arith.constant dense<0xFF800000> : vector<16xf32>
    %83 = vector.multi_reduction <maximumf>, %82, %cst_27 [1] : vector<16x16xf32> to vector<16xf32>
    %84 = vector.shape_cast %83 : vector<16xf32> to vector<16x1xf32>
    %85 = vector.broadcast %84 : vector<16x1xf32> to vector<16x16xf32>
    %86 = arith.subf %82, %85 : vector<16x16xf32>
    %87 = math.exp %86 : vector<16x16xf32>
    %cst_28 = arith.constant dense<0.000000e+00> : vector<16xf32>
    %88 = vector.multi_reduction <add>, %87, %cst_28 [1] : vector<16x16xf32> to vector<16xf32>
    %89 = vector.shape_cast %88 : vector<16xf32> to vector<16x1xf32>
    %90 = tpu.reciprocal %89 {approx = true} : vector<16x1xf32> -> vector<16x1xf32>
    %91 = vector.broadcast %90 : vector<16x1xf32> to vector<16x16xf32>
    %92 = arith.mulf %87, %91 : vector<16x16xf32>
    %93 = vector.extract_strided_slice %37 {offsets = [0, 64], sizes = [16, 32], strides = [1, 1]} : vector<16x128xf32> to vector<16x32xf32>
    %cst_29 = arith.constant dense<0.000000e+00> : vector<16x32xf32>
    %94 = tpu.matmul %92, %93, %cst_29 {dimension_numbers = #tpu.dot_dimension_numbers<[1], [0], [0], [1], [0, 0, 1, 1], [], []>} : vector<16x16xf32>, vector<16x32xf32>, vector<16x32xf32> -> vector<16x32xf32>
    %95 = vector.extract_strided_slice %35 {offsets = [0, 96], sizes = [16, 32], strides = [1, 1]} : vector<16x128xf32> to vector<16x32xf32>
    %96 = arith.truncf %95 : vector<16x32xf32> to vector<16x32xbf16>
    %97 = vector.extract_strided_slice %36 {offsets = [0, 96], sizes = [16, 32], strides = [1, 1]} : vector<16x128xf32> to vector<16x32xf32>
    %98 = arith.truncf %97 : vector<16x32xf32> to vector<16x32xbf16>
    "tpu.trace_start"() <{level = 10 : i32, message = "qd,kd->qk"}> : () -> ()
    %cst_30 = arith.constant dense<0.000000e+00> : vector<16x16xf32>
    %99 = tpu.matmul %96, %98, %cst_30 {dimension_numbers = #tpu.dot_dimension_numbers<[1], [1], [0], [0], [0, 0, 1, 0], [], []>} : vector<16x32xbf16>, vector<16x32xbf16>, vector<16x16xf32> -> vector<16x16xf32>
    "tpu.trace_stop"() : () -> ()
    %cst_31 = arith.constant 0.176776692 : f32
    %100 = vector.broadcast %cst_31 : f32 to vector<16x16xf32>
    %101 = arith.mulf %99, %100 : vector<16x16xf32>
    %cst_32 = arith.constant dense<0xFF800000> : vector<16xf32>
    %102 = vector.multi_reduction <maximumf>, %101, %cst_32 [1] : vector<16x16xf32> to vector<16xf32>
    %103 = vector.shape_cast %102 : vector<16xf32> to vector<16x1xf32>
    %104 = vector.broadcast %103 : vector<16x1xf32> to vector<16x16xf32>
    %105 = arith.subf %101, %104 : vector<16x16xf32>
    %106 = math.exp %105 : vector<16x16xf32>
    %cst_33 = arith.constant dense<0.000000e+00> : vector<16xf32>
    %107 = vector.multi_reduction <add>, %106, %cst_33 [1] : vector<16x16xf32> to vector<16xf32>
    %108 = vector.shape_cast %107 : vector<16xf32> to vector<16x1xf32>
    %109 = tpu.reciprocal %108 {approx = true} : vector<16x1xf32> -> vector<16x1xf32>
    %110 = vector.broadcast %109 : vector<16x1xf32> to vector<16x16xf32>
    %111 = arith.mulf %106, %110 : vector<16x16xf32>
    %112 = vector.extract_strided_slice %37 {offsets = [0, 96], sizes = [16, 32], strides = [1, 1]} : vector<16x128xf32> to vector<16x32xf32>
    %cst_34 = arith.constant dense<0.000000e+00> : vector<16x32xf32>
    %113 = tpu.matmul %111, %112, %cst_34 {dimension_numbers = #tpu.dot_dimension_numbers<[1], [0], [0], [1], [0, 0, 1, 1], [], []>} : vector<16x16xf32>, vector<16x32xf32>, vector<16x32xf32> -> vector<16x32xf32>
    %114 = tpu.concatenate %56, %75, %94, %113 in 1 : vector<16x32xf32>, vector<16x32xf32>, vector<16x32xf32>, vector<16x32xf32> -> vector<16x128xf32>
    %115 = arith.truncf %114 : vector<16x128xf32> to vector<16x128xbf16>
    %c0_35 = arith.constant 0 : index
    %c0_36 = arith.constant 0 : index
    %116 = vector.load %arg5[%c0_35, %c0_36] : memref<128x128xbf16, #tpu.memory_space<vmem>>, vector<128x128xbf16>
    %cst_37 = arith.constant dense<0.000000e+00> : vector<16x128xf32>
    %117 = tpu.matmul %115, %116, %cst_37 {dimension_numbers = #tpu.dot_dimension_numbers<[1], [0], [0], [1], [0, 0, 1, 1], [], []>} : vector<16x128xbf16>, vector<128x128xbf16>, vector<16x128xf32> -> vector<16x128xf32>
    %c0_38 = arith.constant 0 : index
    %c0_39 = arith.constant 0 : index
    %118 = vector.load %arg6[%c0_38, %c0_39] : memref<1x128xf32, #tpu.memory_space<vmem>>, vector<1x128xf32>
    %119 = vector.broadcast %118 : vector<1x128xf32> to vector<16x128xf32>
    %120 = arith.addf %117, %119 : vector<16x128xf32>
    %121 = arith.addf %1, %120 : vector<16x128xf32>
    %c2 = arith.constant 2 : index
    %122 = memref.load %arg17[%c2] : memref<6xf32, #tpu.memory_space<smem>>
    %c3 = arith.constant 3 : index
    %123 = memref.load %arg17[%c3] : memref<6xf32, #tpu.memory_space<smem>>
    %cst_40 = arith.constant dense<0.000000e+00> : vector<16xf32>
    %124 = vector.multi_reduction <add>, %121, %cst_40 [1] : vector<16x128xf32> to vector<16xf32>
    %125 = vector.shape_cast %124 : vector<16xf32> to vector<16x1xf32>
    %cst_41 = arith.constant 1.280000e+02 : f32
    %126 = vector.broadcast %cst_41 : f32 to vector<16x1xf32>
    %127 = arith.divf %125, %126 : vector<16x1xf32>
    %128 = vector.broadcast %127 : vector<16x1xf32> to vector<16x128xf32>
    %129 = arith.subf %121, %128 : vector<16x128xf32>
    %130 = arith.mulf %129, %129 : vector<16x128xf32>
    %cst_42 = arith.constant dense<0.000000e+00> : vector<16xf32>
    %131 = vector.multi_reduction <add>, %130, %cst_42 [1] : vector<16x128xf32> to vector<16xf32>
    %132 = vector.shape_cast %131 : vector<16xf32> to vector<16x1xf32>
    %cst_43 = arith.constant 0.00787401571 : f32
    %133 = vector.broadcast %cst_43 : f32 to vector<16x1xf32>
    %134 = arith.mulf %132, %133 : vector<16x1xf32>
    %135 = math.sqrt %134 : vector<16x1xf32>
    %cst_44 = arith.constant 9.99999997E-7 : f32
    %136 = vector.broadcast %cst_44 : f32 to vector<16x1xf32>
    %137 = arith.addf %135, %136 : vector<16x1xf32>
    %138 = tpu.reciprocal %137 {approx = true} : vector<16x1xf32> -> vector<16x1xf32>
    %139 = vector.broadcast %127 : vector<16x1xf32> to vector<16x128xf32>
    %140 = arith.subf %121, %139 : vector<16x128xf32>
    %141 = vector.broadcast %138 : vector<16x1xf32> to vector<16x128xf32>
    %142 = arith.mulf %140, %141 : vector<16x128xf32>
    %143 = vector.broadcast %122 : f32 to vector<16x128xf32>
    %144 = arith.mulf %143, %142 : vector<16x128xf32>
    %145 = vector.broadcast %123 : f32 to vector<16x128xf32>
    %146 = arith.addf %144, %145 : vector<16x128xf32>
    %147 = arith.truncf %146 : vector<16x128xf32> to vector<16x128xbf16>
    %c0_45 = arith.constant 0 : index
    %c0_46 = arith.constant 0 : index
    %148 = vector.load %arg7[%c0_45, %c0_46] : memref<128x128xbf16, #tpu.memory_space<vmem>>, vector<128x128xbf16>
    %cst_47 = arith.constant dense<0.000000e+00> : vector<16x128xf32>
    %149 = tpu.matmul %147, %148, %cst_47 {dimension_numbers = #tpu.dot_dimension_numbers<[1], [0], [0], [1], [0, 0, 1, 1], [], []>} : vector<16x128xbf16>, vector<128x128xbf16>, vector<16x128xf32> -> vector<16x128xf32>
    %c0_48 = arith.constant 0 : index
    %c0_49 = arith.constant 0 : index
    %150 = vector.load %arg8[%c0_48, %c0_49] : memref<1x128xf32, #tpu.memory_space<vmem>>, vector<1x128xf32>
    %151 = vector.broadcast %150 : vector<1x128xf32> to vector<16x128xf32>
    %152 = arith.addf %149, %151 : vector<16x128xf32>
    %153 = arith.truncf %3 : vector<32x128xf32> to vector<32x128xbf16>
    %c0_50 = arith.constant 0 : index
    %c0_51 = arith.constant 0 : index
    %154 = vector.load %arg9[%c0_50, %c0_51] : memref<128x256xbf16, #tpu.memory_space<vmem>>, vector<128x256xbf16>
    %cst_52 = arith.constant dense<0.000000e+00> : vector<32x256xf32>
    %155 = tpu.matmul %153, %154, %cst_52 {dimension_numbers = #tpu.dot_dimension_numbers<[1], [0], [0], [1], [0, 0, 1, 1], [], []>} : vector<32x128xbf16>, vector<128x256xbf16>, vector<32x256xf32> -> vector<32x256xf32>
    %c0_53 = arith.constant 0 : index
    %c0_54 = arith.constant 0 : index
    %156 = vector.load %arg10[%c0_53, %c0_54] : memref<1x256xf32, #tpu.memory_space<vmem>>, vector<1x256xf32>
    %157 = vector.broadcast %156 : vector<1x256xf32> to vector<32x256xf32>
    %158 = arith.addf %155, %157 : vector<32x256xf32>
    %159 = vector.extract_strided_slice %158 {offsets = [0, 0], sizes = [32, 128], strides = [1, 1]} : vector<32x256xf32> to vector<32x128xf32>
    %160 = vector.extract_strided_slice %158 {offsets = [0, 128], sizes = [32, 128], strides = [1, 1]} : vector<32x256xf32> to vector<32x128xf32>
    %161 = vector.extract_strided_slice %152 {offsets = [0, 0], sizes = [16, 32], strides = [1, 1]} : vector<16x128xf32> to vector<16x32xf32>
    %162 = arith.truncf %161 : vector<16x32xf32> to vector<16x32xbf16>
    %163 = vector.extract_strided_slice %159 {offsets = [0, 0], sizes = [32, 32], strides = [1, 1]} : vector<32x128xf32> to vector<32x32xf32>
    %164 = arith.truncf %163 : vector<32x32xf32> to vector<32x32xbf16>
    "tpu.trace_start"() <{level = 10 : i32, message = "qd,kd->qk"}> : () -> ()
    %cst_55 = arith.constant dense<0.000000e+00> : vector<16x32xf32>
    %165 = tpu.matmul %162, %164, %cst_55 {dimension_numbers = #tpu.dot_dimension_numbers<[1], [1], [0], [0], [0, 0, 1, 0], [], []>} : vector<16x32xbf16>, vector<32x32xbf16>, vector<16x32xf32> -> vector<16x32xf32>
    "tpu.trace_stop"() : () -> ()
    %cst_56 = arith.constant 0.176776692 : f32
    %166 = vector.broadcast %cst_56 : f32 to vector<16x32xf32>
    %167 = arith.mulf %165, %166 : vector<16x32xf32>
    %cst_57 = arith.constant dense<0xFF800000> : vector<16xf32>
    %168 = vector.multi_reduction <maximumf>, %167, %cst_57 [1] : vector<16x32xf32> to vector<16xf32>
    %169 = vector.shape_cast %168 : vector<16xf32> to vector<16x1xf32>
    %170 = vector.broadcast %169 : vector<16x1xf32> to vector<16x32xf32>
    %171 = arith.subf %167, %170 : vector<16x32xf32>
    %172 = math.exp %171 : vector<16x32xf32>
    %cst_58 = arith.constant dense<0.000000e+00> : vector<16xf32>
    %173 = vector.multi_reduction <add>, %172, %cst_58 [1] : vector<16x32xf32> to vector<16xf32>
    %174 = vector.shape_cast %173 : vector<16xf32> to vector<16x1xf32>
    %175 = tpu.reciprocal %174 {approx = true} : vector<16x1xf32> -> vector<16x1xf32>
    %176 = vector.broadcast %175 : vector<16x1xf32> to vector<16x32xf32>
    %177 = arith.mulf %172, %176 : vector<16x32xf32>
    %178 = vector.extract_strided_slice %160 {offsets = [0, 0], sizes = [32, 32], strides = [1, 1]} : vector<32x128xf32> to vector<32x32xf32>
    %cst_59 = arith.constant dense<0.000000e+00> : vector<16x32xf32>
    %179 = tpu.matmul %177, %178, %cst_59 {dimension_numbers = #tpu.dot_dimension_numbers<[1], [0], [0], [1], [0, 0, 1, 1], [], []>} : vector<16x32xf32>, vector<32x32xf32>, vector<16x32xf32> -> vector<16x32xf32>
    %180 = vector.extract_strided_slice %152 {offsets = [0, 32], sizes = [16, 32], strides = [1, 1]} : vector<16x128xf32> to vector<16x32xf32>
    %181 = arith.truncf %180 : vector<16x32xf32> to vector<16x32xbf16>
    %182 = vector.extract_strided_slice %159 {offsets = [0, 32], sizes = [32, 32], strides = [1, 1]} : vector<32x128xf32> to vector<32x32xf32>
    %183 = arith.truncf %182 : vector<32x32xf32> to vector<32x32xbf16>
    "tpu.trace_start"() <{level = 10 : i32, message = "qd,kd->qk"}> : () -> ()
    %cst_60 = arith.constant dense<0.000000e+00> : vector<16x32xf32>
    %184 = tpu.matmul %181, %183, %cst_60 {dimension_numbers = #tpu.dot_dimension_numbers<[1], [1], [0], [0], [0, 0, 1, 0], [], []>} : vector<16x32xbf16>, vector<32x32xbf16>, vector<16x32xf32> -> vector<16x32xf32>
    "tpu.trace_stop"() : () -> ()
    %cst_61 = arith.constant 0.176776692 : f32
    %185 = vector.broadcast %cst_61 : f32 to vector<16x32xf32>
    %186 = arith.mulf %184, %185 : vector<16x32xf32>
    %cst_62 = arith.constant dense<0xFF800000> : vector<16xf32>
    %187 = vector.multi_reduction <maximumf>, %186, %cst_62 [1] : vector<16x32xf32> to vector<16xf32>
    %188 = vector.shape_cast %187 : vector<16xf32> to vector<16x1xf32>
    %189 = vector.broadcast %188 : vector<16x1xf32> to vector<16x32xf32>
    %190 = arith.subf %186, %189 : vector<16x32xf32>
    %191 = math.exp %190 : vector<16x32xf32>
    %cst_63 = arith.constant dense<0.000000e+00> : vector<16xf32>
    %192 = vector.multi_reduction <add>, %191, %cst_63 [1] : vector<16x32xf32> to vector<16xf32>
    %193 = vector.shape_cast %192 : vector<16xf32> to vector<16x1xf32>
    %194 = tpu.reciprocal %193 {approx = true} : vector<16x1xf32> -> vector<16x1xf32>
    %195 = vector.broadcast %194 : vector<16x1xf32> to vector<16x32xf32>
    %196 = arith.mulf %191, %195 : vector<16x32xf32>
    %197 = vector.extract_strided_slice %160 {offsets = [0, 32], sizes = [32, 32], strides = [1, 1]} : vector<32x128xf32> to vector<32x32xf32>
    %cst_64 = arith.constant dense<0.000000e+00> : vector<16x32xf32>
    %198 = tpu.matmul %196, %197, %cst_64 {dimension_numbers = #tpu.dot_dimension_numbers<[1], [0], [0], [1], [0, 0, 1, 1], [], []>} : vector<16x32xf32>, vector<32x32xf32>, vector<16x32xf32> -> vector<16x32xf32>
    %199 = vector.extract_strided_slice %152 {offsets = [0, 64], sizes = [16, 32], strides = [1, 1]} : vector<16x128xf32> to vector<16x32xf32>
    %200 = arith.truncf %199 : vector<16x32xf32> to vector<16x32xbf16>
    %201 = vector.extract_strided_slice %159 {offsets = [0, 64], sizes = [32, 32], strides = [1, 1]} : vector<32x128xf32> to vector<32x32xf32>
    %202 = arith.truncf %201 : vector<32x32xf32> to vector<32x32xbf16>
    "tpu.trace_start"() <{level = 10 : i32, message = "qd,kd->qk"}> : () -> ()
    %cst_65 = arith.constant dense<0.000000e+00> : vector<16x32xf32>
    %203 = tpu.matmul %200, %202, %cst_65 {dimension_numbers = #tpu.dot_dimension_numbers<[1], [1], [0], [0], [0, 0, 1, 0], [], []>} : vector<16x32xbf16>, vector<32x32xbf16>, vector<16x32xf32> -> vector<16x32xf32>
    "tpu.trace_stop"() : () -> ()
    %cst_66 = arith.constant 0.176776692 : f32
    %204 = vector.broadcast %cst_66 : f32 to vector<16x32xf32>
    %205 = arith.mulf %203, %204 : vector<16x32xf32>
    %cst_67 = arith.constant dense<0xFF800000> : vector<16xf32>
    %206 = vector.multi_reduction <maximumf>, %205, %cst_67 [1] : vector<16x32xf32> to vector<16xf32>
    %207 = vector.shape_cast %206 : vector<16xf32> to vector<16x1xf32>
    %208 = vector.broadcast %207 : vector<16x1xf32> to vector<16x32xf32>
    %209 = arith.subf %205, %208 : vector<16x32xf32>
    %210 = math.exp %209 : vector<16x32xf32>
    %cst_68 = arith.constant dense<0.000000e+00> : vector<16xf32>
    %211 = vector.multi_reduction <add>, %210, %cst_68 [1] : vector<16x32xf32> to vector<16xf32>
    %212 = vector.shape_cast %211 : vector<16xf32> to vector<16x1xf32>
    %213 = tpu.reciprocal %212 {approx = true} : vector<16x1xf32> -> vector<16x1xf32>
    %214 = vector.broadcast %213 : vector<16x1xf32> to vector<16x32xf32>
    %215 = arith.mulf %210, %214 : vector<16x32xf32>
    %216 = vector.extract_strided_slice %160 {offsets = [0, 64], sizes = [32, 32], strides = [1, 1]} : vector<32x128xf32> to vector<32x32xf32>
    %cst_69 = arith.constant dense<0.000000e+00> : vector<16x32xf32>
    %217 = tpu.matmul %215, %216, %cst_69 {dimension_numbers = #tpu.dot_dimension_numbers<[1], [0], [0], [1], [0, 0, 1, 1], [], []>} : vector<16x32xf32>, vector<32x32xf32>, vector<16x32xf32> -> vector<16x32xf32>
    %218 = vector.extract_strided_slice %152 {offsets = [0, 96], sizes = [16, 32], strides = [1, 1]} : vector<16x128xf32> to vector<16x32xf32>
    %219 = arith.truncf %218 : vector<16x32xf32> to vector<16x32xbf16>
    %220 = vector.extract_strided_slice %159 {offsets = [0, 96], sizes = [32, 32], strides = [1, 1]} : vector<32x128xf32> to vector<32x32xf32>
    %221 = arith.truncf %220 : vector<32x32xf32> to vector<32x32xbf16>
    "tpu.trace_start"() <{level = 10 : i32, message = "qd,kd->qk"}> : () -> ()
    %cst_70 = arith.constant dense<0.000000e+00> : vector<16x32xf32>
    %222 = tpu.matmul %219, %221, %cst_70 {dimension_numbers = #tpu.dot_dimension_numbers<[1], [1], [0], [0], [0, 0, 1, 0], [], []>} : vector<16x32xbf16>, vector<32x32xbf16>, vector<16x32xf32> -> vector<16x32xf32>
    "tpu.trace_stop"() : () -> ()
    %cst_71 = arith.constant 0.176776692 : f32
    %223 = vector.broadcast %cst_71 : f32 to vector<16x32xf32>
    %224 = arith.mulf %222, %223 : vector<16x32xf32>
    %cst_72 = arith.constant dense<0xFF800000> : vector<16xf32>
    %225 = vector.multi_reduction <maximumf>, %224, %cst_72 [1] : vector<16x32xf32> to vector<16xf32>
    %226 = vector.shape_cast %225 : vector<16xf32> to vector<16x1xf32>
    %227 = vector.broadcast %226 : vector<16x1xf32> to vector<16x32xf32>
    %228 = arith.subf %224, %227 : vector<16x32xf32>
    %229 = math.exp %228 : vector<16x32xf32>
    %cst_73 = arith.constant dense<0.000000e+00> : vector<16xf32>
    %230 = vector.multi_reduction <add>, %229, %cst_73 [1] : vector<16x32xf32> to vector<16xf32>
    %231 = vector.shape_cast %230 : vector<16xf32> to vector<16x1xf32>
    %232 = tpu.reciprocal %231 {approx = true} : vector<16x1xf32> -> vector<16x1xf32>
    %233 = vector.broadcast %232 : vector<16x1xf32> to vector<16x32xf32>
    %234 = arith.mulf %229, %233 : vector<16x32xf32>
    %235 = vector.extract_strided_slice %160 {offsets = [0, 96], sizes = [32, 32], strides = [1, 1]} : vector<32x128xf32> to vector<32x32xf32>
    %cst_74 = arith.constant dense<0.000000e+00> : vector<16x32xf32>
    %236 = tpu.matmul %234, %235, %cst_74 {dimension_numbers = #tpu.dot_dimension_numbers<[1], [0], [0], [1], [0, 0, 1, 1], [], []>} : vector<16x32xf32>, vector<32x32xf32>, vector<16x32xf32> -> vector<16x32xf32>
    %237 = tpu.concatenate %179, %198, %217, %236 in 1 : vector<16x32xf32>, vector<16x32xf32>, vector<16x32xf32>, vector<16x32xf32> -> vector<16x128xf32>
    %238 = arith.truncf %237 : vector<16x128xf32> to vector<16x128xbf16>
    %c0_75 = arith.constant 0 : index
    %c0_76 = arith.constant 0 : index
    %239 = vector.load %arg11[%c0_75, %c0_76] : memref<128x128xbf16, #tpu.memory_space<vmem>>, vector<128x128xbf16>
    %cst_77 = arith.constant dense<0.000000e+00> : vector<16x128xf32>
    %240 = tpu.matmul %238, %239, %cst_77 {dimension_numbers = #tpu.dot_dimension_numbers<[1], [0], [0], [1], [0, 0, 1, 1], [], []>} : vector<16x128xbf16>, vector<128x128xbf16>, vector<16x128xf32> -> vector<16x128xf32>
    %c0_78 = arith.constant 0 : index
    %c0_79 = arith.constant 0 : index
    %241 = vector.load %arg12[%c0_78, %c0_79] : memref<1x128xf32, #tpu.memory_space<vmem>>, vector<1x128xf32>
    %242 = vector.broadcast %241 : vector<1x128xf32> to vector<16x128xf32>
    %243 = arith.addf %240, %242 : vector<16x128xf32>
    %244 = arith.addf %121, %243 : vector<16x128xf32>
    %c4 = arith.constant 4 : index
    %245 = memref.load %arg17[%c4] : memref<6xf32, #tpu.memory_space<smem>>
    %c5 = arith.constant 5 : index
    %246 = memref.load %arg17[%c5] : memref<6xf32, #tpu.memory_space<smem>>
    %cst_80 = arith.constant dense<0.000000e+00> : vector<16xf32>
    %247 = vector.multi_reduction <add>, %244, %cst_80 [1] : vector<16x128xf32> to vector<16xf32>
    %248 = vector.shape_cast %247 : vector<16xf32> to vector<16x1xf32>
    %cst_81 = arith.constant 1.280000e+02 : f32
    %249 = vector.broadcast %cst_81 : f32 to vector<16x1xf32>
    %250 = arith.divf %248, %249 : vector<16x1xf32>
    %251 = vector.broadcast %250 : vector<16x1xf32> to vector<16x128xf32>
    %252 = arith.subf %244, %251 : vector<16x128xf32>
    %253 = arith.mulf %252, %252 : vector<16x128xf32>
    %cst_82 = arith.constant dense<0.000000e+00> : vector<16xf32>
    %254 = vector.multi_reduction <add>, %253, %cst_82 [1] : vector<16x128xf32> to vector<16xf32>
    %255 = vector.shape_cast %254 : vector<16xf32> to vector<16x1xf32>
    %cst_83 = arith.constant 0.00787401571 : f32
    %256 = vector.broadcast %cst_83 : f32 to vector<16x1xf32>
    %257 = arith.mulf %255, %256 : vector<16x1xf32>
    %258 = math.sqrt %257 : vector<16x1xf32>
    %cst_84 = arith.constant 9.99999997E-7 : f32
    %259 = vector.broadcast %cst_84 : f32 to vector<16x1xf32>
    %260 = arith.addf %258, %259 : vector<16x1xf32>
    %261 = tpu.reciprocal %260 {approx = true} : vector<16x1xf32> -> vector<16x1xf32>
    %262 = vector.broadcast %250 : vector<16x1xf32> to vector<16x128xf32>
    %263 = arith.subf %244, %262 : vector<16x128xf32>
    %264 = vector.broadcast %261 : vector<16x1xf32> to vector<16x128xf32>
    %265 = arith.mulf %263, %264 : vector<16x128xf32>
    %266 = vector.broadcast %245 : f32 to vector<16x128xf32>
    %267 = arith.mulf %266, %265 : vector<16x128xf32>
    %268 = vector.broadcast %246 : f32 to vector<16x128xf32>
    %269 = arith.addf %267, %268 : vector<16x128xf32>
    %270 = arith.truncf %269 : vector<16x128xf32> to vector<16x128xbf16>
    %c0_85 = arith.constant 0 : index
    %c0_86 = arith.constant 0 : index
    %271 = vector.load %arg13[%c0_85, %c0_86] : memref<128x256xbf16, #tpu.memory_space<vmem>>, vector<128x256xbf16>
    %cst_87 = arith.constant dense<0.000000e+00> : vector<16x256xf32>
    %272 = tpu.matmul %270, %271, %cst_87 {dimension_numbers = #tpu.dot_dimension_numbers<[1], [0], [0], [1], [0, 0, 1, 1], [], []>} : vector<16x128xbf16>, vector<128x256xbf16>, vector<16x256xf32> -> vector<16x256xf32>
    %c0_88 = arith.constant 0 : index
    %c0_89 = arith.constant 0 : index
    %273 = vector.load %arg14[%c0_88, %c0_89] : memref<1x256xf32, #tpu.memory_space<vmem>>, vector<1x256xf32>
    %274 = vector.broadcast %273 : vector<1x256xf32> to vector<16x256xf32>
    %275 = arith.addf %272, %274 : vector<16x256xf32>
    %cst_90 = arith.constant 0.000000e+00 : f32
    %276 = vector.broadcast %cst_90 : f32 to vector<16x256xf32>
    %277 = arith.maximumf %275, %276 : vector<16x256xf32>
    %278 = arith.truncf %277 : vector<16x256xf32> to vector<16x256xbf16>
    %c0_91 = arith.constant 0 : index
    %c0_92 = arith.constant 0 : index
    %279 = vector.load %arg15[%c0_91, %c0_92] : memref<256x128xbf16, #tpu.memory_space<vmem>>, vector<256x128xbf16>
    %cst_93 = arith.constant dense<0.000000e+00> : vector<16x128xf32>
    %280 = tpu.matmul %278, %279, %cst_93 {dimension_numbers = #tpu.dot_dimension_numbers<[1], [0], [0], [1], [0, 0, 1, 1], [], []>} : vector<16x256xbf16>, vector<256x128xbf16>, vector<16x128xf32> -> vector<16x128xf32>
    %c0_94 = arith.constant 0 : index
    %c0_95 = arith.constant 0 : index
    %281 = vector.load %arg16[%c0_94, %c0_95] : memref<1x128xf32, #tpu.memory_space<vmem>>, vector<1x128xf32>
    %282 = vector.broadcast %281 : vector<1x128xf32> to vector<16x128xf32>
    %283 = arith.addf %280, %282 : vector<16x128xf32>
    %284 = arith.addf %244, %283 : vector<16x128xf32>
    %c0_96 = arith.constant 0 : index
    %c0_97 = arith.constant 0 : index
    %c0_98 = arith.constant 0 : index
    %285 = vector.load %arg18[%c0_96, %c0_97, %c0_98] : memref<1x16x128xf32, #tpu.memory_space<vmem>>, vector<1x16x128xf32>
    %286 = vector.shape_cast %285 : vector<1x16x128xf32> to vector<16x128xf32>
    %287 = vector.shape_cast %284 : vector<16x128xf32> to vector<1x16x128xf32>
    tpu.vector_store %arg18[%c0_96, %c0_97, %c0_98], %287 {strides = array<i32>} : memref<1x16x128xf32, #tpu.memory_space<vmem>>, vector<1x16x128xf32>,
    return
  }
  func.func @transform_0(%arg0: i32) -> (i32, i32, i32) {
    %c0_i32 = arith.constant 0 : i32
    %c0_i32_0 = arith.constant 0 : i32
    %c0_i32_1 = arith.constant 0 : i32
    return %arg0, %c0_i32, %c0_i32_0 : i32, i32, i32
  }
  func.func @transform_1(%arg0: i32) -> (i32, i32, i32) {
    %c0_i32 = arith.constant 0 : i32
    %c0_i32_0 = arith.constant 0 : i32
    %c0_i32_1 = arith.constant 0 : i32
    return %arg0, %c0_i32, %c0_i32_0 : i32, i32, i32
  }
  func.func @transform_2(%arg0: i32) -> (i32, i32) {
    %c0_i32 = arith.constant 0 : i32
    %c0_i32_0 = arith.constant 0 : i32
    %c0_i32_1 = arith.constant 0 : i32
    return %c0_i32, %c0_i32_0 : i32, i32
  }
  func.func @transform_3(%arg0: i32) -> (i32, i32) {
    %c0_i32 = arith.constant 0 : i32
    %c0_i32_0 = arith.constant 0 : i32
    %c0_i32_1 = arith.constant 0 : i32
    return %c0_i32, %c0_i32_0 : i32, i32
  }
  func.func @transform_4(%arg0: i32) -> (i32, i32) {
    %c0_i32 = arith.constant 0 : i32
    %c0_i32_0 = arith.constant 0 : i32
    %c0_i32_1 = arith.constant 0 : i32
    return %c0_i32, %c0_i32_0 : i32, i32
  }
  func.func @transform_5(%arg0: i32) -> (i32, i32) {
    %c0_i32 = arith.constant 0 : i32
    %c0_i32_0 = arith.constant 0 : i32
    %c0_i32_1 = arith.constant 0 : i32
    return %c0_i32, %c0_i32_0 : i32, i32
  }
  func.func @transform_6(%arg0: i32) -> (i32, i32) {
    %c0_i32 = arith.constant 0 : i32
    %c0_i32_0 = arith.constant 0 : i32
    %c0_i32_1 = arith.constant 0 : i32
    return %c0_i32, %c0_i32_0 : i32, i32
  }
  func.func @transform_7(%arg0: i32) -> (i32, i32) {
    %c0_i32 = arith.constant 0 : i32
    %c0_i32_0 = arith.constant 0 : i32
    %c0_i32_1 = arith.constant 0 : i32
    return %c0_i32, %c0_i32_0 : i32, i32
  }
  func.func @transform_8(%arg0: i32) -> (i32, i32) {
    %c0_i32 = arith.constant 0 : i32
    %c0_i32_0 = arith.constant 0 : i32
    %c0_i32_1 = arith.constant 0 : i32
    return %c0_i32, %c0_i32_0 : i32, i32
  }
  func.func @transform_9(%arg0: i32) -> (i32, i32) {
    %c0_i32 = arith.constant 0 : i32
    %c0_i32_0 = arith.constant 0 : i32
    %c0_i32_1 = arith.constant 0 : i32
    return %c0_i32, %c0_i32_0 : i32, i32
  }
  func.func @transform_10(%arg0: i32) -> (i32, i32) {
    %c0_i32 = arith.constant 0 : i32
    %c0_i32_0 = arith.constant 0 : i32
    %c0_i32_1 = arith.constant 0 : i32
    return %c0_i32, %c0_i32_0 : i32, i32
  }
  func.func @transform_11(%arg0: i32) -> (i32, i32) {
    %c0_i32 = arith.constant 0 : i32
    %c0_i32_0 = arith.constant 0 : i32
    %c0_i32_1 = arith.constant 0 : i32
    return %c0_i32, %c0_i32_0 : i32, i32
  }
  func.func @transform_12(%arg0: i32) -> (i32, i32) {
    %c0_i32 = arith.constant 0 : i32
    %c0_i32_0 = arith.constant 0 : i32
    %c0_i32_1 = arith.constant 0 : i32
    return %c0_i32, %c0_i32_0 : i32, i32
  }
  func.func @transform_13(%arg0: i32) -> (i32, i32) {
    %c0_i32 = arith.constant 0 : i32
    %c0_i32_0 = arith.constant 0 : i32
    %c0_i32_1 = arith.constant 0 : i32
    return %c0_i32, %c0_i32_0 : i32, i32
  }
  func.func @transform_14(%arg0: i32) -> (i32, i32) {
    %c0_i32 = arith.constant 0 : i32
    %c0_i32_0 = arith.constant 0 : i32
    %c0_i32_1 = arith.constant 0 : i32
    return %c0_i32, %c0_i32_0 : i32, i32
  }
  func.func @transform_15(%arg0: i32) -> (i32, i32) {
    %c0_i32 = arith.constant 0 : i32
    %c0_i32_0 = arith.constant 0 : i32
    %c0_i32_1 = arith.constant 0 : i32
    return %c0_i32, %c0_i32_0 : i32, i32
  }
  func.func @transform_16(%arg0: i32) -> i32 {
    %c0_i32 = arith.constant 0 : i32
    %c0_i32_0 = arith.constant 0 : i32
    return %c0_i32 : i32
  }
  func.func @transform_17(%arg0: i32) -> (i32, i32, i32) {
    %c0_i32 = arith.constant 0 : i32
    %c0_i32_0 = arith.constant 0 : i32
    %c0_i32_1 = arith.constant 0 : i32
    return %arg0, %c0_i32, %c0_i32_0 : i32, i32, i32
  }
}

</mosaic_0001>

<llo_original>
// kernel: tpu_custom_call.1
$region0: #{tpu_custom_call.1}
  #allocation0 [shape = 'u32[]', space=smem, size = 0x4, offset = 0x4, fixed_abs, tag = 'smem constant byte address 0x4 - core index']
  #allocation1 [shape = 'u32[72,128]{1,0:T(1,128)}', space=vmem, size = 0x9000, scoped, tag = 'internal scratch']
  %s0 = inlined_call_operand.hbm [shape: f32[2,16,128], index: 0, kind: input, shape index: {}]
  %s1 = inlined_call_operand.hbm [shape: f32[2,32,128], index: 1, kind: input, shape index: {}]
  %s2 = inlined_call_operand.hbm [shape: bf16[128,384], index: 2, kind: input, shape index: {}]
  %s3 = inlined_call_operand.hbm [shape: f32[1,384], index: 3, kind: input, shape index: {}]
  %s4 = inlined_call_operand.hbm [shape: bf16[128,128], index: 4, kind: input, shape index: {}]
  %s5 = inlined_call_operand.hbm [shape: f32[1,128], index: 5, kind: input, shape index: {}]
  %s6 = inlined_call_operand.hbm [shape: bf16[128,128], index: 6, kind: input, shape index: {}]
  %s7 = inlined_call_operand.vmem [shape: f32[1,128], index: 7, kind: input, shape index: {}]
  %s8 = inlined_call_operand.hbm [shape: bf16[128,256], index: 8, kind: input, shape index: {}]
  %s9 = inlined_call_operand.vmem [shape: f32[1,256], index: 9, kind: input, shape index: {}]
  %s10 = inlined_call_operand.hbm [shape: bf16[128,128], index: 10, kind: input, shape index: {}]
  %s11 = inlined_call_operand.vmem [shape: f32[1,128], index: 11, kind: input, shape index: {}]
  %s12 = inlined_call_operand.hbm [shape: bf16[128,256], index: 12, kind: input, shape index: {}]
  %s13 = inlined_call_operand.vmem [shape: f32[1,256], index: 13, kind: input, shape index: {}]
  %s14 = inlined_call_operand.hbm [shape: bf16[256,128], index: 14, kind: input, shape index: {}]
  %s15 = inlined_call_operand.vmem [shape: f32[1,128], index: 15, kind: input, shape index: {}]
  %s16 = inlined_call_operand.vmem [shape: f32[6], index: 16, kind: input, shape index: {}]
  %s17 = inlined_call_operand.hbm [shape: f32[2,16,128], index: 17, kind: output, shape index: {}]
  %s18 = sld [smem:[#allocation0]]
  $region149: #{tpu_custom_call.1} parent=0
    _
  %s20 = ssub.s32 1, %s18
  %s21 = scalar_select 0, %s20, %s18
  $region1: #{tpu_custom_call.1} parent=0
    #allocation2 [shape = 'u8[16384]{0}', space=vmem, size = 0x4000, scoped, tag = 'input window, operand 0']
    #allocation3 [shape = 's32[2]{0}', space=sflag, size = 0x8, scoped, tag = 'scoped memory for tpu_custom_call.1']
    #allocation4 [shape = 's32[2]{0}', space=sflag, size = 0x8, scoped, tag = 'scoped memory for tpu_custom_call.1']
    #allocation5 [shape = 's32[2]{0}', space=sflag, size = 0x8, scoped, tag = 'scoped memory for tpu_custom_call.1']
    #allocation6 [shape = 'u8[32768]{0}', space=vmem, size = 0x8000, scoped, tag = 'input window, operand 1']
    #allocation7 [shape = 's32[2]{0}', space=sflag, size = 0x8, scoped, tag = 'scoped memory for tpu_custom_call.1']
    #allocation8 [shape = 'u8[98304]{0}', space=vmem, size = 0x18000, scoped, tag = 'input window, operand 2, single buffered']
    #allocation9 [shape = 'u8[1536]{0}', space=vmem, size = 0x800, scoped, tag = 'input window, operand 3, single buffered']
    #allocation10 [shape = 's32[1]{0}', space=sflag, size = 0x4, scoped, tag = 'scoped memory for tpu_custom_call.1']
    #allocation11 [shape = 'u8[32768]{0}', space=vmem, size = 0x8000, scoped, tag = 'input window, operand 4, single buffered']
    #allocation12 [shape = 'u8[512]{0}', space=vmem, size = 0x400, scoped, tag = 'input window, operand 5, single buffered']
    #allocation13 [shape = 's32[1]{0}', space=sflag, size = 0x4, scoped, tag = 'scoped memory for tpu_custom_call.1']
    #allocation14 [shape = 'u8[32768]{0}', space=vmem, size = 0x8000, scoped, tag = 'input window, operand 6, single buffered']
    #allocation15 [shape = 'u8[65536]{0}', space=vmem, size = 0x10000, scoped, tag = 'input window, operand 8, single buffered']
    #allocation16 [shape = 's32[1]{0}', space=sflag, size = 0x4, scoped, tag = 'scoped memory for tpu_custom_call.1']
    #allocation17 [shape = 'u8[32768]{0}', space=vmem, size = 0x8000, scoped, tag = 'input window, operand 10, single buffered']
    #allocation18 [shape = 'u8[65536]{0}', space=vmem, size = 0x10000, scoped, tag = 'input window, operand 12, single buffered']
    #allocation19 [shape = 's32[1]{0}', space=sflag, size = 0x4, scoped, tag = 'scoped memory for tpu_custom_call.1']
    #allocation20 [shape = 'u8[65536]{0}', space=vmem, size = 0x10000, scoped, tag = 'input window, operand 14, single buffered']
    #allocation21 [shape = 'u8[512]{0}', space=smem, size = 0x200, scoped, tag = 'input window, operand 16, single buffered']
    #allocation22 [shape = 'u8[16384]{0}', space=vmem, size = 0x4000, scoped, tag = 'output window, operand 0']
    %22 = vsyncpa [#allocation3], 0
    %s23 = scalar_lea.sflag [#allocation3], 1
    %24 = vsyncpa %s23, 0
    %25 = vsyncpa [#allocation7], 0
    %s26 = scalar_lea.sflag [#allocation7], 1
    %27 = vsyncpa %s26, 0
    %28 = vsyncpa [#allocation10], 0
    %29 = vsyncpa [#allocation13], 0
    %30 = vsyncpa [#allocation16], 0
    %31 = vsyncpa [#allocation19], 0
    %32 = vsyncpa [#allocation5], 0
    %33 = vsyncpa [#allocation4], 0
    %s34 = scalar_lea.sflag [#allocation4], 1
    %35 = vsyncpa %s34, 0
    loop: start=0, step=1, limit=4
    $region2: #{tpu_custom_call.1} parent=1 // loop_pre_header
      _
    $region3: #{tpu_custom_call.1} parent=1 // loop_header
      %s37 = sphi 0, %s41
      %p38 = scmp.ge.s32.totalorder %s37, 4
      %s47 = sphi 0, %s49
      %s50 = sphi 0, %s47
      %s51 = sphi 0, %s50
      %s67 = sphi 0, %s51
      %s73 = sphi 0, %s75
      %s76 = sphi 0, %s73
      %s77 = sphi 0, %s76
      %s93 = sphi 0, %s77
      %s97 = sphi 0, %s97
      %s99 = sphi 0, %s97
      %s100 = sphi 0, %s99
      %s114 = sphi 0, %s100
      %s118 = sphi 0, %s118
      %s120 = sphi 0, %s118
      %s121 = sphi 0, %s120
      %s135 = sphi 0, %s121
      %s139 = sphi 0, %s139
      %s141 = sphi 0, %s139
      %s142 = sphi 0, %s141
      %s156 = sphi 0, %s142
      %s160 = sphi 0, %s160
      %s162 = sphi 0, %s160
      %s163 = sphi 0, %s162
      %s177 = sphi 0, %s163
      %s181 = sphi 0, %s181
      %s183 = sphi 0, %s181
      %s184 = sphi 0, %s183
      %s198 = sphi 0, %s184
      %s202 = sphi 0, %s202
      %s204 = sphi 0, %s202
      %s205 = sphi 0, %s204
      %s219 = sphi 0, %s205
      %s223 = sphi 0, %s223
      %s225 = sphi 0, %s223
      %s226 = sphi 0, %s225
      %s240 = sphi 0, %s226
      %s244 = sphi 0, %s244
      %s246 = sphi 0, %s244
      %s247 = sphi 0, %s246
      %s261 = sphi 0, %s247
      %s265 = sphi 0, %s265
      %s267 = sphi 0, %s265
      %s268 = sphi 0, %s267
      %s282 = sphi 0, %s268
      %s286 = sphi 0, %s286
      %s288 = sphi 0, %s286
      %s289 = sphi 0, %s288
      %s303 = sphi 0, %s289
      %s307 = sphi 0, %s307
      %s309 = sphi 0, %s307
      %s310 = sphi 0, %s309
      %s324 = sphi 0, %s310
      %s328 = sphi 0, %s328
      %s330 = sphi 0, %s328
      %s331 = sphi 0, %s330
      %s345 = sphi 0, %s331
      %s349 = sphi 0, %s349
      %s351 = sphi 0, %s349
      %s352 = sphi 0, %s351
      %s366 = sphi 0, %s352
      %s370 = sphi 0, %s370
      %s372 = sphi 0, %s370
      %s373 = sphi 0, %s372
      %s387 = sphi 0, %s373
      %s391 = sphi 0, %s391
      %s393 = sphi 0, %s391
      %s394 = sphi 0, %s393
      %s408 = sphi 0, %s394
      %s414 = sphi 0, %s416
      %s417 = sphi 0, %s414
      %s418 = sphi 0, %s417
      %s434 = sphi 0, %s418
    $region4: #{tpu_custom_call.1} parent=1 // loop_header_branch
      %40 = sbr.rel (%p38) target = $region8
    $region5: #{tpu_custom_call.1} parent=1 // loop_body
      %s42 = ssub.s32 %s37, 1
      %s43 = ssub.s32 %s37, 2
      %s44 = sadd.s32 %s37, 1
      %s45 = ssub.s32 %s37, %s44
      %p46 = scmp.eq.s32.totalorder %s45, 0
      %s48 = sadd.s32 %s47, 1
      %s49 = scalar_select %p46, %s47, %s48
      %p52 = pneg %p46
      %p53 = scmp.eq.s32.totalorder %s37, 1
      %p54 = por %p52, %p53
      %p55 = scmp.ne.s32.totalorder %s47, %s50
      %p56 = scmp.eq.s32.totalorder %s37, 0
      %p57 = por %p55, %p56
      %p58 = scmp.ne.s32.totalorder %s47, %s50
      %p59 = scmp.eq.s32.totalorder %s42, 1
      %p60 = por %p58, %p59
      %p61 = scmp.ne.s32.totalorder %s50, %s51
      %p62 = scmp.eq.s32.totalorder %s42, 0
      %p63 = por %p61, %p62
      %p64 = scmp.ne.s32.totalorder %s50, %s51
      %p65 = scmp.eq.s32.totalorder %s43, 1
      %p66 = por %p64, %p65
      %p68 = scmp.ne.s32.totalorder %s51, %s67
      %p69 = scmp.eq.s32.totalorder %s43, 0
      %p70 = por %p68, %p69
      %s71 = ssub.s32 %s37, %s44
      %p72 = scmp.eq.s32.totalorder %s71, 0
      %s74 = sadd.s32 %s73, 1
      %s75 = scalar_select %p72, %s73, %s74
      %p78 = pneg %p72
      %p79 = scmp.eq.s32.totalorder %s37, 1
      %p80 = por %p78, %p79
      %p81 = scmp.ne.s32.totalorder %s73, %s76
      %p82 = scmp.eq.s32.totalorder %s37, 0
      %p83 = por %p81, %p82
      %p84 = scmp.ne.s32.totalorder %s73, %s76
      %p85 = scmp.eq.s32.totalorder %s42, 1
      %p86 = por %p84, %p85
      %p87 = scmp.ne.s32.totalorder %s76, %s77
      %p88 = scmp.eq.s32.totalorder %s42, 0
      %p89 = por %p87, %p88
      %p90 = scmp.ne.s32.totalorder %s76, %s77
      %p91 = scmp.eq.s32.totalorder %s43, 1
      %p92 = por %p90, %p91
      %p94 = scmp.ne.s32.totalorder %s77, %s93
      %p95 = scmp.eq.s32.totalorder %s43, 0
      %p96 = por %p94, %p95
      %s98 = sadd.s32 %s97, 1
      %p101 = scmp.eq.s32.totalorder %s37, 1
      %p102 = scmp.ne.s32.totalorder %s97, %s99
      %p103 = scmp.eq.s32.totalorder %s37, 0
      %p104 = por %p102, %p103
      %p105 = scmp.ne.s32.totalorder %s97, %s99
      %p106 = scmp.eq.s32.totalorder %s42, 1
      %p107 = por %p105, %p106
      %p108 = scmp.ne.s32.totalorder %s99, %s100
      %p109 = scmp.eq.s32.totalorder %s42, 0
      %p110 = por %p108, %p109
      %p111 = scmp.ne.s32.totalorder %s99, %s100
      %p112 = scmp.eq.s32.totalorder %s43, 1
      %p113 = por %p111, %p112
      %p115 = scmp.ne.s32.totalorder %s100, %s114
      %p116 = scmp.eq.s32.totalorder %s43, 0
      %p117 = por %p115, %p116
      %s119 = sadd.s32 %s118, 1
      %p122 = scmp.eq.s32.totalorder %s37, 1
      %p123 = scmp.ne.s32.totalorder %s118, %s120
      %p124 = scmp.eq.s32.totalorder %s37, 0
      %p125 = por %p123, %p124
      %p126 = scmp.ne.s32.totalorder %s118, %s120
      %p127 = scmp.eq.s32.totalorder %s42, 1
      %p128 = por %p126, %p127
      %p129 = scmp.ne.s32.totalorder %s120, %s121
      %p130 = scmp.eq.s32.totalorder %s42, 0
      %p131 = por %p129, %p130
      %p132 = scmp.ne.s32.totalorder %s120, %s121
      %p133 = scmp.eq.s32.totalorder %s43, 1
      %p134 = por %p132, %p133
      %p136 = scmp.ne.s32.totalorder %s121, %s135
      %p137 = scmp.eq.s32.totalorder %s43, 0
      %p138 = por %p136, %p137
      %s140 = sadd.s32 %s139, 1
      %p143 = scmp.eq.s32.totalorder %s37, 1
      %p144 = scmp.ne.s32.totalorder %s139, %s141
      %p145 = scmp.eq.s32.totalorder %s37, 0
      %p146 = por %p144, %p145
      %p147 = scmp.ne.s32.totalorder %s139, %s141
      %p148 = scmp.eq.s32.totalorder %s42, 1
      %p149 = por %p147, %p148
      %p150 = scmp.ne.s32.totalorder %s141, %s142
      %p151 = scmp.eq.s32.totalorder %s42, 0
      %p152 = por %p150, %p151
      %p153 = scmp.ne.s32.totalorder %s141, %s142
      %p154 = scmp.eq.s32.totalorder %s43, 1
      %p155 = por %p153, %p154
      %p157 = scmp.ne.s32.totalorder %s142, %s156
      %p158 = scmp.eq.s32.totalorder %s43, 0
      %p159 = por %p157, %p158
      %s161 = sadd.s32 %s160, 1
      %p164 = scmp.eq.s32.totalorder %s37, 1
      %p165 = scmp.ne.s32.totalorder %s160, %s162
      %p166 = scmp.eq.s32.totalorder %s37, 0
      %p167 = por %p165, %p166
      %p168 = scmp.ne.s32.totalorder %s160, %s162
      %p169 = scmp.eq.s32.totalorder %s42, 1
      %p170 = por %p168, %p169
      %p171 = scmp.ne.s32.totalorder %s162, %s163
      %p172 = scmp.eq.s32.totalorder %s42, 0
      %p173 = por %p171, %p172
      %p174 = scmp.ne.s32.totalorder %s162, %s163
      %p175 = scmp.eq.s32.totalorder %s43, 1
      %p176 = por %p174, %p175
      %p178 = scmp.ne.s32.totalorder %s163, %s177
      %p179 = scmp.eq.s32.totalorder %s43, 0
      %p180 = por %p178, %p179
      %s182 = sadd.s32 %s181, 1
      %p185 = scmp.eq.s32.totalorder %s37, 1
      %p186 = scmp.ne.s32.totalorder %s181, %s183
      %p187 = scmp.eq.s32.totalorder %s37, 0
      %p188 = por %p186, %p187
      %p189 = scmp.ne.s32.totalorder %s181, %s183
      %p190 = scmp.eq.s32.totalorder %s42, 1
      %p191 = por %p189, %p190
      %p192 = scmp.ne.s32.totalorder %s183, %s184
      %p193 = scmp.eq.s32.totalorder %s42, 0
      %p194 = por %p192, %p193
      %p195 = scmp.ne.s32.totalorder %s183, %s184
      %p196 = scmp.eq.s32.totalorder %s43, 1
      %p197 = por %p195, %p196
      %p199 = scmp.ne.s32.totalorder %s184, %s198
      %p200 = scmp.eq.s32.totalorder %s43, 0
      %p201 = por %p199, %p200
      %s203 = sadd.s32 %s202, 1
      %p206 = scmp.eq.s32.totalorder %s37, 1
      %p207 = scmp.ne.s32.totalorder %s202, %s204
      %p208 = scmp.eq.s32.totalorder %s37, 0
      %p209 = por %p207, %p208
      %p210 = scmp.ne.s32.totalorder %s202, %s204
      %p211 = scmp.eq.s32.totalorder %s42, 1
      %p212 = por %p210, %p211
      %p213 = scmp.ne.s32.totalorder %s204, %s205
      %p214 = scmp.eq.s32.totalorder %s42, 0
      %p215 = por %p213, %p214
      %p216 = scmp.ne.s32.totalorder %s204, %s205
      %p217 = scmp.eq.s32.totalorder %s43, 1
      %p218 = por %p216, %p217
      %p220 = scmp.ne.s32.totalorder %s205, %s219
      %p221 = scmp.eq.s32.totalorder %s43, 0
      %p222 = por %p220, %p221
      %s224 = sadd.s32 %s223, 1
      %p227 = scmp.eq.s32.totalorder %s37, 1
      %p228 = scmp.ne.s32.totalorder %s223, %s225
      %p229 = scmp.eq.s32.totalorder %s37, 0
      %p230 = por %p228, %p229
      %p231 = scmp.ne.s32.totalorder %s223, %s225
      %p232 = scmp.eq.s32.totalorder %s42, 1
      %p233 = por %p231, %p232
      %p234 = scmp.ne.s32.totalorder %s225, %s226
      %p235 = scmp.eq.s32.totalorder %s42, 0
      %p236 = por %p234, %p235
      %p237 = scmp.ne.s32.totalorder %s225, %s226
      %p238 = scmp.eq.s32.totalorder %s43, 1
      %p239 = por %p237, %p238
      %p241 = scmp.ne.s32.totalorder %s226, %s240
      %p242 = scmp.eq.s32.totalorder %s43, 0
      %p243 = por %p241, %p242
      %s245 = sadd.s32 %s244, 1
      %p248 = scmp.eq.s32.totalorder %s37, 1
      %p249 = scmp.ne.s32.totalorder %s244, %s246
      %p250 = scmp.eq.s32.totalorder %s37, 0
      %p251 = por %p249, %p250
      %p252 = scmp.ne.s32.totalorder %s244, %s246
      %p253 = scmp.eq.s32.totalorder %s42, 1
      %p254 = por %p252, %p253
      %p255 = scmp.ne.s32.totalorder %s246, %s247
      %p256 = scmp.eq.s32.totalorder %s42, 0
      %p257 = por %p255, %p256
      %p258 = scmp.ne.s32.totalorder %s246, %s247
      %p259 = scmp.eq.s32.totalorder %s43, 1
      %p260 = por %p258, %p259
      %p262 = scmp.ne.s32.totalorder %s247, %s261
      %p263 = scmp.eq.s32.totalorder %s43, 0
      %p264 = por %p262, %p263
      %s266 = sadd.s32 %s265, 1
      %p269 = scmp.eq.s32.totalorder %s37, 1
      %p270 = scmp.ne.s32.totalorder %s265, %s267
      %p271 = scmp.eq.s32.totalorder %s37, 0
      %p272 = por %p270, %p271
      %p273 = scmp.ne.s32.totalorder %s265, %s267
      %p274 = scmp.eq.s32.totalorder %s42, 1
      %p275 = por %p273, %p274
      %p276 = scmp.ne.s32.totalorder %s267, %s268
      %p277 = scmp.eq.s32.totalorder %s42, 0
      %p278 = por %p276, %p277
      %p279 = scmp.ne.s32.totalorder %s267, %s268
      %p280 = scmp.eq.s32.totalorder %s43, 1
      %p281 = por %p279, %p280
      %p283 = scmp.ne.s32.totalorder %s268, %s282
      %p284 = scmp.eq.s32.totalorder %s43, 0
      %p285 = por %p283, %p284
      %s287 = sadd.s32 %s286, 1
      %p290 = scmp.eq.s32.totalorder %s37, 1
      %p291 = scmp.ne.s32.totalorder %s286, %s288
      %p292 = scmp.eq.s32.totalorder %s37, 0
      %p293 = por %p291, %p292
      %p294 = scmp.ne.s32.totalorder %s286, %s288
      %p295 = scmp.eq.s32.totalorder %s42, 1
      %p296 = por %p294, %p295
      %p297 = scmp.ne.s32.totalorder %s288, %s289
      %p298 = scmp.eq.s32.totalorder %s42, 0
      %p299 = por %p297, %p298
      %p300 = scmp.ne.s32.totalorder %s288, %s289
      %p301 = scmp.eq.s32.totalorder %s43, 1
      %p302 = por %p300, %p301
      %p304 = scmp.ne.s32.totalorder %s289, %s303
      %p305 = scmp.eq.s32.totalorder %s43, 0
      %p306 = por %p304, %p305
      %s308 = sadd.s32 %s307, 1
      %p311 = scmp.eq.s32.totalorder %s37, 1
      %p312 = scmp.ne.s32.totalorder %s307, %s309
      %p313 = scmp.eq.s32.totalorder %s37, 0
      %p314 = por %p312, %p313
      %p315 = scmp.ne.s32.totalorder %s307, %s309
      %p316 = scmp.eq.s32.totalorder %s42, 1
      %p317 = por %p315, %p316
      %p318 = scmp.ne.s32.totalorder %s309, %s310
      %p319 = scmp.eq.s32.totalorder %s42, 0
      %p320 = por %p318, %p319
      %p321 = scmp.ne.s32.totalorder %s309, %s310
      %p322 = scmp.eq.s32.totalorder %s43, 1
      %p323 = por %p321, %p322
      %p325 = scmp.ne.s32.totalorder %s310, %s324
      %p326 = scmp.eq.s32.totalorder %s43, 0
      %p327 = por %p325, %p326
      %s329 = sadd.s32 %s328, 1
      %p332 = scmp.eq.s32.totalorder %s37, 1
      %p333 = scmp.ne.s32.totalorder %s328, %s330
      %p334 = scmp.eq.s32.totalorder %s37, 0
      %p335 = por %p333, %p334
      %p336 = scmp.ne.s32.totalorder %s328, %s330
      %p337 = scmp.eq.s32.totalorder %s42, 1
      %p338 = por %p336, %p337
      %p339 = scmp.ne.s32.totalorder %s330, %s331
      %p340 = scmp.eq.s32.totalorder %s42, 0
      %p341 = por %p339, %p340
      %p342 = scmp.ne.s32.totalorder %s330, %s331
      %p343 = scmp.eq.s32.totalorder %s43, 1
      %p344 = por %p342, %p343
      %p346 = scmp.ne.s32.totalorder %s331, %s345
      %p347 = scmp.eq.s32.totalorder %s43, 0
      %p348 = por %p346, %p347
      %s350 = sadd.s32 %s349, 1
      %p353 = scmp.eq.s32.totalorder %s37, 1
      %p354 = scmp.ne.s32.totalorder %s349, %s351
      %p355 = scmp.eq.s32.totalorder %s37, 0
      %p356 = por %p354, %p355
      %p357 = scmp.ne.s32.totalorder %s349, %s351
      %p358 = scmp.eq.s32.totalorder %s42, 1
      %p359 = por %p357, %p358
      %p360 = scmp.ne.s32.totalorder %s351, %s352
      %p361 = scmp.eq.s32.totalorder %s42, 0
      %p362 = por %p360, %p361
      %p363 = scmp.ne.s32.totalorder %s351, %s352
      %p364 = scmp.eq.s32.totalorder %s43, 1
      %p365 = por %p363, %p364
      %p367 = scmp.ne.s32.totalorder %s352, %s366
      %p368 = scmp.eq.s32.totalorder %s43, 0
      %p369 = por %p367, %p368
      %s371 = sadd.s32 %s370, 1
      %p374 = scmp.eq.s32.totalorder %s37, 1
      %p375 = scmp.ne.s32.totalorder %s370, %s372
      %p376 = scmp.eq.s32.totalorder %s37, 0
      %p377 = por %p375, %p376
      %p378 = scmp.ne.s32.totalorder %s370, %s372
      %p379 = scmp.eq.s32.totalorder %s42, 1
      %p380 = por %p378, %p379
      %p381 = scmp.ne.s32.totalorder %s372, %s373
      %p382 = scmp.eq.s32.totalorder %s42, 0
      %p383 = por %p381, %p382
      %p384 = scmp.ne.s32.totalorder %s372, %s373
      %p385 = scmp.eq.s32.totalorder %s43, 1
      %p386 = por %p384, %p385
      %p388 = scmp.ne.s32.totalorder %s373, %s387
      %p389 = scmp.eq.s32.totalorder %s43, 0
      %p390 = por %p388, %p389
      %s392 = sadd.s32 %s391, 1
      %p395 = scmp.eq.s32.totalorder %s37, 1
      %p396 = scmp.ne.s32.totalorder %s391, %s393
      %p397 = scmp.eq.s32.totalorder %s37, 0
      %p398 = por %p396, %p397
      %p399 = scmp.ne.s32.totalorder %s391, %s393
      %p400 = scmp.eq.s32.totalorder %s42, 1
      %p401 = por %p399, %p400
      %p402 = scmp.ne.s32.totalorder %s393, %s394
      %p403 = scmp.eq.s32.totalorder %s42, 0
      %p404 = por %p402, %p403
      %p405 = scmp.ne.s32.totalorder %s393, %s394
      %p406 = scmp.eq.s32.totalorder %s43, 1
      %p407 = por %p405, %p406
      %p409 = scmp.ne.s32.totalorder %s394, %s408
      %p410 = scmp.eq.s32.totalorder %s43, 0
      %p411 = por %p409, %p410
      %s412 = ssub.s32 %s37, %s44
      %p413 = scmp.eq.s32.totalorder %s412, 0
      %s415 = sadd.s32 %s414, 1
      %s416 = scalar_select %p413, %s414, %s415
      %p419 = pneg %p413
      %p420 = scmp.eq.s32.totalorder %s37, 1
      %p421 = por %p419, %p420
      %p422 = scmp.ne.s32.totalorder %s414, %s417
      %p423 = scmp.eq.s32.totalorder %s37, 0
      %p424 = por %p422, %p423
      %p425 = scmp.ne.s32.totalorder %s414, %s417
      %p426 = scmp.eq.s32.totalorder %s42, 1
      %p427 = por %p425, %p426
      %p428 = scmp.ne.s32.totalorder %s417, %s418
      %p429 = scmp.eq.s32.totalorder %s42, 0
      %p430 = por %p428, %p429
      %p431 = scmp.ne.s32.totalorder %s417, %s418
      %p432 = scmp.eq.s32.totalorder %s43, 1
      %p433 = por %p431, %p432
      %p435 = scmp.ne.s32.totalorder %s418, %s434
      %p436 = scmp.eq.s32.totalorder %s43, 0
      %p437 = por %p435, %p436
      %p438 = scmp.le.s32.totalorder 1, %s37
      %p439 = scmp.lt.s32.totalorder %s37, 3
      %p440 = pnand %p438, %p439
      %p441 = pneg %p440
      // Predicated region
      $region9: #{tpu_custom_call.1} parent=5 // pred_check
        _
      $region10: #{tpu_custom_call.1} parent=5 // pred_check_branch
        %443 = sbr.rel (%p440) target = $region12
      $region11: #{tpu_custom_call.1} parent=5 // pred_region
        %s444 = ssub.s32 %s37, 1
        // Predicated region
        $region13: #{tpu_custom_call.1} parent=11 // pred_check
          %p445 = pneg %p110
        $region14: #{tpu_custom_call.1} parent=11 // pred_check_branch
          %447 = sbr.rel (%p445) target = $region16
        $region15: #{tpu_custom_call.1} parent=11 // pred_region
          %449 = vsyncadd [#allocation7], 0
          %s450 = sshll.u32 %s2, 4
          %s451 = int_to_ptr.hbm [resolvable:$true] %s450
          %s452 = sshll.u32 [#allocation8], 4
          %s453 = int_to_ptr.vmem [resolvable:$true] %s452
          %458 = dma.hbm_to_vmem [thread:$0]  %s451, 3072, %s453, [#allocation7], 192, 192, 12
        $region16: #{tpu_custom_call.1} parent=11 // pred_fallthru
          _
        // Predicated region
        $region17: #{tpu_custom_call.1} parent=11 // pred_check
          %p459 = pneg %p131
        $region18: #{tpu_custom_call.1} parent=11 // pred_check_branch
          %461 = sbr.rel (%p459) target = $region20
        $region19: #{tpu_custom_call.1} parent=11 // pred_region
          %463 = vsyncadd [#allocation10], 0
          %s465 = sshll.u32 %s3, 4
          %s466 = int_to_ptr.hbm [resolvable:$true] %s465
          %s467 = sshll.u32 [#allocation9], 4
          %s468 = int_to_ptr.vmem [resolvable:$true] %s467
          %470 = dma.hbm_to_vmem [thread:$0]  %s466, 48, %s468, [#allocation10]
        $region20: #{tpu_custom_call.1} parent=11 // pred_fallthru
          _
        // Predicated region
        $region21: #{tpu_custom_call.1} parent=11 // pred_check
          %p471 = pneg %p152
        $region22: #{tpu_custom_call.1} parent=11 // pred_check_branch
          %473 = sbr.rel (%p471) target = $region24
        $region23: #{tpu_custom_call.1} parent=11 // pred_region
          %475 = vsyncadd [#allocation10], 0
          %s476 = sshll.u32 %s4, 4
          %s477 = int_to_ptr.hbm [resolvable:$true] %s476
          %s478 = sshll.u32 [#allocation11], 4
          %s479 = int_to_ptr.vmem [resolvable:$true] %s478
          %484 = dma.hbm_to_vmem [thread:$0]  %s477, 1024, %s479, [#allocation10], 64, 64, 4
        $region24: #{tpu_custom_call.1} parent=11 // pred_fallthru
          _
        // Predicated region
        $region25: #{tpu_custom_call.1} parent=11 // pred_check
          %p485 = pneg %p173
        $region26: #{tpu_custom_call.1} parent=11 // pred_check_branch
          %487 = sbr.rel (%p485) target = $region28
        $region27: #{tpu_custom_call.1} parent=11 // pred_region
          %489 = vsyncadd [#allocation13], 0
          %s491 = sshll.u32 %s5, 4
          %s492 = int_to_ptr.hbm [resolvable:$true] %s491
          %s493 = sshll.u32 [#allocation12], 4
          %s494 = int_to_ptr.vmem [resolvable:$true] %s493
          %496 = dma.hbm_to_vmem [thread:$0]  %s492, 16, %s494, [#allocation13]
        $region28: #{tpu_custom_call.1} parent=11 // pred_fallthru
          _
        // Predicated region
        $region29: #{tpu_custom_call.1} parent=11 // pred_check
          %p497 = pneg %p194
        $region30: #{tpu_custom_call.1} parent=11 // pred_check_branch
          %499 = sbr.rel (%p497) target = $region32
        $region31: #{tpu_custom_call.1} parent=11 // pred_region
          %501 = vsyncadd [#allocation13], 0
          %s502 = sshll.u32 %s6, 4
          %s503 = int_to_ptr.hbm [resolvable:$true] %s502
          %s504 = sshll.u32 [#allocation14], 4
          %s505 = int_to_ptr.vmem [resolvable:$true] %s504
          %510 = dma.hbm_to_vmem [thread:$0]  %s503, 1024, %s505, [#allocation13], 64, 64, 4
        $region32: #{tpu_custom_call.1} parent=11 // pred_fallthru
          _
        // Predicated region
        $region33: #{tpu_custom_call.1} parent=11 // pred_check
          %p511 = pneg %p215
        $region34: #{tpu_custom_call.1} parent=11 // pred_check_branch
          %513 = sbr.rel (%p511) target = $region36
        $region35: #{tpu_custom_call.1} parent=11 // pred_region
          _
        $region36: #{tpu_custom_call.1} parent=11 // pred_fallthru
          _
        // Predicated region
        $region37: #{tpu_custom_call.1} parent=11 // pred_check
          %p514 = pneg %p236
        $region38: #{tpu_custom_call.1} parent=11 // pred_check_branch
          %516 = sbr.rel (%p514) target = $region40
        $region39: #{tpu_custom_call.1} parent=11 // pred_region
          %518 = vsyncadd [#allocation16], 0
          %s519 = sshll.u32 %s8, 4
          %s520 = int_to_ptr.hbm [resolvable:$true] %s519
          %s521 = sshll.u32 [#allocation15], 4
          %s522 = int_to_ptr.vmem [resolvable:$true] %s521
          %527 = dma.hbm_to_vmem [thread:$0]  %s520, 2048, %s522, [#allocation16], 128, 128, 8
        $region40: #{tpu_custom_call.1} parent=11 // pred_fallthru
          _
        // Predicated region
        $region41: #{tpu_custom_call.1} parent=11 // pred_check
          %p528 = pneg %p257
        $region42: #{tpu_custom_call.1} parent=11 // pred_check_branch
          %530 = sbr.rel (%p528) target = $region44
        $region43: #{tpu_custom_call.1} parent=11 // pred_region
          _
        $region44: #{tpu_custom_call.1} parent=11 // pred_fallthru
          _
        // Predicated region
        $region45: #{tpu_custom_call.1} parent=11 // pred_check
          %p531 = pneg %p278
        $region46: #{tpu_custom_call.1} parent=11 // pred_check_branch
          %533 = sbr.rel (%p531) target = $region48
        $region47: #{tpu_custom_call.1} parent=11 // pred_region
          %535 = vsyncadd [#allocation16], 0
          %s536 = sshll.u32 %s10, 4
          %s537 = int_to_ptr.hbm [resolvable:$true] %s536
          %s538 = sshll.u32 [#allocation17], 4
          %s539 = int_to_ptr.vmem [resolvable:$true] %s538
          %544 = dma.hbm_to_vmem [thread:$0]  %s537, 1024, %s539, [#allocation16], 64, 64, 4
        $region48: #{tpu_custom_call.1} parent=11 // pred_fallthru
          _
        // Predicated region
        $region49: #{tpu_custom_call.1} parent=11 // pred_check
          %p545 = pneg %p299
        $region50: #{tpu_custom_call.1} parent=11 // pred_check_branch
          %547 = sbr.rel (%p545) target = $region52
        $region51: #{tpu_custom_call.1} parent=11 // pred_region
          _
        $region52: #{tpu_custom_call.1} parent=11 // pred_fallthru
          _
        // Predicated region
        $region53: #{tpu_custom_call.1} parent=11 // pred_check
          %p548 = pneg %p320
        $region54: #{tpu_custom_call.1} parent=11 // pred_check_branch
          %550 = sbr.rel (%p548) target = $region56
        $region55: #{tpu_custom_call.1} parent=11 // pred_region
          %552 = vsyncadd [#allocation19], 0
          %s553 = sshll.u32 %s12, 4
          %s554 = int_to_ptr.hbm [resolvable:$true] %s553
          %s555 = sshll.u32 [#allocation18], 4
          %s556 = int_to_ptr.vmem [resolvable:$true] %s555
          %561 = dma.hbm_to_vmem [thread:$0]  %s554, 2048, %s556, [#allocation19], 128, 128, 8
        $region56: #{tpu_custom_call.1} parent=11 // pred_fallthru
          _
        // Predicated region
        $region57: #{tpu_custom_call.1} parent=11 // pred_check
          %p562 = pneg %p341
        $region58: #{tpu_custom_call.1} parent=11 // pred_check_branch
          %564 = sbr.rel (%p562) target = $region60
        $region59: #{tpu_custom_call.1} parent=11 // pred_region
          _
        $region60: #{tpu_custom_call.1} parent=11 // pred_fallthru
          _
        // Predicated region
        $region61: #{tpu_custom_call.1} parent=11 // pred_check
          %p565 = pneg %p362
        $region62: #{tpu_custom_call.1} parent=11 // pred_check_branch
          %567 = sbr.rel (%p565) target = $region64
        $region63: #{tpu_custom_call.1} parent=11 // pred_region
          %569 = vsyncadd [#allocation19], 0
          %s570 = sshll.u32 %s14, 4
          %s571 = int_to_ptr.hbm [resolvable:$true] %s570
          %s572 = sshll.u32 [#allocation20], 4
          %s573 = int_to_ptr.vmem [resolvable:$true] %s572
          %578 = dma.hbm_to_vmem [thread:$0]  %s571, 2048, %s573, [#allocation19], 64, 64, 4
        $region64: #{tpu_custom_call.1} parent=11 // pred_fallthru
          _
        // Predicated region
        $region65: #{tpu_custom_call.1} parent=11 // pred_check
          %p579 = pneg %p383
        $region66: #{tpu_custom_call.1} parent=11 // pred_check_branch
          %581 = sbr.rel (%p579) target = $region68
        $region67: #{tpu_custom_call.1} parent=11 // pred_region
          _
        $region68: #{tpu_custom_call.1} parent=11 // pred_fallthru
          _
        // Predicated region
        $region69: #{tpu_custom_call.1} parent=11 // pred_check
          %p582 = pneg %p404
        $region70: #{tpu_custom_call.1} parent=11 // pred_check_branch
          %584 = sbr.rel (%p582) target = $region72
        $region71: #{tpu_custom_call.1} parent=11 // pred_region
          %586 = vsyncadd [#allocation5], 0
          %s588 = sshll.u32 %s16, 4
          %s589 = int_to_ptr.vmem [resolvable:$true] %s588
          %591 = dma.vmem_to_smem %s589, 16, [#allocation21], [#allocation5]
        $region72: #{tpu_custom_call.1} parent=11 // pred_fallthru
          _
      $region12: #{tpu_custom_call.1} parent=5 // pred_fallthru
        _
      %p592 = scmp.lt.s32.totalorder %s37, 2
      // Predicated region
      $region73: #{tpu_custom_call.1} parent=5 // pred_check
        %p593 = pneg %p592
      $region74: #{tpu_custom_call.1} parent=5 // pred_check_branch
        %595 = sbr.rel (%p593) target = $region76
      $region75: #{tpu_custom_call.1} parent=5 // pred_region
        // Predicated region
        $region77: #{tpu_custom_call.1} parent=75 // pred_check
          %p596 = pneg %p57
        $region78: #{tpu_custom_call.1} parent=75 // pred_check_branch
          %598 = sbr.rel (%p596) target = $region80
        $region79: #{tpu_custom_call.1} parent=75 // pred_region
          %s599 = sand.u32 %s47, 1
          %s600 = scalar_lea.sflag [#allocation3], %s599
          %s601 = sand.u32 %s47, 1
          %s602 = smul.addr %s601, 16
          %s603 = scalar_lea.vmem [#allocation2], %s602
          %605 = vsyncadd %s600, 0
          %s606 = smul.addr %s37, 2
          %s607 = smul.addr %s606, 8
          %s608 = scalar_lea.hbm %s0, %s607
          %s609 = sshll.u32 %s608, 4
          %s610 = int_to_ptr.hbm [resolvable:$true] %s609
          %s611 = sshll.u32 %s603, 4
          %s612 = int_to_ptr.vmem [resolvable:$true] %s611
          %617 = dma.hbm_to_vmem [thread:$0]  %s610, 256, %s612, %s600, 128, 128, 8
        $region80: #{tpu_custom_call.1} parent=75 // pred_fallthru
          _
        // Predicated region
        $region81: #{tpu_custom_call.1} parent=75 // pred_check
          %p618 = pneg %p83
        $region82: #{tpu_custom_call.1} parent=75 // pred_check_branch
          %620 = sbr.rel (%p618) target = $region84
        $region83: #{tpu_custom_call.1} parent=75 // pred_region
          %s621 = sand.u32 %s37, 1
          %s622 = scalar_lea.sflag [#allocation7], %s621
          %s623 = sand.u32 %s73, 1
          %s624 = smul.addr %s623, 32
          %s625 = scalar_lea.vmem [#allocation6], %s624
          %627 = vsyncadd %s622, 0
          %s628 = smul.addr %s37, 4
          %s629 = smul.addr %s628, 8
          %s630 = scalar_lea.hbm %s1, %s629
          %s631 = sshll.u32 %s630, 4
          %s632 = int_to_ptr.hbm [resolvable:$true] %s631
          %s633 = sshll.u32 %s625, 4
          %s634 = int_to_ptr.vmem [resolvable:$true] %s633
          %639 = dma.hbm_to_vmem [thread:$0]  %s632, 512, %s634, %s622, 128, 128, 8
        $region84: #{tpu_custom_call.1} parent=75 // pred_fallthru
          _
      $region76: #{tpu_custom_call.1} parent=5 // pred_fallthru
        _
      %p640 = scmp.le.s32.totalorder 1, %s37
      %p641 = scmp.lt.s32.totalorder %s37, 3
      %p642 = pnand %p640, %p641
      %p643 = pneg %p642
      // Predicated region
      $region85: #{tpu_custom_call.1} parent=5 // pred_check
        _
      $region86: #{tpu_custom_call.1} parent=5 // pred_check_branch
        %645 = sbr.rel (%p642) target = $region88
      $region87: #{tpu_custom_call.1} parent=5 // pred_region
        %s646 = ssub.s32 %s37, 1
        %s647 = sand.u32 %s50, 1
        %s648 = scalar_lea.sflag [#allocation3], %s647
        %s649 = sand.u32 %s50, 1
        %s650 = smul.addr %s649, 16
        %s651 = scalar_lea.vmem [#allocation2], %s650
        // Predicated region
        $region89: #{tpu_custom_call.1} parent=87 // pred_check
          %p652 = pneg %p63
        $region90: #{tpu_custom_call.1} parent=87 // pred_check_branch
          %654 = sbr.rel (%p652) target = $region92
        $region91: #{tpu_custom_call.1} parent=87 // pred_region
          %656 = dma.done %s648, 256
        $region92: #{tpu_custom_call.1} parent=87 // pred_fallthru
          _
        %s657 = sand.u32 %s42, 1
        %s658 = scalar_lea.sflag [#allocation7], %s657
        %s659 = sand.u32 %s76, 1
        %s660 = smul.addr %s659, 32
        %s661 = scalar_lea.vmem [#allocation6], %s660
        // Predicated region
        $region93: #{tpu_custom_call.1} parent=87 // pred_check
          %p662 = pneg %p89
        $region94: #{tpu_custom_call.1} parent=87 // pred_check_branch
          %664 = sbr.rel (%p662) target = $region96
        $region95: #{tpu_custom_call.1} parent=87 // pred_region
          %666 = dma.done %s658, 512
        $region96: #{tpu_custom_call.1} parent=87 // pred_fallthru
          _
        // Predicated region
        $region97: #{tpu_custom_call.1} parent=87 // pred_check
          %p667 = pneg %p110
        $region98: #{tpu_custom_call.1} parent=87 // pred_check_branch
          %669 = sbr.rel (%p667) target = $region100
        $region99: #{tpu_custom_call.1} parent=87 // pred_region
          %671 = dma.done [#allocation7], 3072
        $region100: #{tpu_custom_call.1} parent=87 // pred_fallthru
          _
        // Predicated region
        $region101: #{tpu_custom_call.1} parent=87 // pred_check
          %p672 = pneg %p131
        $region102: #{tpu_custom_call.1} parent=87 // pred_check_branch
          %674 = sbr.rel (%p672) target = $region104
        $region103: #{tpu_custom_call.1} parent=87 // pred_region
          %676 = dma.done [#allocation10], 48
        $region104: #{tpu_custom_call.1} parent=87 // pred_fallthru
          _
        // Predicated region
        $region105: #{tpu_custom_call.1} parent=87 // pred_check
          %p677 = pneg %p152
        $region106: #{tpu_custom_call.1} parent=87 // pred_check_branch
          %679 = sbr.rel (%p677) target = $region108
        $region107: #{tpu_custom_call.1} parent=87 // pred_region
          %681 = dma.done [#allocation10], 1024
        $region108: #{tpu_custom_call.1} parent=87 // pred_fallthru
          _
        // Predicated region
        $region109: #{tpu_custom_call.1} parent=87 // pred_check
          %p682 = pneg %p173
        $region110: #{tpu_custom_call.1} parent=87 // pred_check_branch
          %684 = sbr.rel (%p682) target = $region112
        $region111: #{tpu_custom_call.1} parent=87 // pred_region
          %686 = dma.done [#allocation13], 16
        $region112: #{tpu_custom_call.1} parent=87 // pred_fallthru
          _
        // Predicated region
        $region113: #{tpu_custom_call.1} parent=87 // pred_check
          %p687 = pneg %p194
        $region114: #{tpu_custom_call.1} parent=87 // pred_check_branch
          %689 = sbr.rel (%p687) target = $region116
        $region115: #{tpu_custom_call.1} parent=87 // pred_region
          %691 = dma.done [#allocation13], 1024
        $region116: #{tpu_custom_call.1} parent=87 // pred_fallthru
          _
        // Predicated region
        $region117: #{tpu_custom_call.1} parent=87 // pred_check
          %p692 = pneg %p236
        $region118: #{tpu_custom_call.1} parent=87 // pred_check_branch
          %694 = sbr.rel (%p692) target = $region120
        $region119: #{tpu_custom_call.1} parent=87 // pred_region
          %696 = dma.done [#allocation16], 2048
        $region120: #{tpu_custom_call.1} parent=87 // pred_fallthru
          _
        // Predicated region
        $region121: #{tpu_custom_call.1} parent=87 // pred_check
          %p697 = pneg %p278
        $region122: #{tpu_custom_call.1} parent=87 // pred_check_branch
          %699 = sbr.rel (%p697) target = $region124
        $region123: #{tpu_custom_call.1} parent=87 // pred_region
          %701 = dma.done [#allocation16], 1024
        $region124: #{tpu_custom_call.1} parent=87 // pred_fallthru
          _
        // Predicated region
        $region125: #{tpu_custom_call.1} parent=87 // pred_check
          %p702 = pneg %p320
        $region126: #{tpu_custom_call.1} parent=87 // pred_check_branch
          %704 = sbr.rel (%p702) target = $region128
        $region127: #{tpu_custom_call.1} parent=87 // pred_region
          %706 = dma.done [#allocation19], 2048
        $region128: #{tpu_custom_call.1} parent=87 // pred_fallthru
          _
        // Predicated region
        $region129: #{tpu_custom_call.1} parent=87 // pred_check
          %p707 = pneg %p362
        $region130: #{tpu_custom_call.1} parent=87 // pred_check_branch
          %709 = sbr.rel (%p707) target = $region132
        $region131: #{tpu_custom_call.1} parent=87 // pred_region
          %711 = dma.done [#allocation19], 2048
        $region132: #{tpu_custom_call.1} parent=87 // pred_fallthru
          _
        // Predicated region
        $region133: #{tpu_custom_call.1} parent=87 // pred_check
          %p712 = pneg %p404
        $region134: #{tpu_custom_call.1} parent=87 // pred_check_branch
          %714 = sbr.rel (%p712) target = $region136
        $region135: #{tpu_custom_call.1} parent=87 // pred_region
          %716 = dma.done [#allocation5], 16
        $region136: #{tpu_custom_call.1} parent=87 // pred_fallthru
          _
        %717 = sfence
        %s718 = sand.u32 %s50, 1
        %s719 = scalar_lea.sflag [#allocation3], %s718
        %s720 = sand.u32 %s50, 1
        %s721 = smul.addr %s720, 16
        %s722 = scalar_lea.vmem [#allocation2], %s721
        %p723 = pneg %p63
        %p724 = pneg %p60
        %s725 = sand.u32 %s42, 1
        %s726 = scalar_lea.sflag [#allocation7], %s725
        %s727 = sand.u32 %s76, 1
        %s728 = smul.addr %s727, 32
        %s729 = scalar_lea.vmem [#allocation6], %s728
        %p730 = pneg %p89
        %p731 = pneg %p86
        %p732 = pneg %p110
        %p733 = pneg %p107
        %p734 = pneg %p131
        %p735 = pneg %p128
        %p736 = pneg %p152
        %p737 = pneg %p149
        %p738 = pneg %p173
        %p739 = pneg %p170
        %p740 = pneg %p194
        %p741 = pneg %p191
        %p742 = pneg %p215
        %p743 = pneg %p212
        %p744 = pneg %p236
        %p745 = pneg %p233
        %p746 = pneg %p257
        %p747 = pneg %p254
        %p748 = pneg %p278
        %p749 = pneg %p275
        %p750 = pneg %p299
        %p751 = pneg %p296
        %p752 = pneg %p320
        %p753 = pneg %p317
        %p754 = pneg %p341
        %p755 = pneg %p338
        %p756 = pneg %p362
        %p757 = pneg %p359
        %p758 = pneg %p383
        %p759 = pneg %p380
        %p760 = pneg %p404
        %p761 = pneg %p401
        %p762 = pneg %p430
        %p763 = pneg %p427
        %s764 = sand.u32 %s417, 1
        %s765 = scalar_lea.sflag [#allocation4], %s764
        %s766 = sand.u32 %s417, 1
        %s767 = smul.addr %s766, 16
        %s768 = scalar_lea.vmem [#allocation22], %s767
        %v770 = vld [vmem:[%s651] sm:$0xff]
        %v771 = vld [vmem:[%s651 + $0x8] sm:$0xff]
        %v772 = vld [vmem:[%s661] sm:$0xff]
        %v773 = vld [vmem:[%s661 + $0x8] sm:$0xff]
        %v774 = vld [vmem:[%s661 + $0x10] sm:$0xff]
        %v775 = vld [vmem:[%s661 + $0x18] sm:$0xff]
        %s776 = sld [smem:[#allocation21]]
        %s777 = sld [smem:[#allocation21 + $0x1]]
        %778 = vadd.xlane.f32.xlu0 %v770
        %v779 = vpop.xlane.xlu0 %778
        %780 = vadd.xlane.f32.xlu0 %v771
        %v781 = vpop.xlane.xlu0 %780
        %v782 = vrcp.pop 128.0
        %v783 = vmul.f32 128.0, %v782
        %v784 = vsub.f32 1.0, %v783
        %v785 = vmul.f32 %v782, %v784
        %v786 = vadd.f32 %v782, %v785
        %vm787 = vweird.f32 %v782
        %v788 = vsel %vm787, %v782, %v786
        %v789 = vmul.f32 %v779, %v788
        %v790 = vmul.f32 %v781, %v788
        %v791 = vsub.f32 %v770, %v789
        %v792 = vsub.f32 %v771, %v790
        %v793 = vmul.f32 %v791, %v791
        %v794 = vmul.f32 %v792, %v792
        %795 = vadd.xlane.f32.xlu0 %v793
        %v796 = vpop.xlane.xlu0 %795
        %797 = vadd.xlane.f32.xlu0 %v794
        %v798 = vpop.xlane.xlu0 %797
        %v799 = vmul.f32 %v796, 0.007874016
        %v800 = vmul.f32 %v798, 0.007874016
        %v801 = vrsqrt.pop %v799
        %v802 = vmul.f32 %v801, %v799
        %v803 = vmul.f32 %v802, %v801
        %v804 = vmul.f32 0.5, %v803
        %v805 = vsub.f32 1.5, %v804
        %v806 = vmul.f32 %v801, %v805
        %v807 = vmul.f32 %v799, %v806
        %vm808 = vcmp.eq.f32.partialorder %v799, inf
        %v809 = vsel %vm808, %v799, %v807
        %vm810 = vcmp.eq.f32.partialorder %v799, 0.0
        %v811 = vand.u32 %v799, 2147483648
        %v812 = vsel %vm810, %v811, %v809
        %v813 = vrsqrt.pop %v800
        %v814 = vmul.f32 %v813, %v800
        %v815 = vmul.f32 %v814, %v813
        %v816 = vmul.f32 0.5, %v815
        %v817 = vsub.f32 1.5, %v816
        %v818 = vmul.f32 %v813, %v817
        %v819 = vmul.f32 %v800, %v818
        %vm820 = vcmp.eq.f32.partialorder %v800, inf
        %v821 = vsel %vm820, %v800, %v819
        %vm822 = vcmp.eq.f32.partialorder %v800, 0.0
        %v823 = vand.u32 %v800, 2147483648
        %v824 = vsel %vm822, %v823, %v821
        %v825 = vadd.f32 %v812, 1e-06
        %v826 = vadd.f32 %v824, 1e-06
        %v827 = vrcp.pop %v825
        %v828 = vrcp.pop %v826
        %v829 = vmul.f32 %v791, %v827
        %v830 = vmul.f32 %v792, %v828
        %v831 = vstv %s776
        %v832 = vmul.f32 %v831, %v829
        %v833 = vmul.f32 %v831, %v830
        %v834 = vstv %s777
        %v835 = vadd.f32 %v832, %v834
        %v836 = vadd.f32 %v833, %v834
        %v837 = vpack.c.bf16 %v836, %v835
        %v838 = vld [vmem:[#allocation8] sm:$0xff]
        %v839 = vld [vmem:[#allocation8 + $0x8] sm:$0xf]
        %v840 = vld [vmem:[#allocation8 + $0xc] sm:$0xff]
        %v841 = vld [vmem:[#allocation8 + $0x14] sm:$0xf]
        %v842 = vld [vmem:[#allocation8 + $0x18] sm:$0xff]
        %v843 = vld [vmem:[#allocation8 + $0x20] sm:$0xf]
        %v844 = vld [vmem:[#allocation8 + $0x24] sm:$0xff]
        %v845 = vld [vmem:[#allocation8 + $0x2c] sm:$0xf]
        %v846 = vld [vmem:[#allocation8 + $0x30] sm:$0xff]
        %v847 = vld [vmem:[#allocation8 + $0x38] sm:$0xf]
        %v848 = vld [vmem:[#allocation8 + $0x3c] sm:$0xff]
        %v849 = vld [vmem:[#allocation8 + $0x44] sm:$0xf]
        %v850 = vld [vmem:[#allocation8 + $0x48] sm:$0xff]
        %v851 = vld [vmem:[#allocation8 + $0x50] sm:$0xf]
        %v852 = vld [vmem:[#allocation8 + $0x54] sm:$0xff]
        %v853 = vld [vmem:[#allocation8 + $0x5c] sm:$0xf]
        %v854 = vld [vmem:[#allocation8 + $0x60] sm:$0xff]
        %v855 = vld [vmem:[#allocation8 + $0x68] sm:$0xf]
        %v856 = vld [vmem:[#allocation8 + $0x6c] sm:$0xff]
        %v857 = vld [vmem:[#allocation8 + $0x74] sm:$0xf]
        %v858 = vld [vmem:[#allocation8 + $0x78] sm:$0xff]
        %v859 = vld [vmem:[#allocation8 + $0x80] sm:$0xf]
        %v860 = vld [vmem:[#allocation8 + $0x84] sm:$0xff]
        %v861 = vld [vmem:[#allocation8 + $0x8c] sm:$0xf]
        %v862 = vld [vmem:[#allocation8 + $0x90] sm:$0xff]
        %v863 = vld [vmem:[#allocation8 + $0x98] sm:$0xf]
        %v864 = vld [vmem:[#allocation8 + $0x9c] sm:$0xff]
        %v865 = vld [vmem:[#allocation8 + $0xa4] sm:$0xf]
        %v866 = vld [vmem:[#allocation8 + $0xa8] sm:$0xff]
        %v867 = vld [vmem:[#allocation8 + $0xb0] sm:$0xf]
        %v868 = vld [vmem:[#allocation8 + $0xb4] sm:$0xff]
        %v869 = vld [vmem:[#allocation8 + $0xbc] sm:$0xf]
        %v870 = vld [vmem:[#allocation9] sm:$0x7]
        %v872 = vperm.slane %v870, 0
        %v873 = vperm.slane %v870, 1
        %v874 = vperm.slane %v870, 2
        %v910 = vunpack.c.l.b16 %v838
        %v911 = vunpack.c.h.b16 %v838
        %v912 = vunpack.c.l.b16 %v839
        %v913 = vunpack.c.l.b16 %v840
        %v914 = vunpack.c.h.b16 %v840
        %v915 = vunpack.c.l.b16 %v841
        %v916 = vunpack.c.l.b16 %v842
        %v917 = vunpack.c.h.b16 %v842
        %v918 = vunpack.c.l.b16 %v843
        %v919 = vunpack.c.l.b16 %v844
        %v920 = vunpack.c.h.b16 %v844
        %v921 = vunpack.c.l.b16 %v845
        %v922 = vunpack.c.l.b16 %v846
        %v923 = vunpack.c.h.b16 %v846
        %v924 = vunpack.c.l.b16 %v847
        %v925 = vunpack.c.l.b16 %v848
        %v926 = vunpack.c.h.b16 %v848
        %v927 = vunpack.c.l.b16 %v849
        %v928 = vunpack.c.l.b16 %v850
        %v929 = vunpack.c.h.b16 %v850
        %v930 = vunpack.c.l.b16 %v851
        %v931 = vunpack.c.l.b16 %v852
        %v932 = vunpack.c.h.b16 %v852
        %v933 = vunpack.c.l.b16 %v853
        %v934 = vunpack.c.l.b16 %v854
        %v935 = vunpack.c.h.b16 %v854
        %v936 = vunpack.c.l.b16 %v855
        %v937 = vunpack.c.l.b16 %v856
        %v938 = vunpack.c.h.b16 %v856
        %v939 = vunpack.c.l.b16 %v857
        %v940 = vunpack.c.l.b16 %v858
        %v941 = vunpack.c.h.b16 %v858
        %v942 = vunpack.c.l.b16 %v859
        %v943 = vunpack.c.l.b16 %v860
        %v944 = vunpack.c.h.b16 %v860
        %v945 = vunpack.c.l.b16 %v861
        %v946 = vunpack.c.l.b16 %v862
        %v947 = vunpack.c.h.b16 %v862
        %v948 = vunpack.c.l.b16 %v863
        %v949 = vunpack.c.l.b16 %v864
        %v950 = vunpack.c.h.b16 %v864
        %v951 = vunpack.c.l.b16 %v865
        %v952 = vunpack.c.l.b16 %v866
        %v953 = vunpack.c.h.b16 %v866
        %v954 = vunpack.c.l.b16 %v867
        %v955 = vunpack.c.l.b16 %v868
        %v956 = vunpack.c.h.b16 %v868
        %v957 = vunpack.c.l.b16 %v869
        %v958 = vpack.c.b16 %v913, %v910
        %v959 = vpack.c.b16 %v914, %v911
        %v960 = vpack.c.b16 %v915, %v912
        %v961 = vpack.c.b16 %v919, %v916
        %v962 = vpack.c.b16 %v920, %v917
        %v963 = vpack.c.b16 %v921, %v918
        %v964 = vpack.c.b16 %v925, %v922
        %v965 = vpack.c.b16 %v926, %v923
        %v966 = vpack.c.b16 %v927, %v924
        %v967 = vpack.c.b16 %v931, %v928
        %v968 = vpack.c.b16 %v932, %v929
        %v969 = vpack.c.b16 %v933, %v930
        %v970 = vpack.c.b16 %v937, %v934
        %v971 = vpack.c.b16 %v938, %v935
        %v972 = vpack.c.b16 %v939, %v936
        %v973 = vpack.c.b16 %v943, %v940
        %v974 = vpack.c.b16 %v944, %v941
        %v975 = vpack.c.b16 %v945, %v942
        %v976 = vpack.c.b16 %v949, %v946
        %v977 = vpack.c.b16 %v950, %v947
        %v978 = vpack.c.b16 %v951, %v948
        %v979 = vpack.c.b16 %v955, %v952
        %v980 = vpack.c.b16 %v956, %v953
        %v981 = vpack.c.b16 %v957, %v954
        %1006 = vmatpush.bf16.msra.mxu0 %v979
        %1007 = vmatpush.bf16.msra.mxu0 %v976
        %1008 = vmatpush.bf16.msra.mxu0 %v973
        %1009 = vmatpush.bf16.msra.mxu0 %v970
        %1010 = vmatpush.bf16.msra.mxu0 %v967
        %1011 = vmatpush.bf16.msra.mxu0 %v964
        %1012 = vmatpush.bf16.msra.mxu0 %v961
        %1013 = vmatpush.bf16.msra.mxu0 %v958
        %1014 = vmatmul.bf16.gmra.mxu0 %v837
        %v1015 = vpop.f32.mrf.mxu0
        %v1016 = vadd.f32 %v872, %v1015
        %v1017 = vpop.f32.mrf.mxu0
        %v1018 = vadd.f32 %v872, %v1017
        %1019 = vdwg.mxu0
        %1020 = vmatpush.bf16.msra.mxu0 %v980
        %1021 = vmatpush.bf16.msra.mxu0 %v977
        %1022 = vmatpush.bf16.msra.mxu0 %v974
        %1023 = vmatpush.bf16.msra.mxu0 %v971
        %1024 = vmatpush.bf16.msra.mxu0 %v968
        %1025 = vmatpush.bf16.msra.mxu0 %v965
        %1026 = vmatpush.bf16.msra.mxu0 %v962
        %1027 = vmatpush.bf16.msra.mxu0 %v959
        %1028 = vmatmul.bf16.gmra.mxu0 %v837
        %v1029 = vpop.f32.mrf.mxu0
        %v1030 = vadd.f32 %v873, %v1029
        %v1031 = vpop.f32.mrf.mxu0
        %v1032 = vadd.f32 %v873, %v1031
        %1033 = vdwg.mxu0
        %1034 = vmatpush.bf16.msra.mxu0 %v981
        %1035 = vmatpush.bf16.msra.mxu0 %v978
        %1036 = vmatpush.bf16.msra.mxu0 %v975
        %1037 = vmatpush.bf16.msra.mxu0 %v972
        %1038 = vmatpush.bf16.msra.mxu0 %v969
        %1039 = vmatpush.bf16.msra.mxu0 %v966
        %1040 = vmatpush.bf16.msra.mxu0 %v963
        %1041 = vmatpush.bf16.msra.mxu0 %v960
        %1042 = vmatmul.bf16.gmra.mxu0 %v837
        %v1043 = vpop.f32.mrf.mxu0
        %v1044 = vadd.f32 %v874, %v1043
        %v1045 = vpop.f32.mrf.mxu0
        %v1046 = vadd.f32 %v874, %v1045
        %1047 = vdwg.mxu0
        %v1048 = vpack.c.bf16 %v1018, %v1016
        %v1049 = vpack.c.bf16 %v1032, %v1030
        %vm1050 = vcmask 261120
        %v1052 = vsel %vm1050, %v1048, 0
        %v1055 = vsel %vm1050, %v1049, 0
        %1057 = vmatpush.bf16.xpose.msra.mxu0 0
        %1058 = vmatpush.bf16.xpose.msra.mxu0 0
        %1059 = vmatpush.bf16.xpose.msra.mxu0 0
        %1060 = vmatpush.bf16.xpose.msra.mxu0 0
        %1061 = vmatpush.bf16.xpose.msra.mxu0 0
        %1062 = vmatpush.bf16.xpose.msra.mxu0 0
        %1063 = vmatpush.bf16.xpose.msra.mxu0 0
        %1064 = vmatpush.bf16.xpose.msra.mxu0 %v1055
        %1065 = vmatmul.bf16.gmra.mxu0 %v1052
        %v1066 = vpop.f32.mrf.mxu0
        %v1067 = vadd.f32 0.0, %v1066
        %v1068 = vpop.f32.mrf.mxu0
        %v1069 = vadd.f32 0.0, %v1068
        %1070 = vdwg.mxu0
        %v1071 = vmul.f32 %v1067, 0.17677669
        %v1072 = vmul.f32 %v1069, 0.17677669
        %vm1073 = vcmask 130048
        %v1074 = vsel %vm1073, %v1071, -inf
        %1075 = vmax.xlane.f32.xlu0 %v1074
        %v1076 = vpop.xlane.xlu0 %1075
        %v1077 = vsel %vm1073, %v1072, -inf
        %1078 = vmax.xlane.f32.xlu0 %v1077
        %v1079 = vpop.xlane.xlu0 %1078
        %v1080 = vsub.f32 %v1071, %v1076
        %v1081 = vsub.f32 %v1072, %v1079
        %v1082 = vmul.f32 %v1080, 1.442695
        %v1083 = vpow.pop %v1082
        %v1084 = vmul.f32 %v1081, 1.442695
        %v1085 = vpow.pop %v1084
        %v1086 = vsel %vm1073, %v1083, 0.0
        %1087 = vadd.xlane.f32.xlu0 %v1086
        %v1088 = vpop.xlane.xlu0 %1087
        %v1089 = vsel %vm1073, %v1085, 0.0
        %1090 = vadd.xlane.f32.xlu0 %v1089
        %v1091 = vpop.xlane.xlu0 %1090
        %v1092 = vrcp.pop %v1088
        %v1093 = vrcp.pop %v1091
        %v1094 = vmul.f32 %v1083, %v1092
        %v1095 = vmul.f32 %v1085, %v1093
        %v1097 = vsel %vm1073, %v1094, 0
        %v1100 = vsel %vm1073, %v1095, 0
        %1102 = vmatpush.msra.mxu0 0.0
        %1103 = vmatpush.msra.mxu0 0.0
        %1104 = vmatpush.msra.mxu0 0.0
        %1105 = vmatpush.msra.mxu0 0.0
        %1106 = vmatpush.msra.mxu0 0.0
        %1107 = vmatpush.msra.mxu0 0.0
        %1108 = vmatpush.msra.mxu0 0.0
        %1109 = vmatpush.msra.mxu0 0.0
        %1110 = vmatpush.msra.mxu0 0.0
        %1111 = vmatpush.msra.mxu0 0.0
        %1112 = vmatpush.msra.mxu0 0.0
        %1113 = vmatpush.msra.mxu0 0.0
        %1114 = vmatpush.msra.mxu0 0.0
        %1115 = vmatpush.msra.mxu0 0.0
        %1116 = vmatpush.msra.mxu0 %v1046
        %1117 = vmatpush.msra.mxu0 %v1044
        %1118 = vmatmul.f32.gmra.mxu0 %v1097
        %v1119 = vpop.f32.mrf.mxu0
        %v1120 = vadd.f32 0.0, %v1119
        %1121 = vmatmul.f32.gmra.mxu0 %v1100
        %v1122 = vpop.f32.mrf.mxu0
        %v1123 = vadd.f32 0.0, %v1122
        %1124 = vdwg.mxu0
        %1126 = vrot.lane.b32.xlu0 %v1048, 96
        %v1127 = vpop.permute.xlu0 %1126
        %1129 = vrot.lane.b32.xlu0 %v1049, 96
        %v1130 = vpop.permute.xlu0 %1129
        %v1132 = vsel %vm1050, %v1127, 0
        %v1135 = vsel %vm1050, %v1130, 0
        %1137 = vmatpush.bf16.xpose.msra.mxu0 0
        %1138 = vmatpush.bf16.xpose.msra.mxu0 0
        %1139 = vmatpush.bf16.xpose.msra.mxu0 0
        %1140 = vmatpush.bf16.xpose.msra.mxu0 0
        %1141 = vmatpush.bf16.xpose.msra.mxu0 0
        %1142 = vmatpush.bf16.xpose.msra.mxu0 0
        %1143 = vmatpush.bf16.xpose.msra.mxu0 0
        %1144 = vmatpush.bf16.xpose.msra.mxu0 %v1135
        %1145 = vmatmul.bf16.gmra.mxu0 %v1132
        %v1146 = vpop.f32.mrf.mxu0
        %v1147 = vadd.f32 0.0, %v1146
        %v1148 = vpop.f32.mrf.mxu0
        %v1149 = vadd.f32 0.0, %v1148
        %1150 = vdwg.mxu0
        %v1151 = vmul.f32 %v1147, 0.17677669
        %v1152 = vmul.f32 %v1149, 0.17677669
        %v1153 = vsel %vm1073, %v1151, -inf
        %1154 = vmax.xlane.f32.xlu0 %v1153
        %v1155 = vpop.xlane.xlu0 %1154
        %v1156 = vsel %vm1073, %v1152, -inf
        %1157 = vmax.xlane.f32.xlu0 %v1156
        %v1158 = vpop.xlane.xlu0 %1157
        %v1159 = vsub.f32 %v1151, %v1155
        %v1160 = vsub.f32 %v1152, %v1158
        %v1161 = vmul.f32 %v1159, 1.442695
        %v1162 = vpow.pop %v1161
        %v1163 = vmul.f32 %v1160, 1.442695
        %v1164 = vpow.pop %v1163
        %v1165 = vsel %vm1073, %v1162, 0.0
        %1166 = vadd.xlane.f32.xlu0 %v1165
        %v1167 = vpop.xlane.xlu0 %1166
        %v1168 = vsel %vm1073, %v1164, 0.0
        %1169 = vadd.xlane.f32.xlu0 %v1168
        %v1170 = vpop.xlane.xlu0 %1169
        %v1171 = vrcp.pop %v1167
        %v1172 = vrcp.pop %v1170
        %v1173 = vmul.f32 %v1162, %v1171
        %v1174 = vmul.f32 %v1164, %v1172
        %1177 = vrot.lane.b32.xlu0 %v1044, 96
        %v1178 = vpop.permute.xlu0 %1177
        %1179 = vrot.lane.b32.xlu0 %v1046, 96
        %v1180 = vpop.permute.xlu0 %1179
        %v1184 = vsel %vm1073, %v1173, 0
        %v1187 = vsel %vm1073, %v1174, 0
        %1189 = vmatpush.msra.mxu0 0.0
        %1190 = vmatpush.msra.mxu0 0.0
        %1191 = vmatpush.msra.mxu0 0.0
        %1192 = vmatpush.msra.mxu0 0.0
        %1193 = vmatpush.msra.mxu0 0.0
        %1194 = vmatpush.msra.mxu0 0.0
        %1195 = vmatpush.msra.mxu0 0.0
        %1196 = vmatpush.msra.mxu0 0.0
        %1197 = vmatpush.msra.mxu0 0.0
        %1198 = vmatpush.msra.mxu0 0.0
        %1199 = vmatpush.msra.mxu0 0.0
        %1200 = vmatpush.msra.mxu0 0.0
        %1201 = vmatpush.msra.mxu0 0.0
        %1202 = vmatpush.msra.mxu0 0.0
        %1203 = vmatpush.msra.mxu0 %v1180
        %1204 = vmatpush.msra.mxu0 %v1178
        %1205 = vmatmul.f32.gmra.mxu0 %v1184
        %v1206 = vpop.f32.mrf.mxu0
        %v1207 = vadd.f32 0.0, %v1206
        %1208 = vmatmul.f32.gmra.mxu0 %v1187
        %v1209 = vpop.f32.mrf.mxu0
        %v1210 = vadd.f32 0.0, %v1209
        %1211 = vdwg.mxu0
        %1212 = vrot.lane.b32.xlu0 %v1048, 64
        %v1213 = vpop.permute.xlu0 %1212
        %1214 = vrot.lane.b32.xlu0 %v1049, 64
        %v1215 = vpop.permute.xlu0 %1214
        %v1217 = vsel %vm1050, %v1213, 0
        %v1220 = vsel %vm1050, %v1215, 0
        %1222 = vmatpush.bf16.xpose.msra.mxu0 0
        %1223 = vmatpush.bf16.xpose.msra.mxu0 0
        %1224 = vmatpush.bf16.xpose.msra.mxu0 0
        %1225 = vmatpush.bf16.xpose.msra.mxu0 0
        %1226 = vmatpush.bf16.xpose.msra.mxu0 0
        %1227 = vmatpush.bf16.xpose.msra.mxu0 0
        %1228 = vmatpush.bf16.xpose.msra.mxu0 0
        %1229 = vmatpush.bf16.xpose.msra.mxu0 %v1220
        %1230 = vmatmul.bf16.gmra.mxu0 %v1217
        %v1231 = vpop.f32.mrf.mxu0
        %v1232 = vadd.f32 0.0, %v1231
        %v1233 = vpop.f32.mrf.mxu0
        %v1234 = vadd.f32 0.0, %v1233
        %1235 = vdwg.mxu0
        %v1236 = vmul.f32 %v1232, 0.17677669
        %v1237 = vmul.f32 %v1234, 0.17677669
        %v1238 = vsel %vm1073, %v1236, -inf
        %1239 = vmax.xlane.f32.xlu0 %v1238
        %v1240 = vpop.xlane.xlu0 %1239
        %v1241 = vsel %vm1073, %v1237, -inf
        %1242 = vmax.xlane.f32.xlu0 %v1241
        %v1243 = vpop.xlane.xlu0 %1242
        %v1244 = vsub.f32 %v1236, %v1240
        %v1245 = vsub.f32 %v1237, %v1243
        %v1246 = vmul.f32 %v1244, 1.442695
        %v1247 = vpow.pop %v1246
        %v1248 = vmul.f32 %v1245, 1.442695
        %v1249 = vpow.pop %v1248
        %v1250 = vsel %vm1073, %v1247, 0.0
        %1251 = vadd.xlane.f32.xlu0 %v1250
        %v1252 = vpop.xlane.xlu0 %1251
        %v1253 = vsel %vm1073, %v1249, 0.0
        %1254 = vadd.xlane.f32.xlu0 %v1253
        %v1255 = vpop.xlane.xlu0 %1254
        %v1256 = vrcp.pop %v1252
        %v1257 = vrcp.pop %v1255
        %v1258 = vmul.f32 %v1247, %v1256
        %v1259 = vmul.f32 %v1249, %v1257
        %1260 = vrot.lane.b32.xlu0 %v1044, 64
        %v1261 = vpop.permute.xlu0 %1260
        %1262 = vrot.lane.b32.xlu0 %v1046, 64
        %v1263 = vpop.permute.xlu0 %1262
        %v1267 = vsel %vm1073, %v1258, 0
        %v1270 = vsel %vm1073, %v1259, 0
        %1272 = vmatpush.msra.mxu0 0.0
        %1273 = vmatpush.msra.mxu0 0.0
        %1274 = vmatpush.msra.mxu0 0.0
        %1275 = vmatpush.msra.mxu0 0.0
        %1276 = vmatpush.msra.mxu0 0.0
        %1277 = vmatpush.msra.mxu0 0.0
        %1278 = vmatpush.msra.mxu0 0.0
        %1279 = vmatpush.msra.mxu0 0.0
        %1280 = vmatpush.msra.mxu0 0.0
        %1281 = vmatpush.msra.mxu0 0.0
        %1282 = vmatpush.msra.mxu0 0.0
        %1283 = vmatpush.msra.mxu0 0.0
        %1284 = vmatpush.msra.mxu0 0.0
        %1285 = vmatpush.msra.mxu0 0.0
        %1286 = vmatpush.msra.mxu0 %v1263
        %1287 = vmatpush.msra.mxu0 %v1261
        %1288 = vmatmul.f32.gmra.mxu0 %v1267
        %v1289 = vpop.f32.mrf.mxu0
        %v1290 = vadd.f32 0.0, %v1289
        %1291 = vmatmul.f32.gmra.mxu0 %v1270
        %v1292 = vpop.f32.mrf.mxu0
        %v1293 = vadd.f32 0.0, %v1292
        %1294 = vdwg.mxu0
        %1295 = vrot.lane.b32.xlu0 %v1048, 32
        %v1296 = vpop.permute.xlu0 %1295
        %1297 = vrot.lane.b32.xlu0 %v1049, 32
        %v1298 = vpop.permute.xlu0 %1297
        %v1300 = vsel %vm1050, %v1296, 0
        %v1303 = vsel %vm1050, %v1298, 0
        %1305 = vmatpush.bf16.xpose.msra.mxu0 0
        %1306 = vmatpush.bf16.xpose.msra.mxu0 0
        %1307 = vmatpush.bf16.xpose.msra.mxu0 0
        %1308 = vmatpush.bf16.xpose.msra.mxu0 0
        %1309 = vmatpush.bf16.xpose.msra.mxu0 0
        %1310 = vmatpush.bf16.xpose.msra.mxu0 0
        %1311 = vmatpush.bf16.xpose.msra.mxu0 0
        %1312 = vmatpush.bf16.xpose.msra.mxu0 %v1303
        %1313 = vmatmul.bf16.gmra.mxu0 %v1300
        %v1314 = vpop.f32.mrf.mxu0
        %v1315 = vadd.f32 0.0, %v1314
        %v1316 = vpop.f32.mrf.mxu0
        %v1317 = vadd.f32 0.0, %v1316
        %1318 = vdwg.mxu0
        %v1319 = vmul.f32 %v1315, 0.17677669
        %v1320 = vmul.f32 %v1317, 0.17677669
        %v1321 = vsel %vm1073, %v1319, -inf
        %1322 = vmax.xlane.f32.xlu0 %v1321
        %v1323 = vpop.xlane.xlu0 %1322
        %v1324 = vsel %vm1073, %v1320, -inf
        %1325 = vmax.xlane.f32.xlu0 %v1324
        %v1326 = vpop.xlane.xlu0 %1325
        %v1327 = vsub.f32 %v1319, %v1323
        %v1328 = vsub.f32 %v1320, %v1326
        %v1329 = vmul.f32 %v1327, 1.442695
        %v1330 = vpow.pop %v1329
        %v1331 = vmul.f32 %v1328, 1.442695
        %v1332 = vpow.pop %v1331
        %v1333 = vsel %vm1073, %v1330, 0.0
        %1334 = vadd.xlane.f32.xlu0 %v1333
        %v1335 = vpop.xlane.xlu0 %1334
        %v1336 = vsel %vm1073, %v1332, 0.0
        %1337 = vadd.xlane.f32.xlu0 %v1336
        %v1338 = vpop.xlane.xlu0 %1337
        %v1339 = vrcp.pop %v1335
        %v1340 = vrcp.pop %v1338
        %v1341 = vmul.f32 %v1330, %v1339
        %v1342 = vmul.f32 %v1332, %v1340
        %1343 = vrot.lane.b32.xlu0 %v1044, 32
        %v1344 = vpop.permute.xlu0 %1343
        %1345 = vrot.lane.b32.xlu0 %v1046, 32
        %v1346 = vpop.permute.xlu0 %1345
        %v1350 = vsel %vm1073, %v1341, 0
        %v1353 = vsel %vm1073, %v1342, 0
        %1355 = vmatpush.msra.mxu0 0.0
        %1356 = vmatpush.msra.mxu0 0.0
        %1357 = vmatpush.msra.mxu0 0.0
        %1358 = vmatpush.msra.mxu0 0.0
        %1359 = vmatpush.msra.mxu0 0.0
        %1360 = vmatpush.msra.mxu0 0.0
        %1361 = vmatpush.msra.mxu0 0.0
        %1362 = vmatpush.msra.mxu0 0.0
        %1363 = vmatpush.msra.mxu0 0.0
        %1364 = vmatpush.msra.mxu0 0.0
        %1365 = vmatpush.msra.mxu0 0.0
        %1366 = vmatpush.msra.mxu0 0.0
        %1367 = vmatpush.msra.mxu0 0.0
        %1368 = vmatpush.msra.mxu0 0.0
        %1369 = vmatpush.msra.mxu0 %v1346
        %1370 = vmatpush.msra.mxu0 %v1344
        %1371 = vmatmul.f32.gmra.mxu0 %v1350
        %v1372 = vpop.f32.mrf.mxu0
        %v1373 = vadd.f32 0.0, %v1372
        %1374 = vmatmul.f32.gmra.mxu0 %v1353
        %v1375 = vpop.f32.mrf.mxu0
        %v1376 = vadd.f32 0.0, %v1375
        %1377 = vdwg.mxu0
        %1380 = vrot.lane.b32.xlu0 %v1207, 32
        %v1381 = vpop.permute.xlu0 %1380
        %1382 = vrot.lane.b32.xlu0 %v1210, 32
        %v1383 = vpop.permute.xlu0 %1382
        %1388 = vrot.lane.b32.xlu0 %v1290, 64
        %v1389 = vpop.permute.xlu0 %1388
        %1390 = vrot.lane.b32.xlu0 %v1293, 64
        %v1391 = vpop.permute.xlu0 %1390
        %1396 = vrot.lane.b32.xlu0 %v1373, 96
        %v1397 = vpop.permute.xlu0 %1396
        %1398 = vrot.lane.b32.xlu0 %v1376, 96
        %v1399 = vpop.permute.xlu0 %1398
        %v1402 = vsel %vm1050, %v1120, %v1381
        %v1403 = vsel %vm1050, %v1123, %v1383
        %vm1404 = vcmask 523264
        %v1405 = vsel %vm1404, %v1402, %v1389
        %v1406 = vsel %vm1404, %v1403, %v1391
        %vm1407 = vcmask 785408
        %v1408 = vsel %vm1407, %v1405, %v1397
        %v1409 = vsel %vm1407, %v1406, %v1399
        %v1410 = vpack.c.bf16 %v1409, %v1408
        %v1411 = vld [vmem:[#allocation11] sm:$0xf]
        %v1412 = vld [vmem:[#allocation11 + $0x4] sm:$0xf]
        %v1413 = vld [vmem:[#allocation11 + $0x8] sm:$0xf]
        %v1414 = vld [vmem:[#allocation11 + $0xc] sm:$0xf]
        %v1415 = vld [vmem:[#allocation11 + $0x10] sm:$0xf]
        %v1416 = vld [vmem:[#allocation11 + $0x14] sm:$0xf]
        %v1417 = vld [vmem:[#allocation11 + $0x18] sm:$0xf]
        %v1418 = vld [vmem:[#allocation11 + $0x1c] sm:$0xf]
        %v1419 = vld [vmem:[#allocation11 + $0x20] sm:$0xf]
        %v1420 = vld [vmem:[#allocation11 + $0x24] sm:$0xf]
        %v1421 = vld [vmem:[#allocation11 + $0x28] sm:$0xf]
        %v1422 = vld [vmem:[#allocation11 + $0x2c] sm:$0xf]
        %v1423 = vld [vmem:[#allocation11 + $0x30] sm:$0xf]
        %v1424 = vld [vmem:[#allocation11 + $0x34] sm:$0xf]
        %v1425 = vld [vmem:[#allocation11 + $0x38] sm:$0xf]
        %v1426 = vld [vmem:[#allocation11 + $0x3c] sm:$0xf]
        %v1427 = vld [vmem:[#allocation12] sm:$0x1]
        %v1429 = vperm.slane %v1427, 0
        %v1447 = vunpack.c.l.b16 %v1411
        %v1448 = vunpack.c.l.b16 %v1412
        %v1449 = vunpack.c.l.b16 %v1413
        %v1450 = vunpack.c.l.b16 %v1414
        %v1451 = vunpack.c.l.b16 %v1415
        %v1452 = vunpack.c.l.b16 %v1416
        %v1453 = vunpack.c.l.b16 %v1417
        %v1454 = vunpack.c.l.b16 %v1418
        %v1455 = vunpack.c.l.b16 %v1419
        %v1456 = vunpack.c.l.b16 %v1420
        %v1457 = vunpack.c.l.b16 %v1421
        %v1458 = vunpack.c.l.b16 %v1422
        %v1459 = vunpack.c.l.b16 %v1423
        %v1460 = vunpack.c.l.b16 %v1424
        %v1461 = vunpack.c.l.b16 %v1425
        %v1462 = vunpack.c.l.b16 %v1426
        %v1463 = vpack.c.b16 %v1448, %v1447
        %v1464 = vpack.c.b16 %v1450, %v1449
        %v1465 = vpack.c.b16 %v1452, %v1451
        %v1466 = vpack.c.b16 %v1454, %v1453
        %v1467 = vpack.c.b16 %v1456, %v1455
        %v1468 = vpack.c.b16 %v1458, %v1457
        %v1469 = vpack.c.b16 %v1460, %v1459
        %v1470 = vpack.c.b16 %v1462, %v1461
        %1479 = vmatpush.bf16.msra.mxu0 %v1470
        %1480 = vmatpush.bf16.msra.mxu0 %v1469
        %1481 = vmatpush.bf16.msra.mxu0 %v1468
        %1482 = vmatpush.bf16.msra.mxu0 %v1467
        %1483 = vmatpush.bf16.msra.mxu0 %v1466
        %1484 = vmatpush.bf16.msra.mxu0 %v1465
        %1485 = vmatpush.bf16.msra.mxu0 %v1464
        %1486 = vmatpush.bf16.msra.mxu0 %v1463
        %1487 = vmatmul.bf16.gmra.mxu0 %v1410
        %v1488 = vpop.f32.mrf.mxu0
        %v1489 = vadd.f32 %v1429, %v1488
        %v1490 = vpop.f32.mrf.mxu0
        %v1491 = vadd.f32 %v1429, %v1490
        %1492 = vdwg.mxu0
        %v1493 = vadd.f32 %v770, %v1489
        %v1494 = vadd.f32 %v771, %v1491
        %s1495 = sld [smem:[#allocation21 + $0x2]]
        %s1496 = sld [smem:[#allocation21 + $0x3]]
        %1497 = vadd.xlane.f32.xlu0 %v1493
        %v1498 = vpop.xlane.xlu0 %1497
        %1499 = vadd.xlane.f32.xlu0 %v1494
        %v1500 = vpop.xlane.xlu0 %1499
        %v1501 = vmul.f32 %v1498, %v788
        %v1502 = vmul.f32 %v1500, %v788
        %v1503 = vsub.f32 %v1493, %v1501
        %v1504 = vsub.f32 %v1494, %v1502
        %v1505 = vmul.f32 %v1503, %v1503
        %v1506 = vmul.f32 %v1504, %v1504
        %1507 = vadd.xlane.f32.xlu0 %v1505
        %v1508 = vpop.xlane.xlu0 %1507
        %1509 = vadd.xlane.f32.xlu0 %v1506
        %v1510 = vpop.xlane.xlu0 %1509
        %v1511 = vmul.f32 %v1508, 0.007874016
        %v1512 = vmul.f32 %v1510, 0.007874016
        %v1513 = vrsqrt.pop %v1511
        %v1514 = vmul.f32 %v1513, %v1511
        %v1515 = vmul.f32 %v1514, %v1513
        %v1516 = vmul.f32 0.5, %v1515
        %v1517 = vsub.f32 1.5, %v1516
        %v1518 = vmul.f32 %v1513, %v1517
        %v1519 = vmul.f32 %v1511, %v1518
        %vm1520 = vcmp.eq.f32.partialorder %v1511, inf
        %v1521 = vsel %vm1520, %v1511, %v1519
        %vm1522 = vcmp.eq.f32.partialorder %v1511, 0.0
        %v1523 = vand.u32 %v1511, 2147483648
        %v1524 = vsel %vm1522, %v1523, %v1521
        %v1525 = vrsqrt.pop %v1512
        %v1526 = vmul.f32 %v1525, %v1512
        %v1527 = vmul.f32 %v1526, %v1525
        %v1528 = vmul.f32 0.5, %v1527
        %v1529 = vsub.f32 1.5, %v1528
        %v1530 = vmul.f32 %v1525, %v1529
        %v1531 = vmul.f32 %v1512, %v1530
        %vm1532 = vcmp.eq.f32.partialorder %v1512, inf
        %v1533 = vsel %vm1532, %v1512, %v1531
        %vm1534 = vcmp.eq.f32.partialorder %v1512, 0.0
        %v1535 = vand.u32 %v1512, 2147483648
        %v1536 = vsel %vm1534, %v1535, %v1533
        %v1537 = vadd.f32 %v1524, 1e-06
        %v1538 = vadd.f32 %v1536, 1e-06
        %v1539 = vrcp.pop %v1537
        %v1540 = vrcp.pop %v1538
        %v1541 = vmul.f32 %v1503, %v1539
        %v1542 = vmul.f32 %v1504, %v1540
        %v1543 = vstv %s1495
        %v1544 = vmul.f32 %v1543, %v1541
        %v1545 = vmul.f32 %v1543, %v1542
        %v1546 = vstv %s1496
        %v1547 = vadd.f32 %v1544, %v1546
        %v1548 = vadd.f32 %v1545, %v1546
        %v1549 = vpack.c.bf16 %v1548, %v1547
        %v1550 = vld [vmem:[#allocation14] sm:$0xf]
        %v1551 = vld [vmem:[#allocation14 + $0x4] sm:$0xf]
        %v1552 = vld [vmem:[#allocation14 + $0x8] sm:$0xf]
        %v1553 = vld [vmem:[#allocation14 + $0xc] sm:$0xf]
        %v1554 = vld [vmem:[#allocation14 + $0x10] sm:$0xf]
        %v1555 = vld [vmem:[#allocation14 + $0x14] sm:$0xf]
        %v1556 = vld [vmem:[#allocation14 + $0x18] sm:$0xf]
        %v1557 = vld [vmem:[#allocation14 + $0x1c] sm:$0xf]
        %v1558 = vld [vmem:[#allocation14 + $0x20] sm:$0xf]
        %v1559 = vld [vmem:[#allocation14 + $0x24] sm:$0xf]
        %v1560 = vld [vmem:[#allocation14 + $0x28] sm:$0xf]
        %v1561 = vld [vmem:[#allocation14 + $0x2c] sm:$0xf]
        %v1562 = vld [vmem:[#allocation14 + $0x30] sm:$0xf]
        %v1563 = vld [vmem:[#allocation14 + $0x34] sm:$0xf]
        %v1564 = vld [vmem:[#allocation14 + $0x38] sm:$0xf]
        %v1565 = vld [vmem:[#allocation14 + $0x3c] sm:$0xf]
        %v1566 = vld [vmem:[%s7] sm:$0x1]
        %v1568 = vperm.slane %v1566, 0
        %v1586 = vunpack.c.l.b16 %v1550
        %v1587 = vunpack.c.l.b16 %v1551
        %v1588 = vunpack.c.l.b16 %v1552
        %v1589 = vunpack.c.l.b16 %v1553
        %v1590 = vunpack.c.l.b16 %v1554
        %v1591 = vunpack.c.l.b16 %v1555
        %v1592 = vunpack.c.l.b16 %v1556
        %v1593 = vunpack.c.l.b16 %v1557
        %v1594 = vunpack.c.l.b16 %v1558
        %v1595 = vunpack.c.l.b16 %v1559
        %v1596 = vunpack.c.l.b16 %v1560
        %v1597 = vunpack.c.l.b16 %v1561
        %v1598 = vunpack.c.l.b16 %v1562
        %v1599 = vunpack.c.l.b16 %v1563
        %v1600 = vunpack.c.l.b16 %v1564
        %v1601 = vunpack.c.l.b16 %v1565
        %v1602 = vpack.c.b16 %v1587, %v1586
        %v1603 = vpack.c.b16 %v1589, %v1588
        %v1604 = vpack.c.b16 %v1591, %v1590
        %v1605 = vpack.c.b16 %v1593, %v1592
        %v1606 = vpack.c.b16 %v1595, %v1594
        %v1607 = vpack.c.b16 %v1597, %v1596
        %v1608 = vpack.c.b16 %v1599, %v1598
        %v1609 = vpack.c.b16 %v1601, %v1600
        %1618 = vmatpush.bf16.msra.mxu0 %v1609
        %1619 = vmatpush.bf16.msra.mxu0 %v1608
        %1620 = vmatpush.bf16.msra.mxu0 %v1607
        %1621 = vmatpush.bf16.msra.mxu0 %v1606
        %1622 = vmatpush.bf16.msra.mxu0 %v1605
        %1623 = vmatpush.bf16.msra.mxu0 %v1604
        %1624 = vmatpush.bf16.msra.mxu0 %v1603
        %1625 = vmatpush.bf16.msra.mxu0 %v1602
        %1626 = vmatmul.bf16.gmra.mxu0 %v1549
        %v1627 = vpop.f32.mrf.mxu0
        %v1628 = vadd.f32 %v1568, %v1627
        %v1629 = vpop.f32.mrf.mxu0
        %v1630 = vadd.f32 %v1568, %v1629
        %1631 = vdwg.mxu0
        %v1632 = vpack.c.bf16 %v773, %v772
        %v1633 = vpack.c.bf16 %v775, %v774
        %v1634 = vld [vmem:[#allocation15] sm:$0xff]
        %v1635 = vld [vmem:[#allocation15 + $0x8] sm:$0xff]
        %v1636 = vld [vmem:[#allocation15 + $0x10] sm:$0xff]
        %v1637 = vld [vmem:[#allocation15 + $0x18] sm:$0xff]
        %v1638 = vld [vmem:[#allocation15 + $0x20] sm:$0xff]
        %v1639 = vld [vmem:[#allocation15 + $0x28] sm:$0xff]
        %v1640 = vld [vmem:[#allocation15 + $0x30] sm:$0xff]
        %v1641 = vld [vmem:[#allocation15 + $0x38] sm:$0xff]
        %v1642 = vld [vmem:[#allocation15 + $0x40] sm:$0xff]
        %v1643 = vld [vmem:[#allocation15 + $0x48] sm:$0xff]
        %v1644 = vld [vmem:[#allocation15 + $0x50] sm:$0xff]
        %v1645 = vld [vmem:[#allocation15 + $0x58] sm:$0xff]
        %v1646 = vld [vmem:[#allocation15 + $0x60] sm:$0xff]
        %v1647 = vld [vmem:[#allocation15 + $0x68] sm:$0xff]
        %v1648 = vld [vmem:[#allocation15 + $0x70] sm:$0xff]
        %v1649 = vld [vmem:[#allocation15 + $0x78] sm:$0xff]
        %v1650 = vld [vmem:[%s9] sm:$0x3]
        %v1652 = vperm.slane %v1650, 0
        %v1653 = vperm.slane %v1650, 1
        %v1672 = vunpack.c.l.b16 %v1634
        %v1673 = vunpack.c.h.b16 %v1634
        %v1674 = vunpack.c.l.b16 %v1635
        %v1675 = vunpack.c.h.b16 %v1635
        %v1676 = vunpack.c.l.b16 %v1636
        %v1677 = vunpack.c.h.b16 %v1636
        %v1678 = vunpack.c.l.b16 %v1637
        %v1679 = vunpack.c.h.b16 %v1637
        %v1680 = vunpack.c.l.b16 %v1638
        %v1681 = vunpack.c.h.b16 %v1638
        %v1682 = vunpack.c.l.b16 %v1639
        %v1683 = vunpack.c.h.b16 %v1639
        %v1684 = vunpack.c.l.b16 %v1640
        %v1685 = vunpack.c.h.b16 %v1640
        %v1686 = vunpack.c.l.b16 %v1641
        %v1687 = vunpack.c.h.b16 %v1641
        %v1688 = vunpack.c.l.b16 %v1642
        %v1689 = vunpack.c.h.b16 %v1642
        %v1690 = vunpack.c.l.b16 %v1643
        %v1691 = vunpack.c.h.b16 %v1643
        %v1692 = vunpack.c.l.b16 %v1644
        %v1693 = vunpack.c.h.b16 %v1644
        %v1694 = vunpack.c.l.b16 %v1645
        %v1695 = vunpack.c.h.b16 %v1645
        %v1696 = vunpack.c.l.b16 %v1646
        %v1697 = vunpack.c.h.b16 %v1646
        %v1698 = vunpack.c.l.b16 %v1647
        %v1699 = vunpack.c.h.b16 %v1647
        %v1700 = vunpack.c.l.b16 %v1648
        %v1701 = vunpack.c.h.b16 %v1648
        %v1702 = vunpack.c.l.b16 %v1649
        %v1703 = vunpack.c.h.b16 %v1649
        %v1704 = vpack.c.b16 %v1674, %v1672
        %v1705 = vpack.c.b16 %v1675, %v1673
        %v1706 = vpack.c.b16 %v1678, %v1676
        %v1707 = vpack.c.b16 %v1679, %v1677
        %v1708 = vpack.c.b16 %v1682, %v1680
        %v1709 = vpack.c.b16 %v1683, %v1681
        %v1710 = vpack.c.b16 %v1686, %v1684
        %v1711 = vpack.c.b16 %v1687, %v1685
        %v1712 = vpack.c.b16 %v1690, %v1688
        %v1713 = vpack.c.b16 %v1691, %v1689
        %v1714 = vpack.c.b16 %v1694, %v1692
        %v1715 = vpack.c.b16 %v1695, %v1693
        %v1716 = vpack.c.b16 %v1698, %v1696
        %v1717 = vpack.c.b16 %v1699, %v1697
        %v1718 = vpack.c.b16 %v1702, %v1700
        %v1719 = vpack.c.b16 %v1703, %v1701
        %1736 = vmatpush.bf16.msra.mxu0 %v1718
        %1737 = vmatpush.bf16.msra.mxu0 %v1716
        %1738 = vmatpush.bf16.msra.mxu0 %v1714
        %1739 = vmatpush.bf16.msra.mxu0 %v1712
        %1740 = vmatpush.bf16.msra.mxu0 %v1710
        %1741 = vmatpush.bf16.msra.mxu0 %v1708
        %1742 = vmatpush.bf16.msra.mxu0 %v1706
        %1743 = vmatpush.bf16.msra.mxu0 %v1704
        %1744 = vmatmul.bf16.gmra.mxu0 %v1632
        %v1745 = vpop.f32.mrf.mxu0
        %v1746 = vadd.f32 %v1652, %v1745
        %v1747 = vpop.f32.mrf.mxu0
        %v1748 = vadd.f32 %v1652, %v1747
        %1749 = vmatmul.bf16.gmra.mxu0 %v1633
        %v1750 = vpop.f32.mrf.mxu0
        %v1751 = vadd.f32 %v1652, %v1750
        %v1752 = vpop.f32.mrf.mxu0
        %v1753 = vadd.f32 %v1652, %v1752
        %1754 = vdwg.mxu0
        %1755 = vmatpush.bf16.msra.mxu0 %v1719
        %1756 = vmatpush.bf16.msra.mxu0 %v1717
        %1757 = vmatpush.bf16.msra.mxu0 %v1715
        %1758 = vmatpush.bf16.msra.mxu0 %v1713
        %1759 = vmatpush.bf16.msra.mxu0 %v1711
        %1760 = vmatpush.bf16.msra.mxu0 %v1709
        %1761 = vmatpush.bf16.msra.mxu0 %v1707
        %1762 = vmatpush.bf16.msra.mxu0 %v1705
        %1763 = vmatmul.bf16.gmra.mxu0 %v1632
        %v1764 = vpop.f32.mrf.mxu0
        %v1765 = vadd.f32 %v1653, %v1764
        %v1766 = vpop.f32.mrf.mxu0
        %v1767 = vadd.f32 %v1653, %v1766
        %1768 = vmatmul.bf16.gmra.mxu0 %v1633
        %v1769 = vpop.f32.mrf.mxu0
        %v1770 = vadd.f32 %v1653, %v1769
        %v1771 = vpop.f32.mrf.mxu0
        %v1772 = vadd.f32 %v1653, %v1771
        %1773 = vdwg.mxu0
        %v1774 = vpack.c.bf16 %v1630, %v1628
        %v1775 = vpack.c.bf16 %v1748, %v1746
        %v1776 = vpack.c.bf16 %v1753, %v1751
        %v1778 = vsel %vm1050, %v1774, 0
        %v1781 = vsel %vm1050, %v1775, 0
        %v1784 = vsel %vm1050, %v1776, 0
        %1786 = vmatpush.bf16.xpose.msra.mxu0 0
        %1787 = vmatpush.bf16.xpose.msra.mxu0 0
        %1788 = vmatpush.bf16.xpose.msra.mxu0 0
        %1789 = vmatpush.bf16.xpose.msra.mxu0 0
        %1790 = vmatpush.bf16.xpose.msra.mxu0 0
        %1791 = vmatpush.bf16.xpose.msra.mxu0 0
        %1792 = vmatpush.bf16.xpose.msra.mxu0 %v1784
        %1793 = vmatpush.bf16.xpose.msra.mxu0 %v1781
        %1794 = vmatmul.bf16.gmra.mxu0 %v1778
        %v1795 = vpop.f32.mrf.mxu0
        %v1796 = vadd.f32 0.0, %v1795
        %v1797 = vpop.f32.mrf.mxu0
        %v1798 = vadd.f32 0.0, %v1797
        %1799 = vdwg.mxu0
        %v1800 = vmul.f32 %v1796, 0.17677669
        %v1801 = vmul.f32 %v1798, 0.17677669
        %v1802 = vsel %vm1050, %v1800, -inf
        %1803 = vmax.xlane.f32.xlu0 %v1802
        %v1804 = vpop.xlane.xlu0 %1803
        %v1805 = vsel %vm1050, %v1801, -inf
        %1806 = vmax.xlane.f32.xlu0 %v1805
        %v1807 = vpop.xlane.xlu0 %1806
        %v1808 = vsub.f32 %v1800, %v1804
        %v1809 = vsub.f32 %v1801, %v1807
        %v1810 = vmul.f32 %v1808, 1.442695
        %v1811 = vpow.pop %v1810
        %v1812 = vmul.f32 %v1809, 1.442695
        %v1813 = vpow.pop %v1812
        %v1814 = vsel %vm1050, %v1811, 0.0
        %1815 = vadd.xlane.f32.xlu0 %v1814
        %v1816 = vpop.xlane.xlu0 %1815
        %v1817 = vsel %vm1050, %v1813, 0.0
        %1818 = vadd.xlane.f32.xlu0 %v1817
        %v1819 = vpop.xlane.xlu0 %1818
        %v1820 = vrcp.pop %v1816
        %v1821 = vrcp.pop %v1819
        %v1822 = vmul.f32 %v1811, %v1820
        %v1823 = vmul.f32 %v1813, %v1821
        %v1825 = vsel %vm1050, %v1822, 0
        %v1828 = vsel %vm1050, %v1823, 0
        %1830 = vmatpush.msra.mxu0 0.0
        %1831 = vmatpush.msra.mxu0 0.0
        %1832 = vmatpush.msra.mxu0 0.0
        %1833 = vmatpush.msra.mxu0 0.0
        %1834 = vmatpush.msra.mxu0 0.0
        %1835 = vmatpush.msra.mxu0 0.0
        %1836 = vmatpush.msra.mxu0 0.0
        %1837 = vmatpush.msra.mxu0 0.0
        %1838 = vmatpush.msra.mxu0 0.0
        %1839 = vmatpush.msra.mxu0 0.0
        %1840 = vmatpush.msra.mxu0 0.0
        %1841 = vmatpush.msra.mxu0 0.0
        %1842 = vmatpush.msra.mxu0 %v1772
        %1843 = vmatpush.msra.mxu0 %v1770
        %1844 = vmatpush.msra.mxu0 %v1767
        %1845 = vmatpush.msra.mxu0 %v1765
        %1846 = vmatmul.f32.gmra.mxu0 %v1825
        %v1847 = vpop.f32.mrf.mxu0
        %v1848 = vadd.f32 0.0, %v1847
        %1849 = vmatmul.f32.gmra.mxu0 %v1828
        %v1850 = vpop.f32.mrf.mxu0
        %v1851 = vadd.f32 0.0, %v1850
        %1852 = vdwg.mxu0
        %1854 = vrot.lane.b32.xlu0 %v1774, 96
        %v1855 = vpop.permute.xlu0 %1854
        %1858 = vrot.lane.b32.xlu0 %v1775, 96
        %v1859 = vpop.permute.xlu0 %1858
        %1860 = vrot.lane.b32.xlu0 %v1776, 96
        %v1861 = vpop.permute.xlu0 %1860
        %v1863 = vsel %vm1050, %v1855, 0
        %v1866 = vsel %vm1050, %v1859, 0
        %v1869 = vsel %vm1050, %v1861, 0
        %1871 = vmatpush.bf16.xpose.msra.mxu0 0
        %1872 = vmatpush.bf16.xpose.msra.mxu0 0
        %1873 = vmatpush.bf16.xpose.msra.mxu0 0
        %1874 = vmatpush.bf16.xpose.msra.mxu0 0
        %1875 = vmatpush.bf16.xpose.msra.mxu0 0
        %1876 = vmatpush.bf16.xpose.msra.mxu0 0
        %1877 = vmatpush.bf16.xpose.msra.mxu0 %v1869
        %1878 = vmatpush.bf16.xpose.msra.mxu0 %v1866
        %1879 = vmatmul.bf16.gmra.mxu0 %v1863
        %v1880 = vpop.f32.mrf.mxu0
        %v1881 = vadd.f32 0.0, %v1880
        %v1882 = vpop.f32.mrf.mxu0
        %v1883 = vadd.f32 0.0, %v1882
        %1884 = vdwg.mxu0
        %v1885 = vmul.f32 %v1881, 0.17677669
        %v1886 = vmul.f32 %v1883, 0.17677669
        %v1887 = vsel %vm1050, %v1885, -inf
        %1888 = vmax.xlane.f32.xlu0 %v1887
        %v1889 = vpop.xlane.xlu0 %1888
        %v1890 = vsel %vm1050, %v1886, -inf
        %1891 = vmax.xlane.f32.xlu0 %v1890
        %v1892 = vpop.xlane.xlu0 %1891
        %v1893 = vsub.f32 %v1885, %v1889
        %v1894 = vsub.f32 %v1886, %v1892
        %v1895 = vmul.f32 %v1893, 1.442695
        %v1896 = vpow.pop %v1895
        %v1897 = vmul.f32 %v1894, 1.442695
        %v1898 = vpow.pop %v1897
        %v1899 = vsel %vm1050, %v1896, 0.0
        %1900 = vadd.xlane.f32.xlu0 %v1899
        %v1901 = vpop.xlane.xlu0 %1900
        %v1902 = vsel %vm1050, %v1898, 0.0
        %1903 = vadd.xlane.f32.xlu0 %v1902
        %v1904 = vpop.xlane.xlu0 %1903
        %v1905 = vrcp.pop %v1901
        %v1906 = vrcp.pop %v1904
        %v1907 = vmul.f32 %v1896, %v1905
        %v1908 = vmul.f32 %v1898, %v1906
        %1913 = vrot.lane.b32.xlu0 %v1765, 96
        %v1914 = vpop.permute.xlu0 %1913
        %1915 = vrot.lane.b32.xlu0 %v1767, 96
        %v1916 = vpop.permute.xlu0 %1915
        %1917 = vrot.lane.b32.xlu0 %v1770, 96
        %v1918 = vpop.permute.xlu0 %1917
        %1919 = vrot.lane.b32.xlu0 %v1772, 96
        %v1920 = vpop.permute.xlu0 %1919
        %v1926 = vsel %vm1050, %v1907, 0
        %v1929 = vsel %vm1050, %v1908, 0
        %1931 = vmatpush.msra.mxu0 0.0
        %1932 = vmatpush.msra.mxu0 0.0
        %1933 = vmatpush.msra.mxu0 0.0
        %1934 = vmatpush.msra.mxu0 0.0
        %1935 = vmatpush.msra.mxu0 0.0
        %1936 = vmatpush.msra.mxu0 0.0
        %1937 = vmatpush.msra.mxu0 0.0
        %1938 = vmatpush.msra.mxu0 0.0
        %1939 = vmatpush.msra.mxu0 0.0
        %1940 = vmatpush.msra.mxu0 0.0
        %1941 = vmatpush.msra.mxu0 0.0
        %1942 = vmatpush.msra.mxu0 0.0
        %1943 = vmatpush.msra.mxu0 %v1920
        %1944 = vmatpush.msra.mxu0 %v1918
        %1945 = vmatpush.msra.mxu0 %v1916
        %1946 = vmatpush.msra.mxu0 %v1914
        %1947 = vmatmul.f32.gmra.mxu0 %v1926
        %v1948 = vpop.f32.mrf.mxu0
        %v1949 = vadd.f32 0.0, %v1948
        %1950 = vmatmul.f32.gmra.mxu0 %v1929
        %v1951 = vpop.f32.mrf.mxu0
        %v1952 = vadd.f32 0.0, %v1951
        %1953 = vdwg.mxu0
        %1954 = vrot.lane.b32.xlu0 %v1774, 64
        %v1955 = vpop.permute.xlu0 %1954
        %1956 = vrot.lane.b32.xlu0 %v1775, 64
        %v1957 = vpop.permute.xlu0 %1956
        %1958 = vrot.lane.b32.xlu0 %v1776, 64
        %v1959 = vpop.permute.xlu0 %1958
        %v1961 = vsel %vm1050, %v1955, 0
        %v1964 = vsel %vm1050, %v1957, 0
        %v1967 = vsel %vm1050, %v1959, 0
        %1969 = vmatpush.bf16.xpose.msra.mxu0 0
        %1970 = vmatpush.bf16.xpose.msra.mxu0 0
        %1971 = vmatpush.bf16.xpose.msra.mxu0 0
        %1972 = vmatpush.bf16.xpose.msra.mxu0 0
        %1973 = vmatpush.bf16.xpose.msra.mxu0 0
        %1974 = vmatpush.bf16.xpose.msra.mxu0 0
        %1975 = vmatpush.bf16.xpose.msra.mxu0 %v1967
        %1976 = vmatpush.bf16.xpose.msra.mxu0 %v1964
        %1977 = vmatmul.bf16.gmra.mxu0 %v1961
        %v1978 = vpop.f32.mrf.mxu0
        %v1979 = vadd.f32 0.0, %v1978
        %v1980 = vpop.f32.mrf.mxu0
        %v1981 = vadd.f32 0.0, %v1980
        %1982 = vdwg.mxu0
        %v1983 = vmul.f32 %v1979, 0.17677669
        %v1984 = vmul.f32 %v1981, 0.17677669
        %v1985 = vsel %vm1050, %v1983, -inf
        %1986 = vmax.xlane.f32.xlu0 %v1985
        %v1987 = vpop.xlane.xlu0 %1986
        %v1988 = vsel %vm1050, %v1984, -inf
        %1989 = vmax.xlane.f32.xlu0 %v1988
        %v1990 = vpop.xlane.xlu0 %1989
        %v1991 = vsub.f32 %v1983, %v1987
        %v1992 = vsub.f32 %v1984, %v1990
        %v1993 = vmul.f32 %v1991, 1.442695
        %v1994 = vpow.pop %v1993
        %v1995 = vmul.f32 %v1992, 1.442695
        %v1996 = vpow.pop %v1995
        %v1997 = vsel %vm1050, %v1994, 0.0
        %1998 = vadd.xlane.f32.xlu0 %v1997
        %v1999 = vpop.xlane.xlu0 %1998
        %v2000 = vsel %vm1050, %v1996, 0.0
        %2001 = vadd.xlane.f32.xlu0 %v2000
        %v2002 = vpop.xlane.xlu0 %2001
        %v2003 = vrcp.pop %v1999
        %v2004 = vrcp.pop %v2002
        %v2005 = vmul.f32 %v1994, %v2003
        %v2006 = vmul.f32 %v1996, %v2004
        %2007 = vrot.lane.b32.xlu0 %v1765, 64
        %v2008 = vpop.permute.xlu0 %2007
        %2009 = vrot.lane.b32.xlu0 %v1767, 64
        %v2010 = vpop.permute.xlu0 %2009
        %2011 = vrot.lane.b32.xlu0 %v1770, 64
        %v2012 = vpop.permute.xlu0 %2011
        %2013 = vrot.lane.b32.xlu0 %v1772, 64
        %v2014 = vpop.permute.xlu0 %2013
        %v2020 = vsel %vm1050, %v2005, 0
        %v2023 = vsel %vm1050, %v2006, 0
        %2025 = vmatpush.msra.mxu0 0.0
        %2026 = vmatpush.msra.mxu0 0.0
        %2027 = vmatpush.msra.mxu0 0.0
        %2028 = vmatpush.msra.mxu0 0.0
        %2029 = vmatpush.msra.mxu0 0.0
        %2030 = vmatpush.msra.mxu0 0.0
        %2031 = vmatpush.msra.mxu0 0.0
        %2032 = vmatpush.msra.mxu0 0.0
        %2033 = vmatpush.msra.mxu0 0.0
        %2034 = vmatpush.msra.mxu0 0.0
        %2035 = vmatpush.msra.mxu0 0.0
        %2036 = vmatpush.msra.mxu0 0.0
        %2037 = vmatpush.msra.mxu0 %v2014
        %2038 = vmatpush.msra.mxu0 %v2012
        %2039 = vmatpush.msra.mxu0 %v2010
        %2040 = vmatpush.msra.mxu0 %v2008
        %2041 = vmatmul.f32.gmra.mxu0 %v2020
        %v2042 = vpop.f32.mrf.mxu0
        %v2043 = vadd.f32 0.0, %v2042
        %2044 = vmatmul.f32.gmra.mxu0 %v2023
        %v2045 = vpop.f32.mrf.mxu0
        %v2046 = vadd.f32 0.0, %v2045
        %2047 = vdwg.mxu0
        %2048 = vrot.lane.b32.xlu0 %v1774, 32
        %v2049 = vpop.permute.xlu0 %2048
        %2050 = vrot.lane.b32.xlu0 %v1775, 32
        %v2051 = vpop.permute.xlu0 %2050
        %2052 = vrot.lane.b32.xlu0 %v1776, 32
        %v2053 = vpop.permute.xlu0 %2052
        %v2055 = vsel %vm1050, %v2049, 0
        %v2058 = vsel %vm1050, %v2051, 0
        %v2061 = vsel %vm1050, %v2053, 0
        %2063 = vmatpush.bf16.xpose.msra.mxu0 0
        %2064 = vmatpush.bf16.xpose.msra.mxu0 0
        %2065 = vmatpush.bf16.xpose.msra.mxu0 0
        %2066 = vmatpush.bf16.xpose.msra.mxu0 0
        %2067 = vmatpush.bf16.xpose.msra.mxu0 0
        %2068 = vmatpush.bf16.xpose.msra.mxu0 0
        %2069 = vmatpush.bf16.xpose.msra.mxu0 %v2061
        %2070 = vmatpush.bf16.xpose.msra.mxu0 %v2058
        %2071 = vmatmul.bf16.gmra.mxu0 %v2055
        %v2072 = vpop.f32.mrf.mxu0
        %v2073 = vadd.f32 0.0, %v2072
        %v2074 = vpop.f32.mrf.mxu0
        %v2075 = vadd.f32 0.0, %v2074
        %2076 = vdwg.mxu0
        %v2077 = vmul.f32 %v2073, 0.17677669
        %v2078 = vmul.f32 %v2075, 0.17677669
        %v2079 = vsel %vm1050, %v2077, -inf
        %2080 = vmax.xlane.f32.xlu0 %v2079
        %v2081 = vpop.xlane.xlu0 %2080
        %v2082 = vsel %vm1050, %v2078, -inf
        %2083 = vmax.xlane.f32.xlu0 %v2082
        %v2084 = vpop.xlane.xlu0 %2083
        %v2085 = vsub.f32 %v2077, %v2081
        %v2086 = vsub.f32 %v2078, %v2084
        %v2087 = vmul.f32 %v2085, 1.442695
        %v2088 = vpow.pop %v2087
        %v2089 = vmul.f32 %v2086, 1.442695
        %v2090 = vpow.pop %v2089
        %v2091 = vsel %vm1050, %v2088, 0.0
        %2092 = vadd.xlane.f32.xlu0 %v2091
        %v2093 = vpop.xlane.xlu0 %2092
        %v2094 = vsel %vm1050, %v2090, 0.0
        %2095 = vadd.xlane.f32.xlu0 %v2094
        %v2096 = vpop.xlane.xlu0 %2095
        %v2097 = vrcp.pop %v2093
        %v2098 = vrcp.pop %v2096
        %v2099 = vmul.f32 %v2088, %v2097
        %v2100 = vmul.f32 %v2090, %v2098
        %2101 = vrot.lane.b32.xlu0 %v1765, 32
        %v2102 = vpop.permute.xlu0 %2101
        %2103 = vrot.lane.b32.xlu0 %v1767, 32
        %v2104 = vpop.permute.xlu0 %2103
        %2105 = vrot.lane.b32.xlu0 %v1770, 32
        %v2106 = vpop.permute.xlu0 %2105
        %2107 = vrot.lane.b32.xlu0 %v1772, 32
        %v2108 = vpop.permute.xlu0 %2107
        %v2114 = vsel %vm1050, %v2099, 0
        %v2117 = vsel %vm1050, %v2100, 0
        %2119 = vmatpush.msra.mxu0 0.0
        %2120 = vmatpush.msra.mxu0 0.0
        %2121 = vmatpush.msra.mxu0 0.0
        %2122 = vmatpush.msra.mxu0 0.0
        %2123 = vmatpush.msra.mxu0 0.0
        %2124 = vmatpush.msra.mxu0 0.0
        %2125 = vmatpush.msra.mxu0 0.0
        %2126 = vmatpush.msra.mxu0 0.0
        %2127 = vmatpush.msra.mxu0 0.0
        %2128 = vmatpush.msra.mxu0 0.0
        %2129 = vmatpush.msra.mxu0 0.0
        %2130 = vmatpush.msra.mxu0 0.0
        %2131 = vmatpush.msra.mxu0 %v2108
        %2132 = vmatpush.msra.mxu0 %v2106
        %2133 = vmatpush.msra.mxu0 %v2104
        %2134 = vmatpush.msra.mxu0 %v2102
        %2135 = vmatmul.f32.gmra.mxu0 %v2114
        %v2136 = vpop.f32.mrf.mxu0
        %v2137 = vadd.f32 0.0, %v2136
        %2138 = vmatmul.f32.gmra.mxu0 %v2117
        %v2139 = vpop.f32.mrf.mxu0
        %v2140 = vadd.f32 0.0, %v2139
        %2141 = vdwg.mxu0
        %2144 = vrot.lane.b32.xlu0 %v1949, 32
        %v2145 = vpop.permute.xlu0 %2144
        %2146 = vrot.lane.b32.xlu0 %v1952, 32
        %v2147 = vpop.permute.xlu0 %2146
        %2152 = vrot.lane.b32.xlu0 %v2043, 64
        %v2153 = vpop.permute.xlu0 %2152
        %2154 = vrot.lane.b32.xlu0 %v2046, 64
        %v2155 = vpop.permute.xlu0 %2154
        %2160 = vrot.lane.b32.xlu0 %v2137, 96
        %v2161 = vpop.permute.xlu0 %2160
        %2162 = vrot.lane.b32.xlu0 %v2140, 96
        %v2163 = vpop.permute.xlu0 %2162
        %v2166 = vsel %vm1050, %v1848, %v2145
        %v2167 = vsel %vm1050, %v1851, %v2147
        %v2168 = vsel %vm1404, %v2166, %v2153
        %v2169 = vsel %vm1404, %v2167, %v2155
        %v2170 = vsel %vm1407, %v2168, %v2161
        %v2171 = vsel %vm1407, %v2169, %v2163
        %v2172 = vpack.c.bf16 %v2171, %v2170
        %v2173 = vld [vmem:[#allocation17] sm:$0xf]
        %v2174 = vld [vmem:[#allocation17 + $0x4] sm:$0xf]
        %v2175 = vld [vmem:[#allocation17 + $0x8] sm:$0xf]
        %v2176 = vld [vmem:[#allocation17 + $0xc] sm:$0xf]
        %v2177 = vld [vmem:[#allocation17 + $0x10] sm:$0xf]
        %v2178 = vld [vmem:[#allocation17 + $0x14] sm:$0xf]
        %v2179 = vld [vmem:[#allocation17 + $0x18] sm:$0xf]
        %v2180 = vld [vmem:[#allocation17 + $0x1c] sm:$0xf]
        %v2181 = vld [vmem:[#allocation17 + $0x20] sm:$0xf]
        %v2182 = vld [vmem:[#allocation17 + $0x24] sm:$0xf]
        %v2183 = vld [vmem:[#allocation17 + $0x28] sm:$0xf]
        %v2184 = vld [vmem:[#allocation17 + $0x2c] sm:$0xf]
        %v2185 = vld [vmem:[#allocation17 + $0x30] sm:$0xf]
        %v2186 = vld [vmem:[#allocation17 + $0x34] sm:$0xf]
        %v2187 = vld [vmem:[#allocation17 + $0x38] sm:$0xf]
        %v2188 = vld [vmem:[#allocation17 + $0x3c] sm:$0xf]
        %v2189 = vld [vmem:[%s11] sm:$0x1]
        %v2191 = vperm.slane %v2189, 0
        %v2209 = vunpack.c.l.b16 %v2173
        %v2210 = vunpack.c.l.b16 %v2174
        %v2211 = vunpack.c.l.b16 %v2175
        %v2212 = vunpack.c.l.b16 %v2176
        %v2213 = vunpack.c.l.b16 %v2177
        %v2214 = vunpack.c.l.b16 %v2178
        %v2215 = vunpack.c.l.b16 %v2179
        %v2216 = vunpack.c.l.b16 %v2180
        %v2217 = vunpack.c.l.b16 %v2181
        %v2218 = vunpack.c.l.b16 %v2182
        %v2219 = vunpack.c.l.b16 %v2183
        %v2220 = vunpack.c.l.b16 %v2184
        %v2221 = vunpack.c.l.b16 %v2185
        %v2222 = vunpack.c.l.b16 %v2186
        %v2223 = vunpack.c.l.b16 %v2187
        %v2224 = vunpack.c.l.b16 %v2188
        %v2225 = vpack.c.b16 %v2210, %v2209
        %v2226 = vpack.c.b16 %v2212, %v2211
        %v2227 = vpack.c.b16 %v2214, %v2213
        %v2228 = vpack.c.b16 %v2216, %v2215
        %v2229 = vpack.c.b16 %v2218, %v2217
        %v2230 = vpack.c.b16 %v2220, %v2219
        %v2231 = vpack.c.b16 %v2222, %v2221
        %v2232 = vpack.c.b16 %v2224, %v2223
        %2241 = vmatpush.bf16.msra.mxu0 %v2232
        %2242 = vmatpush.bf16.msra.mxu0 %v2231
        %2243 = vmatpush.bf16.msra.mxu0 %v2230
        %2244 = vmatpush.bf16.msra.mxu0 %v2229
        %2245 = vmatpush.bf16.msra.mxu0 %v2228
        %2246 = vmatpush.bf16.msra.mxu0 %v2227
        %2247 = vmatpush.bf16.msra.mxu0 %v2226
        %2248 = vmatpush.bf16.msra.mxu0 %v2225
        %2249 = vmatmul.bf16.gmra.mxu0 %v2172
        %v2250 = vpop.f32.mrf.mxu0
        %v2251 = vadd.f32 %v2191, %v2250
        %v2252 = vpop.f32.mrf.mxu0
        %v2253 = vadd.f32 %v2191, %v2252
        %2254 = vdwg.mxu0
        %v2255 = vadd.f32 %v1493, %v2251
        %v2256 = vadd.f32 %v1494, %v2253
        %s2257 = sld [smem:[#allocation21 + $0x4]]
        %s2258 = sld [smem:[#allocation21 + $0x5]]
        %2259 = vadd.xlane.f32.xlu0 %v2255
        %v2260 = vpop.xlane.xlu0 %2259
        %2261 = vadd.xlane.f32.xlu0 %v2256
        %v2262 = vpop.xlane.xlu0 %2261
        %v2263 = vmul.f32 %v2260, %v788
        %v2264 = vmul.f32 %v2262, %v788
        %v2265 = vsub.f32 %v2255, %v2263
        %v2266 = vsub.f32 %v2256, %v2264
        %v2267 = vmul.f32 %v2265, %v2265
        %v2268 = vmul.f32 %v2266, %v2266
        %2269 = vadd.xlane.f32.xlu0 %v2267
        %v2270 = vpop.xlane.xlu0 %2269
        %2271 = vadd.xlane.f32.xlu0 %v2268
        %v2272 = vpop.xlane.xlu0 %2271
        %v2273 = vmul.f32 %v2270, 0.007874016
        %v2274 = vmul.f32 %v2272, 0.007874016
        %v2275 = vrsqrt.pop %v2273
        %v2276 = vmul.f32 %v2275, %v2273
        %v2277 = vmul.f32 %v2276, %v2275
        %v2278 = vmul.f32 0.5, %v2277
        %v2279 = vsub.f32 1.5, %v2278
        %v2280 = vmul.f32 %v2275, %v2279
        %v2281 = vmul.f32 %v2273, %v2280
        %vm2282 = vcmp.eq.f32.partialorder %v2273, inf
        %v2283 = vsel %vm2282, %v2273, %v2281
        %vm2284 = vcmp.eq.f32.partialorder %v2273, 0.0
        %v2285 = vand.u32 %v2273, 2147483648
        %v2286 = vsel %vm2284, %v2285, %v2283
        %v2287 = vrsqrt.pop %v2274
        %v2288 = vmul.f32 %v2287, %v2274
        %v2289 = vmul.f32 %v2288, %v2287
        %v2290 = vmul.f32 0.5, %v2289
        %v2291 = vsub.f32 1.5, %v2290
        %v2292 = vmul.f32 %v2287, %v2291
        %v2293 = vmul.f32 %v2274, %v2292
        %vm2294 = vcmp.eq.f32.partialorder %v2274, inf
        %v2295 = vsel %vm2294, %v2274, %v2293
        %vm2296 = vcmp.eq.f32.partialorder %v2274, 0.0
        %v2297 = vand.u32 %v2274, 2147483648
        %v2298 = vsel %vm2296, %v2297, %v2295
        %v2299 = vadd.f32 %v2286, 1e-06
        %v2300 = vadd.f32 %v2298, 1e-06
        %v2301 = vrcp.pop %v2299
        %v2302 = vrcp.pop %v2300
        %v2303 = vmul.f32 %v2265, %v2301
        %v2304 = vmul.f32 %v2266, %v2302
        %v2305 = vstv %s2257
        %v2306 = vmul.f32 %v2305, %v2303
        %v2307 = vmul.f32 %v2305, %v2304
        %v2308 = vstv %s2258
        %v2309 = vadd.f32 %v2306, %v2308
        %v2310 = vadd.f32 %v2307, %v2308
        %v2311 = vpack.c.bf16 %v2310, %v2309
        %v2312 = vld [vmem:[#allocation18] sm:$0xff]
        %v2313 = vld [vmem:[#allocation18 + $0x8] sm:$0xff]
        %v2314 = vld [vmem:[#allocation18 + $0x10] sm:$0xff]
        %v2315 = vld [vmem:[#allocation18 + $0x18] sm:$0xff]
        %v2316 = vld [vmem:[#allocation18 + $0x20] sm:$0xff]
        %v2317 = vld [vmem:[#allocation18 + $0x28] sm:$0xff]
        %v2318 = vld [vmem:[#allocation18 + $0x30] sm:$0xff]
        %v2319 = vld [vmem:[#allocation18 + $0x38] sm:$0xff]
        %v2320 = vld [vmem:[#allocation18 + $0x40] sm:$0xff]
        %v2321 = vld [vmem:[#allocation18 + $0x48] sm:$0xff]
        %v2322 = vld [vmem:[#allocation18 + $0x50] sm:$0xff]
        %v2323 = vld [vmem:[#allocation18 + $0x58] sm:$0xff]
        %v2324 = vld [vmem:[#allocation18 + $0x60] sm:$0xff]
        %v2325 = vld [vmem:[#allocation18 + $0x68] sm:$0xff]
        %v2326 = vld [vmem:[#allocation18 + $0x70] sm:$0xff]
        %v2327 = vld [vmem:[#allocation18 + $0x78] sm:$0xff]
        %v2328 = vld [vmem:[%s13] sm:$0x3]
        %v2330 = vperm.slane %v2328, 0
        %v2331 = vperm.slane %v2328, 1
        %v2350 = vunpack.c.l.b16 %v2312
        %v2351 = vunpack.c.h.b16 %v2312
        %v2352 = vunpack.c.l.b16 %v2313
        %v2353 = vunpack.c.h.b16 %v2313
        %v2354 = vunpack.c.l.b16 %v2314
        %v2355 = vunpack.c.h.b16 %v2314
        %v2356 = vunpack.c.l.b16 %v2315
        %v2357 = vunpack.c.h.b16 %v2315
        %v2358 = vunpack.c.l.b16 %v2316
        %v2359 = vunpack.c.h.b16 %v2316
        %v2360 = vunpack.c.l.b16 %v2317
        %v2361 = vunpack.c.h.b16 %v2317
        %v2362 = vunpack.c.l.b16 %v2318
        %v2363 = vunpack.c.h.b16 %v2318
        %v2364 = vunpack.c.l.b16 %v2319
        %v2365 = vunpack.c.h.b16 %v2319
        %v2366 = vunpack.c.l.b16 %v2320
        %v2367 = vunpack.c.h.b16 %v2320
        %v2368 = vunpack.c.l.b16 %v2321
        %v2369 = vunpack.c.h.b16 %v2321
        %v2370 = vunpack.c.l.b16 %v2322
        %v2371 = vunpack.c.h.b16 %v2322
        %v2372 = vunpack.c.l.b16 %v2323
        %v2373 = vunpack.c.h.b16 %v2323
        %v2374 = vunpack.c.l.b16 %v2324
        %v2375 = vunpack.c.h.b16 %v2324
        %v2376 = vunpack.c.l.b16 %v2325
        %v2377 = vunpack.c.h.b16 %v2325
        %v2378 = vunpack.c.l.b16 %v2326
        %v2379 = vunpack.c.h.b16 %v2326
        %v2380 = vunpack.c.l.b16 %v2327
        %v2381 = vunpack.c.h.b16 %v2327
        %v2382 = vpack.c.b16 %v2352, %v2350
        %v2383 = vpack.c.b16 %v2353, %v2351
        %v2384 = vpack.c.b16 %v2356, %v2354
        %v2385 = vpack.c.b16 %v2357, %v2355
        %v2386 = vpack.c.b16 %v2360, %v2358
        %v2387 = vpack.c.b16 %v2361, %v2359
        %v2388 = vpack.c.b16 %v2364, %v2362
        %v2389 = vpack.c.b16 %v2365, %v2363
        %v2390 = vpack.c.b16 %v2368, %v2366
        %v2391 = vpack.c.b16 %v2369, %v2367
        %v2392 = vpack.c.b16 %v2372, %v2370
        %v2393 = vpack.c.b16 %v2373, %v2371
        %v2394 = vpack.c.b16 %v2376, %v2374
        %v2395 = vpack.c.b16 %v2377, %v2375
        %v2396 = vpack.c.b16 %v2380, %v2378
        %v2397 = vpack.c.b16 %v2381, %v2379
        %2414 = vmatpush.bf16.msra.mxu0 %v2396
        %2415 = vmatpush.bf16.msra.mxu0 %v2394
        %2416 = vmatpush.bf16.msra.mxu0 %v2392
        %2417 = vmatpush.bf16.msra.mxu0 %v2390
        %2418 = vmatpush.bf16.msra.mxu0 %v2388
        %2419 = vmatpush.bf16.msra.mxu0 %v2386
        %2420 = vmatpush.bf16.msra.mxu0 %v2384
        %2421 = vmatpush.bf16.msra.mxu0 %v2382
        %2422 = vmatmul.bf16.gmra.mxu0 %v2311
        %v2423 = vpop.f32.mrf.mxu0
        %v2424 = vadd.f32 %v2330, %v2423
        %v2425 = vpop.f32.mrf.mxu0
        %v2426 = vadd.f32 %v2330, %v2425
        %2427 = vdwg.mxu0
        %2428 = vmatpush.bf16.msra.mxu0 %v2397
        %2429 = vmatpush.bf16.msra.mxu0 %v2395
        %2430 = vmatpush.bf16.msra.mxu0 %v2393
        %2431 = vmatpush.bf16.msra.mxu0 %v2391
        %2432 = vmatpush.bf16.msra.mxu0 %v2389
        %2433 = vmatpush.bf16.msra.mxu0 %v2387
        %2434 = vmatpush.bf16.msra.mxu0 %v2385
        %2435 = vmatpush.bf16.msra.mxu0 %v2383
        %2436 = vmatmul.bf16.gmra.mxu0 %v2311
        %v2437 = vpop.f32.mrf.mxu0
        %v2438 = vadd.f32 %v2331, %v2437
        %v2439 = vpop.f32.mrf.mxu0
        %v2440 = vadd.f32 %v2331, %v2439
        %2441 = vdwg.mxu0
        %v2442 = vmax.f32 %v2424, 0.0
        %v2443 = vmax.f32 %v2438, 0.0
        %v2444 = vmax.f32 %v2426, 0.0
        %v2445 = vmax.f32 %v2440, 0.0
        %v2446 = vpack.c.bf16 %v2444, %v2442
        %v2447 = vpack.c.bf16 %v2445, %v2443
        %v2448 = vld [vmem:[#allocation20] sm:$0xf]
        %v2449 = vld [vmem:[#allocation20 + $0x4] sm:$0xf]
        %v2450 = vld [vmem:[#allocation20 + $0x8] sm:$0xf]
        %v2451 = vld [vmem:[#allocation20 + $0xc] sm:$0xf]
        %v2452 = vld [vmem:[#allocation20 + $0x10] sm:$0xf]
        %v2453 = vld [vmem:[#allocation20 + $0x14] sm:$0xf]
        %v2454 = vld [vmem:[#allocation20 + $0x18] sm:$0xf]
        %v2455 = vld [vmem:[#allocation20 + $0x1c] sm:$0xf]
        %v2456 = vld [vmem:[#allocation20 + $0x20] sm:$0xf]
        %v2457 = vld [vmem:[#allocation20 + $0x24] sm:$0xf]
        %v2458 = vld [vmem:[#allocation20 + $0x28] sm:$0xf]
        %v2459 = vld [vmem:[#allocation20 + $0x2c] sm:$0xf]
        %v2460 = vld [vmem:[#allocation20 + $0x30] sm:$0xf]
        %v2461 = vld [vmem:[#allocation20 + $0x34] sm:$0xf]
        %v2462 = vld [vmem:[#allocation20 + $0x38] sm:$0xf]
        %v2463 = vld [vmem:[#allocation20 + $0x3c] sm:$0xf]
        %v2464 = vld [vmem:[#allocation20 + $0x40] sm:$0xf]
        %v2465 = vld [vmem:[#allocation20 + $0x44] sm:$0xf]
        %v2466 = vld [vmem:[#allocation20 + $0x48] sm:$0xf]
        %v2467 = vld [vmem:[#allocation20 + $0x4c] sm:$0xf]
        %v2468 = vld [vmem:[#allocation20 + $0x50] sm:$0xf]
        %v2469 = vld [vmem:[#allocation20 + $0x54] sm:$0xf]
        %v2470 = vld [vmem:[#allocation20 + $0x58] sm:$0xf]
        %v2471 = vld [vmem:[#allocation20 + $0x5c] sm:$0xf]
        %v2472 = vld [vmem:[#allocation20 + $0x60] sm:$0xf]
        %v2473 = vld [vmem:[#allocation20 + $0x64] sm:$0xf]
        %v2474 = vld [vmem:[#allocation20 + $0x68] sm:$0xf]
        %v2475 = vld [vmem:[#allocation20 + $0x6c] sm:$0xf]
        %v2476 = vld [vmem:[#allocation20 + $0x70] sm:$0xf]
        %v2477 = vld [vmem:[#allocation20 + $0x74] sm:$0xf]
        %v2478 = vld [vmem:[#allocation20 + $0x78] sm:$0xf]
        %v2479 = vld [vmem:[#allocation20 + $0x7c] sm:$0xf]
        %v2480 = vld [vmem:[%s15] sm:$0x1]
        %v2482 = vperm.slane %v2480, 0
        %v2516 = vunpack.c.l.b16 %v2448
        %v2517 = vunpack.c.l.b16 %v2449
        %v2518 = vunpack.c.l.b16 %v2450
        %v2519 = vunpack.c.l.b16 %v2451
        %v2520 = vunpack.c.l.b16 %v2452
        %v2521 = vunpack.c.l.b16 %v2453
        %v2522 = vunpack.c.l.b16 %v2454
        %v2523 = vunpack.c.l.b16 %v2455
        %v2524 = vunpack.c.l.b16 %v2456
        %v2525 = vunpack.c.l.b16 %v2457
        %v2526 = vunpack.c.l.b16 %v2458
        %v2527 = vunpack.c.l.b16 %v2459
        %v2528 = vunpack.c.l.b16 %v2460
        %v2529 = vunpack.c.l.b16 %v2461
        %v2530 = vunpack.c.l.b16 %v2462
        %v2531 = vunpack.c.l.b16 %v2463
        %v2532 = vunpack.c.l.b16 %v2464
        %v2533 = vunpack.c.l.b16 %v2465
        %v2534 = vunpack.c.l.b16 %v2466
        %v2535 = vunpack.c.l.b16 %v2467
        %v2536 = vunpack.c.l.b16 %v2468
        %v2537 = vunpack.c.l.b16 %v2469
        %v2538 = vunpack.c.l.b16 %v2470
        %v2539 = vunpack.c.l.b16 %v2471
        %v2540 = vunpack.c.l.b16 %v2472
        %v2541 = vunpack.c.l.b16 %v2473
        %v2542 = vunpack.c.l.b16 %v2474
        %v2543 = vunpack.c.l.b16 %v2475
        %v2544 = vunpack.c.l.b16 %v2476
        %v2545 = vunpack.c.l.b16 %v2477
        %v2546 = vunpack.c.l.b16 %v2478
        %v2547 = vunpack.c.l.b16 %v2479
        %v2548 = vpack.c.b16 %v2517, %v2516
        %v2549 = vpack.c.b16 %v2519, %v2518
        %v2550 = vpack.c.b16 %v2521, %v2520
        %v2551 = vpack.c.b16 %v2523, %v2522
        %v2552 = vpack.c.b16 %v2525, %v2524
        %v2553 = vpack.c.b16 %v2527, %v2526
        %v2554 = vpack.c.b16 %v2529, %v2528
        %v2555 = vpack.c.b16 %v2531, %v2530
        %v2556 = vpack.c.b16 %v2533, %v2532
        %v2557 = vpack.c.b16 %v2535, %v2534
        %v2558 = vpack.c.b16 %v2537, %v2536
        %v2559 = vpack.c.b16 %v2539, %v2538
        %v2560 = vpack.c.b16 %v2541, %v2540
        %v2561 = vpack.c.b16 %v2543, %v2542
        %v2562 = vpack.c.b16 %v2545, %v2544
        %v2563 = vpack.c.b16 %v2547, %v2546
        %2580 = vmatpush.bf16.msra.mxu0 %v2555
        %2581 = vmatpush.bf16.msra.mxu0 %v2554
        %2582 = vmatpush.bf16.msra.mxu0 %v2553
        %2583 = vmatpush.bf16.msra.mxu0 %v2552
        %2584 = vmatpush.bf16.msra.mxu0 %v2551
        %2585 = vmatpush.bf16.msra.mxu0 %v2550
        %2586 = vmatpush.bf16.msra.mxu0 %v2549
        %2587 = vmatpush.bf16.msra.mxu0 %v2548
        %2588 = vmatmul.bf16.gmra.mxu0 %v2446
        %v2589 = vpop.f32.mrf.mxu0
        %v2590 = vadd.f32 %v2482, %v2589
        %v2591 = vpop.f32.mrf.mxu0
        %v2592 = vadd.f32 %v2482, %v2591
        %2593 = vdwg.mxu0
        %2594 = vmatpush.bf16.msra.mxu0 %v2563
        %2595 = vmatpush.bf16.msra.mxu0 %v2562
        %2596 = vmatpush.bf16.msra.mxu0 %v2561
        %2597 = vmatpush.bf16.msra.mxu0 %v2560
        %2598 = vmatpush.bf16.msra.mxu0 %v2559
        %2599 = vmatpush.bf16.msra.mxu0 %v2558
        %2600 = vmatpush.bf16.msra.mxu0 %v2557
        %2601 = vmatpush.bf16.msra.mxu0 %v2556
        %2602 = vmatmul.bf16.gmra.mxu0 %v2447
        %v2603 = vpop.f32.mrf.mxu0
        %v2604 = vadd.f32 %v2590, %v2603
        %v2605 = vpop.f32.mrf.mxu0
        %v2606 = vadd.f32 %v2592, %v2605
        %2607 = vdwg.mxu0
        %v2608 = vadd.f32 %v2255, %v2604
        %v2609 = vadd.f32 %v2256, %v2606
        %2610 = vst [vmem:[%s768] sm:$0xff] %v2608
        %2611 = vst [vmem:[%s768 + $0x8] sm:$0xff] %v2609
        %s2612 = sand.u32 %s417, 1
        %s2613 = scalar_lea.sflag [#allocation4], %s2612
        %s2614 = sand.u32 %s417, 1
        %s2615 = smul.addr %s2614, 16
        %s2616 = scalar_lea.vmem [#allocation22], %s2615
        // Predicated region
        $region137: #{tpu_custom_call.1} parent=87 // pred_check
          %p2617 = pneg %p427
        $region138: #{tpu_custom_call.1} parent=87 // pred_check_branch
          %2619 = sbr.rel (%p2617) target = $region140
        $region139: #{tpu_custom_call.1} parent=87 // pred_region
          %2621 = vsyncadd %s2613, 0
          %s2622 = smul.addr %s42, 2
          %s2623 = smul.addr %s2622, 8
          %s2624 = scalar_lea.hbm %s17, %s2623
          %s2625 = sshll.u32 %s2616, 4
          %s2626 = int_to_ptr.vmem [resolvable:$true] %s2625
          %s2627 = sshll.u32 %s2624, 4
          %s2628 = int_to_ptr.hbm [resolvable:$true] %s2627
          %2633 = dma.vmem_to_hbm [thread:$0]  %s2626, 256, %s2628, %s2613, 128, 128, 8
        $region140: #{tpu_custom_call.1} parent=87 // pred_fallthru
          _
      $region88: #{tpu_custom_call.1} parent=5 // pred_fallthru
        _
      %p2634 = scmp.le.s32.totalorder 2, %s37
      // Predicated region
      $region141: #{tpu_custom_call.1} parent=5 // pred_check
        %p2635 = pneg %p2634
      $region142: #{tpu_custom_call.1} parent=5 // pred_check_branch
        %2637 = sbr.rel (%p2635) target = $region144
      $region143: #{tpu_custom_call.1} parent=5 // pred_region
        %s2638 = ssub.s32 %s37, 2
        // Predicated region
        $region145: #{tpu_custom_call.1} parent=143 // pred_check
          %p2639 = pneg %p433
        $region146: #{tpu_custom_call.1} parent=143 // pred_check_branch
          %2641 = sbr.rel (%p2639) target = $region148
        $region147: #{tpu_custom_call.1} parent=143 // pred_region
          %s2642 = sand.u32 %s418, 1
          %s2643 = scalar_lea.sflag [#allocation4], %s2642
          %s2644 = sand.u32 %s418, 1
          %s2645 = smul.addr %s2644, 16
          %s2646 = scalar_lea.vmem [#allocation22], %s2645
          %2648 = dma.done %s2643, 256
        $region148: #{tpu_custom_call.1} parent=143 // pred_fallthru
          _
      $region144: #{tpu_custom_call.1} parent=5 // pred_fallthru
        _
    $region6: #{tpu_custom_call.1} parent=1 // loop_footer
      %s41 = sadd.s32 1, %s37
    $region7: #{tpu_custom_call.1} parent=1 // loop_footer_branch
      %36 = sbr.rel target = $region3
    $region8: #{tpu_custom_call.1} parent=1 // loop_exit
      _
    %2649 = vsyncpa [#allocation3], 1
    %s2650 = scalar_lea.sflag [#allocation3], 1
    %2651 = vsyncpa %s2650, 1
    %2652 = vsyncpa [#allocation7], 1
    %s2653 = scalar_lea.sflag [#allocation7], 1
    %2654 = vsyncpa %s2653, 1
    %2655 = vsyncpa [#allocation10], 1
    %2656 = vsyncpa [#allocation13], 1
    %2657 = vsyncpa [#allocation16], 1
    %2658 = vsyncpa [#allocation19], 1
    %2659 = vsyncpa [#allocation4], 1
    %s2660 = scalar_lea.sflag [#allocation4], 1
    %2661 = vsyncpa %s2660, 1
    %2662 = vsyncpa [#allocation5], 1
    %s2663 = scalar_lea.sflag [#allocation5], 1
    %2664 = vsyncpa %s2663, 1

</llo_original>
